<compile_context>
chip_gen: v6e
topology: v6e:2x2x1
jax: 0.10.0
libtpu: 0.0.40
codegen_flags: <defaults>
</compile_context>

<pallas_src>
import functools

import jax
import jax.numpy as jnp
from jax import lax
from jax.experimental import pallas as pl
from jax.experimental.pallas import tpu as pltpu

# ----------------------------- sizes (small, synthetic) -----------------------
B = 2          # batch
S = 8          # sequence length
H = 128        # "BERT" hidden size (stands in for 768)
MLP_DIM = 256  # mlp_dim in MMKD
DIM = 128      # projection dim in MMKD
VOCAB = 384    # vocab size (stands in for tokenizer.vocab_size)
ENC_FF = 256   # encoder FFN width
BN_EPS = 1e-5
LN_EPS = 1e-12


# ----------------------------- BlockSpec helpers ------------------------------
def _block_all(shape):
    """Whole-array single block (block index 0 along every dim)."""
    nd = len(shape)
    return pl.BlockSpec(shape, lambda i, _n=nd: (0,) * _n)


# ----------------------------- Pallas kernels ---------------------------------
def _ffn_ln_kernel(x_ref, w1_ref, b1_ref, w2_ref, b2_ref, g_ref, bt_ref, o_ref):
    """out = LayerNorm(x + W2 @ gelu(W1 @ x + b1) + b2): fused encoder FFN block."""
    x = x_ref[...]                                                    # (TM, H) f32
    h = jnp.dot(x.astype(jnp.bfloat16), w1_ref[...],
                preferred_element_type=jnp.float32) + b1_ref[...]     # (TM, FF)
    h = jax.nn.gelu(h)
    y = jnp.dot(h.astype(jnp.bfloat16), w2_ref[...],
                preferred_element_type=jnp.float32) + b2_ref[...]     # (TM, H)
    z = x + y
    mu = jnp.mean(z, axis=-1, keepdims=True)
    var = jnp.mean((z - mu) ** 2, axis=-1, keepdims=True)
    o_ref[...] = (z - mu) * lax.rsqrt(var + LN_EPS) * g_ref[...] + bt_ref[...]


def _mlp_bn_relu(x_bf16, w1, g1, b1):
    """Bias-free Linear -> train-mode BatchNorm1d -> ReLU; returns bf16."""
    h = jnp.dot(x_bf16, w1, preferred_element_type=jnp.float32)
    mu = jnp.mean(h, axis=0, keepdims=True)
    var = jnp.mean((h - mu) ** 2, axis=0, keepdims=True)
    h = (h - mu) * lax.rsqrt(var + BN_EPS) * g1 + b1
    return jnp.maximum(h, 0.0).astype(jnp.bfloat16)


def _bn_noaffine(o):
    mu = jnp.mean(o, axis=0, keepdims=True)
    var = jnp.mean((o - mu) ** 2, axis=0, keepdims=True)
    return (o - mu) * lax.rsqrt(var + BN_EPS)


def _l2norm(x):
    return x * lax.rsqrt(jnp.maximum(jnp.sum(x * x, -1, keepdims=True), 1e-24))


def _tail_kernel(cls1_ref, cls2_ref,
                 bpw1_ref, bpg1_ref, bpb1_ref, bpw2a_ref, bpw2b_ref,
                 mpw1_ref, mpg1_ref, mpb1_ref, mpw2a_ref, mpw2b_ref,
                 p1w1_ref, p1g1_ref, p1b1_ref, p1w2_ref,
                 p2w1_ref, p2g1_ref, p2b1_ref, p2w2_ref,
                 lmw_ref, rep_ref, lab_ref,
                 en_ref, mul_ref, lbl_ref, cmask_ref, seqc_ref, seqr_ref,
                 o_ref, *, num_seq):
    """Whole post-encoder tail: projections, predictors and all four losses."""
    f32 = jnp.float32
    dims = (((1,), (1,)), ((), ()))   # contract last dims, no transpose

    # ---- dual projection (projector & projector2 share ONE first-layer matmul)
    def dual(x, w1, g1, b1, w2a, w2b):
        h = _mlp_bn_relu(x.astype(jnp.bfloat16), w1, g1, b1)          # (B, 2*MLP)
        qa = jnp.dot(h[:, :MLP_DIM], w2a, preferred_element_type=f32)
        qb = jnp.dot(h[:, MLP_DIM:], w2b, preferred_element_type=f32)
        return _bn_noaffine(qa), _bn_noaffine(qb)                     # last BN (no affine)

    q1_pre, q2_pre = dual(cls1_ref[...], bpw1_ref[...], bpg1_ref[...],
                          bpb1_ref[...], bpw2a_ref[...], bpw2b_ref[...])
    k1, k2 = dual(cls2_ref[...], mpw1_ref[...], mpg1_ref[...],
                  mpb1_ref[...], mpw2a_ref[...], mpw2b_ref[...])

    # ---- predictor + BYOL loss
    q1 = jnp.dot(_mlp_bn_relu(q1_pre.astype(jnp.bfloat16), p1w1_ref[...],
                              p1g1_ref[...], p1b1_ref[...]),
                 p1w2_ref[...], preferred_element_type=f32)
    cls_loss = jnp.mean(2.0 - 2.0 * jnp.sum(_l2norm(q1) * _l2norm(k1), -1,
                                            keepdims=True))

    # ---- predictor2 + correlation KL loss (batchmean)
    q2 = jnp.dot(_mlp_bn_relu(q2_pre.astype(jnp.bfloat16), p2w1_ref[...],
                              p2g1_ref[...], p2b1_ref[...]),
                 p2w2_ref[...], preferred_element_type=f32)
    ftn = _l2norm(k2)
    fsn = _l2norm(q2)
    t_simi = lax.dot_general(ftn, ftn, dims, preferred_element_type=f32)
    s_simi = lax.dot_general(fsn, fsn, dims, preferred_element_type=f32)
    t_max = jnp.max(t_simi, axis=1, keepdims=True)
    t_lse = jnp.log(jnp.sum(jnp.exp(t_simi - t_max), 1, keepdims=True)) + t_max
    s_max = jnp.max(s_simi, axis=1, keepdims=True)
    s_lse = jnp.log(jnp.sum(jnp.exp(s_simi - s_max), 1, keepdims=True)) + s_max
    log_t = t_simi - t_lse
    log_s = s_simi - s_lse
    corr_loss = jnp.sum(jnp.exp(log_t) * (log_t - log_s)) * f32(1.0 / t_simi.shape[0])

    # ---- LM head + masked cross entropy (ignore_index=-100, mean over valid)
    logits = jnp.dot(rep_ref[...].astype(jnp.bfloat16), lmw_ref[...],
                     preferred_element_type=f32)                      # (M, V)
    M, V = logits.shape
    lab_f = lab_ref[...].astype(f32)                                  # (1, M) lane-major
    eye_m = (lax.broadcasted_iota(jnp.int32, (M, M), 0) ==
             lax.broadcasted_iota(jnp.int32, (M, M), 1))
    lab_col = jnp.sum(jnp.where(eye_m, lab_f, 0.0), axis=1, keepdims=True)  # (M, 1)
    valid = lab_col >= 0.0                                            # -100 => invalid
    mask = valid.astype(f32)
    row_max = jnp.max(logits, axis=-1, keepdims=True)
    lse = jnp.log(jnp.sum(jnp.exp(logits - row_max), -1, keepdims=True)) + row_max
    col_iota = lax.broadcasted_iota(jnp.int32, (M, V), 1)
    safe = jnp.where(valid, lab_col, 0.0).astype(jnp.int32)           # (M, 1)
    gold = jnp.sum(jnp.where(col_iota == safe, logits, 0.0), -1, keepdims=True)
    tlm_loss = jnp.sum((lse - gold) * mask) / jnp.maximum(jnp.sum(mask), 1.0)

    # ---- TACL: ONE flattened contraction + block-masked softmax
    en = en_ref[...]                                                  # (BW, H) f32
    mul = mul_ref[...]
    BW = en.shape[0]
    score = lax.dot_general(en, mul, dims, preferred_element_type=f32)  # (BW, BW)
    seq_c = seqc_ref[...]                                             # (BW, 1) seq-ids
    seq_r = seqr_ref[...]                                             # (1, BW)
    blk = seq_c == seq_r                                              # same-sequence block
    col_ok = cmask_ref[...] > 0.0                                     # (1, BW) valid cols
    sc = jnp.where(blk & col_ok, score, -1e30)
    smax = jnp.max(sc, axis=-1, keepdims=True)
    lse2 = jnp.log(jnp.sum(jnp.exp(sc - smax), -1, keepdims=True)) + smax
    eye_bw = (lax.broadcasted_iota(jnp.int32, (BW, BW), 0) ==
              lax.broadcasted_iota(jnp.int32, (BW, BW), 1))
    diag = jnp.sum(jnp.where(eye_bw, score, 0.0), -1, keepdims=True)  # gold scores
    logp_diag = diag - lse2                                           # (BW, 1)
    lbl = lbl_ref[...]                                                # (BW, 1)
    total = f32(0.0)
    nvalid = f32(0.0)
    for i in range(num_seq):                                          # static, tiny: scalar aggregation only
        m_i = (seq_c == f32(i)).astype(f32)
        num = jnp.sum(-logp_diag * lbl * m_i)
        den = jnp.sum(lbl * m_i)
        v = (den > 0.0).astype(f32)
        total = total + v * num / jnp.maximum(den, 1e-12)
        nvalid = nvalid + v
    tacl_loss = total / jnp.maximum(nvalid, 1.0)

    o_ref[...] = jnp.reshape(cls_loss + tlm_loss + tacl_loss + 10.0 * corr_loss,
                             (1, 1))


# ----------------------------- kernel wrappers --------------------------------
def fused_ffn(x2d, enc, row_tile):
    """Batched FFN+LayerNorm over stacked rows, row-tiled 'parallel' grid."""
    m = x2d.shape[0]
    assert m % row_tile == 0 and row_tile % 8 == 0
    cost = pl.CostEstimate(flops=4 * m * H * ENC_FF,
                           transcendentals=m * ENC_FF,
                           bytes_accessed=8 * m * H + 4 * H * ENC_FF)
    return pl.pallas_call(
        _ffn_ln_kernel,
        out_shape=jax.ShapeDtypeStruct((m, H), jnp.float32),
        grid=(m // row_tile,),
        in_specs=[
            pl.BlockSpec((row_tile, H), lambda i: (i, 0)),
            _block_all((H, ENC_FF)),
            _block_all((1, ENC_FF)),
            _block_all((ENC_FF, H)),
            _block_all((1, H)),
            _block_all((1, H)),
            _block_all((1, H)),
        ],
        out_specs=pl.BlockSpec((row_tile, H), lambda i: (i, 0)),
        compiler_params=pltpu.CompilerParams(dimension_semantics=("parallel",)),
        cost_estimate=cost,
    )(x2d, enc["W1"], enc["b1"], enc["W2"], enc["b2"], enc["ln2_g"], enc["ln2_b"])


def fused_tail(kp, cls1, cls2, rep_tlm, labels_row, word_en, word_mul,
               lbl_col, cmask_row, seq_col, seq_row, num_seq):
    """Single kernel: dual projections + predictors + BYOL/corr/TLM/TACL losses."""
    bd, md = kp["base_dual"], kp["mom_dual"]
    p1, p2 = kp["predictor"], kp["predictor2"]
    args = (cls1, cls2,
            bd["W1"], bd["g1"], bd["b1"], bd["W2a"], bd["W2b"],
            md["W1"], md["g1"], md["b1"], md["W2a"], md["W2b"],
            p1["W1"], p1["g1"], p1["b1"], p1["W2"],
            p2["W1"], p2["g1"], p2["b1"], p2["W2"],
            kp["lm_head"], rep_tlm, labels_row,
            word_en, word_mul, lbl_col, cmask_row, seq_col, seq_row)
    m = rep_tlm.shape[0]
    bw = word_en.shape[0]
    cost = pl.CostEstimate(
        flops=(2 * m * H * VOCAB + 2 * bw * bw * H
               + 8 * B * H * MLP_DIM + 16 * B * MLP_DIM * DIM),
        transcendentals=m * VOCAB + bw * bw + 4 * B * B,
        bytes_accessed=sum(int(a.size) * a.dtype.itemsize for a in args) + 4)
    out = pl.pallas_call(
        functools.partial(_tail_kernel, num_seq=num_seq),
        out_shape=jax.ShapeDtypeStruct((1, 1), jnp.float32),
        grid=(1,),
        in_specs=[_block_all(a.shape) for a in args],
        out_specs=_block_all((1, 1)),
        compiler_params=pltpu.CompilerParams(dimension_semantics=("arbitrary",)),
        cost_estimate=cost,
    )(*args)
    return out[0, 0]


# ----------------------------- plain-JAX glue ----------------------------------
def layer_norm(x, gamma, beta, eps=LN_EPS):
    mu = x.mean(axis=-1, keepdims=True)
    var = ((x - mu) ** 2).mean(axis=-1, keepdims=True)
    return (x - mu) * lax.rsqrt(var + eps) * gamma + beta


def _embed(pe, ids, token_type_ids):
    x = pe["tok"][ids] + pe["seg"][token_type_ids] + pe["pos"][None, :ids.shape[1]]
    return layer_norm(x, pe["ln1_g"], pe["ln1_b"])


def _finish(y, attention_mask):
    m = attention_mask.astype(y.dtype)[..., None]
    ctx = (y * m).sum(axis=1) / jnp.maximum(m.sum(axis=1), 1.0)
    return y + ctx[:, None, :]


def build_tacl_indices(wlist_en, wlist_mul):
    """Static host-side prep: padded gather indices + column masks for TACL."""
    bsz = len(wlist_en)
    num_words = [len(set(w)) for w in wlist_en]
    max_w = max(num_words)
    idx_en, idx_mul, cmask = [], [], []
    for i in range(bsz):
        nw = num_words[i]
        ie = [0] + [wlist_en[i].index(j) for j in range(1, nw)]
        im = [0] + [wlist_mul[i].index(j) for j in range(1, nw)]
        idx_en.append(ie + [0] * (max_w - nw))
        idx_mul.append(im + [0] * (max_w - nw))
        cmask.append([1.0] * nw + [0.0] * (max_w - nw))
    return (jnp.asarray(idx_en, jnp.int32), jnp.asarray(idx_mul, jnp.int32),
            jnp.asarray(cmask, jnp.float32))


# ----------------------------- parameter init ----------------------------------
def init_mlp2(key, d_in, d_mid, d_out):
    k1, k2 = jax.random.split(key)
    return {
        "W1": 0.02 * jax.random.normal(k1, (d_in, d_mid), jnp.float32),
        "g1": jnp.ones((d_mid,), jnp.float32),
        "b1": jnp.zeros((d_mid,), jnp.float32),
        "W2": 0.02 * jax.random.normal(k2, (d_mid, d_out), jnp.float32),
    }


def init_encoder(key):
    ks = jax.random.split(key, 5)
    return {
        "tok": 0.02 * jax.random.normal(ks[0], (VOCAB, H), jnp.float32),
        "seg": 0.02 * jax.random.normal(ks[1], (2, H), jnp.float32),
        "pos": 0.02 * jax.random.normal(ks[2], (S, H), jnp.float32),
        "W1": 0.02 * jax.random.normal(ks[3], (H, ENC_FF), jnp.float32),
        "b1": jnp.zeros((ENC_FF,), jnp.float32),
        "W2": 0.02 * jax.random.normal(ks[4], (ENC_FF, H), jnp.float32),
        "b2": jnp.zeros((H,), jnp.float32),
        "ln1_g": jnp.ones((H,), jnp.float32), "ln1_b": jnp.zeros((H,), jnp.float32),
        "ln2_g": jnp.ones((H,), jnp.float32), "ln2_b": jnp.zeros((H,), jnp.float32),
    }


def init_params(key):
    ks = jax.random.split(key, 10)
    return {
        "base_enc": init_encoder(ks[0]),
        "mom_enc": init_encoder(ks[1]),
        "base_projector": init_mlp2(ks[2], H, MLP_DIM, DIM),
        "predictor": init_mlp2(ks[3], DIM, MLP_DIM, DIM),
        "mom_projector": init_mlp2(ks[4], H, MLP_DIM, DIM),
        "base_projector2": init_mlp2(ks[5], H, MLP_DIM, DIM),
        "predictor2": init_mlp2(ks[6], DIM, MLP_DIM, DIM),
        "mom_projector2": init_mlp2(ks[7], H, MLP_DIM, DIM),
        "lm_head": 0.02 * jax.random.normal(ks[8], (H, VOCAB), jnp.float32),
    }


def prepare_params(p):
    """One-time (outside jit) weight layout prep: bf16 casts, W1 concats, bias rows."""
    def enc(e):
        return {
            "tok": e["tok"], "seg": e["seg"], "pos": e["pos"],
            "ln1_g": e["ln1_g"], "ln1_b": e["ln1_b"],
            "W1": e["W1"].astype(jnp.bfloat16),
            "b1": e["b1"].reshape(1, -1),
            "W2": e["W2"].astype(jnp.bfloat16),
            "b2": e["b2"].reshape(1, -1),
            "ln2_g": e["ln2_g"].reshape(1, -1),
            "ln2_b": e["ln2_b"].reshape(1, -1),
        }

    def dualcat(a, b):
        return {
            "W1": jnp.concatenate([a["W1"], b["W1"]], axis=1).astype(jnp.bfloat16),
            "g1": jnp.concatenate([a["g1"], b["g1"]]).reshape(1, -1),
            "b1": jnp.concatenate([a["b1"], b["b1"]]).reshape(1, -1),
            "W2a": a["W2"].astype(jnp.bfloat16),
            "W2b": b["W2"].astype(jnp.bfloat16),
        }

    def pred(m):
        return {"W1": m["W1"].astype(jnp.bfloat16),
                "g1": m["g1"].reshape(1, -1),
                "b1": m["b1"].reshape(1, -1),
                "W2": m["W2"].astype(jnp.bfloat16)}

    return {
        "base_enc": enc(p["base_enc"]),
        "mom_enc": enc(p["mom_enc"]),
        "base_dual": dualcat(p["base_projector"], p["base_projector2"]),
        "mom_dual": dualcat(p["mom_projector"], p["mom_projector2"]),
        "predictor": pred(p["predictor"]),
        "predictor2": pred(p["predictor2"]),
        "lm_head": p["lm_head"].astype(jnp.bfloat16),
    }


# ----------------------------- MMKD forward ------------------------------------
def _mmkd_forward(kp,
                  input_ids1, input_ids2, token_type_ids1, token_type_ids2,
                  attention_mask1, attention_mask2,
                  truth_en, inp_en, seg_en, attn_msk_en,
                  contrastive_labels, idx_en, idx_mul, cmask,
                  input_ids_tlm, token_type_ids_tlm, attention_mask_tlm,
                  labels_tlm, seg_mul, attn_msk_mul):
    base, mom = kp["base_enc"], kp["mom_enc"]

    # Base encoder: 3 sequences -> ONE batched FFN kernel (M = 3*B*S).
    e1 = _embed(base, input_ids1, token_type_ids1)
    e_mul = _embed(base, inp_en, seg_mul)
    e_tlm = _embed(base, input_ids_tlm, token_type_ids_tlm)
    xb = jnp.concatenate([e1.reshape(B * S, H), e_mul.reshape(B * S, H),
                          e_tlm.reshape(B * S, H)], axis=0)
    yb = fused_ffn(xb, base, row_tile=(3 * B * S) // 2)
    rep1 = _finish(yb[:B * S].reshape(B, S, H), attention_mask1)
    masked_rep = _finish(yb[B * S:2 * B * S].reshape(B, S, H), attn_msk_mul)
    rep_tlm = _finish(yb[2 * B * S:].reshape(B, S, H), attention_mask_tlm)

    # Momentum encoder: 2 sequences -> ONE batched FFN kernel (M = 2*B*S).
    e2 = _embed(mom, input_ids2, token_type_ids2)
    e_tr = _embed(mom, truth_en, seg_en)
    xm = jnp.concatenate([e2.reshape(B * S, H), e_tr.reshape(B * S, H)], axis=0)
    ym = fused_ffn(xm, mom, row_tile=B * S)
    rep2 = _finish(ym[:B * S].reshape(B, S, H), attention_mask2)
    truth_rep = _finish(ym[B * S:].reshape(B, S, H), attn_msk_en)

    # [CLS] representations (reference recomputes identical encoders for q2/k2 =>
    # identical outputs, so they are reused; momentum stop-gradient is a no-op in
    # this forward-only computation).
    cls1 = rep1[:, 0, :]
    cls2 = rep2[:, 0, :]

    # TACL gathers and static index/mask prep (plain XLA).
    wmax = idx_en.shape[1]
    word_en = jnp.take_along_axis(truth_rep, idx_en[:, :, None], axis=1)
    word_mul = jnp.take_along_axis(masked_rep, idx_mul[:, :, None], axis=1)
    lbl_col = (contrastive_labels[:, :wmax] * cmask).reshape(B * wmax, 1)
    cmask_row = cmask.reshape(1, B * wmax)
    seq_col = jnp.repeat(jnp.arange(B, dtype=jnp.float32), wmax).reshape(B * wmax, 1)
    seq_row = seq_col.reshape(1, B * wmax)

    labels_row = labels_tlm.reshape(1, B * S)

    # Entire tail (projections, predictors, BYOL + TLM + TACL + 10*corr) in ONE kernel.
    return fused_tail(kp, cls1, cls2, rep_tlm.reshape(B * S, H), labels_row,
                      word_en.reshape(B * wmax, H), word_mul.reshape(B * wmax, H),
                      lbl_col, cmask_row, seq_col, seq_row, num_seq=B)


mmkd_forward = jax.jit(_mmkd_forward)


# ----------------------------- driver -------------------------------------------
if __name__ == "__main__":
    key = jax.random.PRNGKey(0)
    pkey, dkey = jax.random.split(key)
    raw_params = init_params(pkey)
    kparams = prepare_params(raw_params)     # one-time weight casts/concats (not jitted)

    dks = jax.random.split(dkey, 8)

    def rand_ids(k):
        return jax.random.randint(k, (B, S), 0, VOCAB, dtype=jnp.int32)

    input_ids1 = rand_ids(dks[0])
    input_ids2 = rand_ids(dks[1])
    truth_en = rand_ids(dks[2])
    inp_en = rand_ids(dks[3])
    input_ids_tlm = rand_ids(dks[4])

    zeros_seg = jnp.zeros((B, S), jnp.int32)
    ones_mask = jnp.ones((B, S), jnp.int32)
    attention_mask1 = ones_mask.at[:, -1].set(0)
    attention_mask2 = ones_mask
    token_type_ids1 = zeros_seg
    token_type_ids2 = zeros_seg
    seg_en = zeros_seg
    seg_mul = zeros_seg
    attn_msk_en = ones_mask
    attn_msk_mul = ones_mask
    token_type_ids_tlm = zeros_seg
    attention_mask_tlm = ones_mask

    # word-alignment lists (static python lists, like tokenized word ids)
    wlist_en = [[0, 1, 2, 3, 1, 2, 3, 0],
                [0, 1, 2, 3, 4, 2, 1, 0]]
    wlist_mul = [[0, 2, 1, 3, 2, 1, 3, 0],
                 [0, 3, 1, 2, 4, 1, 2, 0]]
    contrastive_labels = jnp.array([[1, 1, 0, 1, 0, 0, 0, 0],
                                    [0, 1, 1, 0, 1, 0, 0, 0]], jnp.float32)
    idx_en, idx_mul, cmask = build_tacl_indices(wlist_en, wlist_mul)

    # MLM labels: -100 everywhere except a few masked positions
    labels_tlm = jnp.full((B, S), -100, dtype=jnp.int32)
    labels_tlm = labels_tlm.at[0, 2].set(17).at[0, 5].set(101)
    labels_tlm = labels_tlm.at[1, 1].set(250).at[1, 6].set(3)

    loss = mmkd_forward(kparams,
                        input_ids1, input_ids2, token_type_ids1, token_type_ids2,
                        attention_mask1, attention_mask2,
                        truth_en, inp_en, seg_en, attn_msk_en,
                        contrastive_labels, idx_en, idx_mul, cmask,
                        input_ids_tlm, token_type_ids_tlm, attention_mask_tlm,
                        labels_tlm, seg_mul, attn_msk_mul)
    loss = jax.block_until_ready(loss)
    assert jnp.isfinite(loss), loss
    print("KERNEL_OK")
</pallas_src>

<mosaic_0001>
module attributes {stable_mosaic.version = 11 : i64} {
  func.func @_ffn_ln_kernel(%arg0: i32, %arg1: memref<24x128xf32, #tpu.memory_space<vmem>>, %arg2: memref<128x256xbf16, #tpu.memory_space<vmem>>, %arg3: memref<1x256xf32, #tpu.memory_space<vmem>>, %arg4: memref<256x128xbf16, #tpu.memory_space<vmem>>, %arg5: memref<1x128xf32, #tpu.memory_space<vmem>>, %arg6: memref<1x128xf32, #tpu.memory_space<vmem>>, %arg7: memref<1x128xf32, #tpu.memory_space<vmem>>, %arg8: memref<24x128xf32, #tpu.memory_space<vmem>>) attributes {dimension_semantics = [#tpu.dimension_semantics<parallel>], iteration_bounds = array<i64: 2>, scalar_prefetch = 0 : i64, scratch_operands = 0 : i64, tpu.core_type = #tpu.core_type<tc>, window_params = [{transform_indices = @transform_0, window_bounds = array<i64: 24, 128>}, {pipeline_mode = #tpu.pipeline_mode<synchronous>, transform_indices = @transform_1, window_bounds = array<i64: 128, 256>}, {pipeline_mode = #tpu.pipeline_mode<synchronous>, transform_indices = @transform_2, window_bounds = array<i64: 1, 256>}, {pipeline_mode = #tpu.pipeline_mode<synchronous>, transform_indices = @transform_3, window_bounds = array<i64: 256, 128>}, {pipeline_mode = #tpu.pipeline_mode<synchronous>, transform_indices = @transform_4, window_bounds = array<i64: 1, 128>}, {pipeline_mode = #tpu.pipeline_mode<synchronous>, transform_indices = @transform_5, window_bounds = array<i64: 1, 128>}, {pipeline_mode = #tpu.pipeline_mode<synchronous>, transform_indices = @transform_6, window_bounds = array<i64: 1, 128>}, {transform_indices = @transform_7, window_bounds = array<i64: 24, 128>}]} {
    %c0 = arith.constant 0 : index
    %c0_0 = arith.constant 0 : index
    %0 = vector.load %arg1[%c0, %c0_0] : memref<24x128xf32, #tpu.memory_space<vmem>>, vector<24x128xf32>
    %1 = arith.truncf %0 : vector<24x128xf32> to vector<24x128xbf16>
    %c0_1 = arith.constant 0 : index
    %c0_2 = arith.constant 0 : index
    %2 = vector.load %arg2[%c0_1, %c0_2] : memref<128x256xbf16, #tpu.memory_space<vmem>>, vector<128x256xbf16>
    %cst = arith.constant dense<0.000000e+00> : vector<24x256xf32>
    %3 = tpu.matmul %1, %2, %cst {dimension_numbers = #tpu.dot_dimension_numbers<[1], [0], [0], [1], [0, 0, 1, 1], [], []>} : vector<24x128xbf16>, vector<128x256xbf16>, vector<24x256xf32> -> vector<24x256xf32>
    %c0_3 = arith.constant 0 : index
    %c0_4 = arith.constant 0 : index
    %4 = vector.load %arg3[%c0_3, %c0_4] : memref<1x256xf32, #tpu.memory_space<vmem>>, vector<1x256xf32>
    %5 = vector.broadcast %4 : vector<1x256xf32> to vector<24x256xf32>
    %6 = arith.addf %3, %5 : vector<24x256xf32>
    %7 = arith.mulf %6, %6 : vector<24x256xf32>
    %8 = arith.mulf %6, %7 : vector<24x256xf32>
    %cst_5 = arith.constant 4.471500e-02 : f32
    %9 = vector.broadcast %cst_5 : f32 to vector<24x256xf32>
    %10 = arith.mulf %9, %8 : vector<24x256xf32>
    %11 = arith.addf %6, %10 : vector<24x256xf32>
    %cst_6 = arith.constant 0.797884583 : f32
    %12 = vector.broadcast %cst_6 : f32 to vector<24x256xf32>
    %13 = arith.mulf %12, %11 : vector<24x256xf32>
    %14 = math.tanh %13 : vector<24x256xf32>
    %cst_7 = arith.constant 1.000000e+00 : f32
    %15 = vector.broadcast %cst_7 : f32 to vector<24x256xf32>
    %16 = arith.addf %15, %14 : vector<24x256xf32>
    %cst_8 = arith.constant 5.000000e-01 : f32
    %17 = vector.broadcast %cst_8 : f32 to vector<24x256xf32>
    %18 = arith.mulf %17, %16 : vector<24x256xf32>
    %19 = arith.mulf %6, %18 : vector<24x256xf32>
    %20 = arith.truncf %19 : vector<24x256xf32> to vector<24x256xbf16>
    %c0_9 = arith.constant 0 : index
    %c0_10 = arith.constant 0 : index
    %21 = vector.load %arg4[%c0_9, %c0_10] : memref<256x128xbf16, #tpu.memory_space<vmem>>, vector<256x128xbf16>
    %cst_11 = arith.constant dense<0.000000e+00> : vector<24x128xf32>
    %22 = tpu.matmul %20, %21, %cst_11 {dimension_numbers = #tpu.dot_dimension_numbers<[1], [0], [0], [1], [0, 0, 1, 1], [], []>} : vector<24x256xbf16>, vector<256x128xbf16>, vector<24x128xf32> -> vector<24x128xf32>
    %c0_12 = arith.constant 0 : index
    %c0_13 = arith.constant 0 : index
    %23 = vector.load %arg5[%c0_12, %c0_13] : memref<1x128xf32, #tpu.memory_space<vmem>>, vector<1x128xf32>
    %24 = vector.broadcast %23 : vector<1x128xf32> to vector<24x128xf32>
    %25 = arith.addf %22, %24 : vector<24x128xf32>
    %26 = arith.addf %0, %25 : vector<24x128xf32>
    %cst_14 = arith.constant dense<0.000000e+00> : vector<24xf32>
    %27 = vector.multi_reduction <add>, %26, %cst_14 [1] : vector<24x128xf32> to vector<24xf32>
    %28 = vector.shape_cast %27 : vector<24xf32> to vector<24x1xf32>
    %cst_15 = arith.constant 1.280000e+02 : f32
    %29 = vector.broadcast %cst_15 : f32 to vector<24x1xf32>
    %30 = arith.divf %28, %29 : vector<24x1xf32>
    %31 = vector.broadcast %30 : vector<24x1xf32> to vector<24x128xf32>
    %32 = arith.subf %26, %31 : vector<24x128xf32>
    %33 = arith.mulf %32, %32 : vector<24x128xf32>
    %cst_16 = arith.constant dense<0.000000e+00> : vector<24xf32>
    %34 = vector.multi_reduction <add>, %33, %cst_16 [1] : vector<24x128xf32> to vector<24xf32>
    %35 = vector.shape_cast %34 : vector<24xf32> to vector<24x1xf32>
    %cst_17 = arith.constant 1.280000e+02 : f32
    %36 = vector.broadcast %cst_17 : f32 to vector<24x1xf32>
    %37 = arith.divf %35, %36 : vector<24x1xf32>
    %38 = vector.broadcast %30 : vector<24x1xf32> to vector<24x128xf32>
    %39 = arith.subf %26, %38 : vector<24x128xf32>
    %cst_18 = arith.constant 9.99999996E-13 : f32
    %40 = vector.broadcast %cst_18 : f32 to vector<24x1xf32>
    %41 = arith.addf %37, %40 : vector<24x1xf32>
    %42 = math.rsqrt %41 : vector<24x1xf32>
    %43 = vector.broadcast %42 : vector<24x1xf32> to vector<24x128xf32>
    %44 = arith.mulf %39, %43 : vector<24x128xf32>
    %c0_19 = arith.constant 0 : index
    %c0_20 = arith.constant 0 : index
    %45 = vector.load %arg6[%c0_19, %c0_20] : memref<1x128xf32, #tpu.memory_space<vmem>>, vector<1x128xf32>
    %46 = vector.broadcast %45 : vector<1x128xf32> to vector<24x128xf32>
    %47 = arith.mulf %44, %46 : vector<24x128xf32>
    %c0_21 = arith.constant 0 : index
    %c0_22 = arith.constant 0 : index
    %48 = vector.load %arg7[%c0_21, %c0_22] : memref<1x128xf32, #tpu.memory_space<vmem>>, vector<1x128xf32>
    %49 = vector.broadcast %48 : vector<1x128xf32> to vector<24x128xf32>
    %50 = arith.addf %47, %49 : vector<24x128xf32>
    %c0_23 = arith.constant 0 : index
    %c0_24 = arith.constant 0 : index
    %51 = vector.load %arg8[%c0_23, %c0_24] : memref<24x128xf32, #tpu.memory_space<vmem>>, vector<24x128xf32>
    tpu.vector_store %arg8[%c0_23, %c0_24], %50 {strides = array<i32>} : memref<24x128xf32, #tpu.memory_space<vmem>>, vector<24x128xf32>,
    return
  }
  func.func @transform_0(%arg0: i32) -> (i32, i32) {
    %c0_i32 = arith.constant 0 : i32
    %c0_i32_0 = arith.constant 0 : i32
    return %arg0, %c0_i32 : i32, i32
  }
  func.func @transform_1(%arg0: i32) -> (i32, i32) {
    %c0_i32 = arith.constant 0 : i32
    %c0_i32_0 = arith.constant 0 : i32
    %c0_i32_1 = arith.constant 0 : i32
    return %c0_i32, %c0_i32_0 : i32, i32
  }
  func.func @transform_2(%arg0: i32) -> (i32, i32) {
    %c0_i32 = arith.constant 0 : i32
    %c0_i32_0 = arith.constant 0 : i32
    %c0_i32_1 = arith.constant 0 : i32
    return %c0_i32, %c0_i32_0 : i32, i32
  }
  func.func @transform_3(%arg0: i32) -> (i32, i32) {
    %c0_i32 = arith.constant 0 : i32
    %c0_i32_0 = arith.constant 0 : i32
    %c0_i32_1 = arith.constant 0 : i32
    return %c0_i32, %c0_i32_0 : i32, i32
  }
  func.func @transform_4(%arg0: i32) -> (i32, i32) {
    %c0_i32 = arith.constant 0 : i32
    %c0_i32_0 = arith.constant 0 : i32
    %c0_i32_1 = arith.constant 0 : i32
    return %c0_i32, %c0_i32_0 : i32, i32
  }
  func.func @transform_5(%arg0: i32) -> (i32, i32) {
    %c0_i32 = arith.constant 0 : i32
    %c0_i32_0 = arith.constant 0 : i32
    %c0_i32_1 = arith.constant 0 : i32
    return %c0_i32, %c0_i32_0 : i32, i32
  }
  func.func @transform_6(%arg0: i32) -> (i32, i32) {
    %c0_i32 = arith.constant 0 : i32
    %c0_i32_0 = arith.constant 0 : i32
    %c0_i32_1 = arith.constant 0 : i32
    return %c0_i32, %c0_i32_0 : i32, i32
  }
  func.func @transform_7(%arg0: i32) -> (i32, i32) {
    %c0_i32 = arith.constant 0 : i32
    %c0_i32_0 = arith.constant 0 : i32
    return %arg0, %c0_i32 : i32, i32
  }
}

module attributes {stable_mosaic.version = 11 : i64} {
  func.func @_ffn_ln_kernel(%arg0: i32, %arg1: memref<16x128xf32, #tpu.memory_space<vmem>>, %arg2: memref<128x256xbf16, #tpu.memory_space<vmem>>, %arg3: memref<1x256xf32, #tpu.memory_space<vmem>>, %arg4: memref<256x128xbf16, #tpu.memory_space<vmem>>, %arg5: memref<1x128xf32, #tpu.memory_space<vmem>>, %arg6: memref<1x128xf32, #tpu.memory_space<vmem>>, %arg7: memref<1x128xf32, #tpu.memory_space<vmem>>, %arg8: memref<16x128xf32, #tpu.memory_space<vmem>>) attributes {dimension_semantics = [#tpu.dimension_semantics<parallel>], iteration_bounds = array<i64: 2>, scalar_prefetch = 0 : i64, scratch_operands = 0 : i64, tpu.core_type = #tpu.core_type<tc>, window_params = [{transform_indices = @transform_0, window_bounds = array<i64: 16, 128>}, {pipeline_mode = #tpu.pipeline_mode<synchronous>, transform_indices = @transform_1, window_bounds = array<i64: 128, 256>}, {pipeline_mode = #tpu.pipeline_mode<synchronous>, transform_indices = @transform_2, window_bounds = array<i64: 1, 256>}, {pipeline_mode = #tpu.pipeline_mode<synchronous>, transform_indices = @transform_3, window_bounds = array<i64: 256, 128>}, {pipeline_mode = #tpu.pipeline_mode<synchronous>, transform_indices = @transform_4, window_bounds = array<i64: 1, 128>}, {pipeline_mode = #tpu.pipeline_mode<synchronous>, transform_indices = @transform_5, window_bounds = array<i64: 1, 128>}, {pipeline_mode = #tpu.pipeline_mode<synchronous>, transform_indices = @transform_6, window_bounds = array<i64: 1, 128>}, {transform_indices = @transform_7, window_bounds = array<i64: 16, 128>}]} {
    %c0 = arith.constant 0 : index
    %c0_0 = arith.constant 0 : index
    %0 = vector.load %arg1[%c0, %c0_0] : memref<16x128xf32, #tpu.memory_space<vmem>>, vector<16x128xf32>
    %1 = arith.truncf %0 : vector<16x128xf32> to vector<16x128xbf16>
    %c0_1 = arith.constant 0 : index
    %c0_2 = arith.constant 0 : index
    %2 = vector.load %arg2[%c0_1, %c0_2] : memref<128x256xbf16, #tpu.memory_space<vmem>>, vector<128x256xbf16>
    %cst = arith.constant dense<0.000000e+00> : vector<16x256xf32>
    %3 = tpu.matmul %1, %2, %cst {dimension_numbers = #tpu.dot_dimension_numbers<[1], [0], [0], [1], [0, 0, 1, 1], [], []>} : vector<16x128xbf16>, vector<128x256xbf16>, vector<16x256xf32> -> vector<16x256xf32>
    %c0_3 = arith.constant 0 : index
    %c0_4 = arith.constant 0 : index
    %4 = vector.load %arg3[%c0_3, %c0_4] : memref<1x256xf32, #tpu.memory_space<vmem>>, vector<1x256xf32>
    %5 = vector.broadcast %4 : vector<1x256xf32> to vector<16x256xf32>
    %6 = arith.addf %3, %5 : vector<16x256xf32>
    %7 = arith.mulf %6, %6 : vector<16x256xf32>
    %8 = arith.mulf %6, %7 : vector<16x256xf32>
    %cst_5 = arith.constant 4.471500e-02 : f32
    %9 = vector.broadcast %cst_5 : f32 to vector<16x256xf32>
    %10 = arith.mulf %9, %8 : vector<16x256xf32>
    %11 = arith.addf %6, %10 : vector<16x256xf32>
    %cst_6 = arith.constant 0.797884583 : f32
    %12 = vector.broadcast %cst_6 : f32 to vector<16x256xf32>
    %13 = arith.mulf %12, %11 : vector<16x256xf32>
    %14 = math.tanh %13 : vector<16x256xf32>
    %cst_7 = arith.constant 1.000000e+00 : f32
    %15 = vector.broadcast %cst_7 : f32 to vector<16x256xf32>
    %16 = arith.addf %15, %14 : vector<16x256xf32>
    %cst_8 = arith.constant 5.000000e-01 : f32
    %17 = vector.broadcast %cst_8 : f32 to vector<16x256xf32>
    %18 = arith.mulf %17, %16 : vector<16x256xf32>
    %19 = arith.mulf %6, %18 : vector<16x256xf32>
    %20 = arith.truncf %19 : vector<16x256xf32> to vector<16x256xbf16>
    %c0_9 = arith.constant 0 : index
    %c0_10 = arith.constant 0 : index
    %21 = vector.load %arg4[%c0_9, %c0_10] : memref<256x128xbf16, #tpu.memory_space<vmem>>, vector<256x128xbf16>
    %cst_11 = arith.constant dense<0.000000e+00> : vector<16x128xf32>
    %22 = tpu.matmul %20, %21, %cst_11 {dimension_numbers = #tpu.dot_dimension_numbers<[1], [0], [0], [1], [0, 0, 1, 1], [], []>} : vector<16x256xbf16>, vector<256x128xbf16>, vector<16x128xf32> -> vector<16x128xf32>
    %c0_12 = arith.constant 0 : index
    %c0_13 = arith.constant 0 : index
    %23 = vector.load %arg5[%c0_12, %c0_13] : memref<1x128xf32, #tpu.memory_space<vmem>>, vector<1x128xf32>
    %24 = vector.broadcast %23 : vector<1x128xf32> to vector<16x128xf32>
    %25 = arith.addf %22, %24 : vector<16x128xf32>
    %26 = arith.addf %0, %25 : vector<16x128xf32>
    %cst_14 = arith.constant dense<0.000000e+00> : vector<16xf32>
    %27 = vector.multi_reduction <add>, %26, %cst_14 [1] : vector<16x128xf32> to vector<16xf32>
    %28 = vector.shape_cast %27 : vector<16xf32> to vector<16x1xf32>
    %cst_15 = arith.constant 1.280000e+02 : f32
    %29 = vector.broadcast %cst_15 : f32 to vector<16x1xf32>
    %30 = arith.divf %28, %29 : vector<16x1xf32>
    %31 = vector.broadcast %30 : vector<16x1xf32> to vector<16x128xf32>
    %32 = arith.subf %26, %31 : vector<16x128xf32>
    %33 = arith.mulf %32, %32 : vector<16x128xf32>
    %cst_16 = arith.constant dense<0.000000e+00> : vector<16xf32>
    %34 = vector.multi_reduction <add>, %33, %cst_16 [1] : vector<16x128xf32> to vector<16xf32>
    %35 = vector.shape_cast %34 : vector<16xf32> to vector<16x1xf32>
    %cst_17 = arith.constant 1.280000e+02 : f32
    %36 = vector.broadcast %cst_17 : f32 to vector<16x1xf32>
    %37 = arith.divf %35, %36 : vector<16x1xf32>
    %38 = vector.broadcast %30 : vector<16x1xf32> to vector<16x128xf32>
    %39 = arith.subf %26, %38 : vector<16x128xf32>
    %cst_18 = arith.constant 9.99999996E-13 : f32
    %40 = vector.broadcast %cst_18 : f32 to vector<16x1xf32>
    %41 = arith.addf %37, %40 : vector<16x1xf32>
    %42 = math.rsqrt %41 : vector<16x1xf32>
    %43 = vector.broadcast %42 : vector<16x1xf32> to vector<16x128xf32>
    %44 = arith.mulf %39, %43 : vector<16x128xf32>
    %c0_19 = arith.constant 0 : index
    %c0_20 = arith.constant 0 : index
    %45 = vector.load %arg6[%c0_19, %c0_20] : memref<1x128xf32, #tpu.memory_space<vmem>>, vector<1x128xf32>
    %46 = vector.broadcast %45 : vector<1x128xf32> to vector<16x128xf32>
    %47 = arith.mulf %44, %46 : vector<16x128xf32>
    %c0_21 = arith.constant 0 : index
    %c0_22 = arith.constant 0 : index
    %48 = vector.load %arg7[%c0_21, %c0_22] : memref<1x128xf32, #tpu.memory_space<vmem>>, vector<1x128xf32>
    %49 = vector.broadcast %48 : vector<1x128xf32> to vector<16x128xf32>
    %50 = arith.addf %47, %49 : vector<16x128xf32>
    %c0_23 = arith.constant 0 : index
    %c0_24 = arith.constant 0 : index
    %51 = vector.load %arg8[%c0_23, %c0_24] : memref<16x128xf32, #tpu.memory_space<vmem>>, vector<16x128xf32>
    tpu.vector_store %arg8[%c0_23, %c0_24], %50 {strides = array<i32>} : memref<16x128xf32, #tpu.memory_space<vmem>>, vector<16x128xf32>,
    return
  }
  func.func @transform_0(%arg0: i32) -> (i32, i32) {
    %c0_i32 = arith.constant 0 : i32
    %c0_i32_0 = arith.constant 0 : i32
    return %arg0, %c0_i32 : i32, i32
  }
  func.func @transform_1(%arg0: i32) -> (i32, i32) {
    %c0_i32 = arith.constant 0 : i32
    %c0_i32_0 = arith.constant 0 : i32
    %c0_i32_1 = arith.constant 0 : i32
    return %c0_i32, %c0_i32_0 : i32, i32
  }
  func.func @transform_2(%arg0: i32) -> (i32, i32) {
    %c0_i32 = arith.constant 0 : i32
    %c0_i32_0 = arith.constant 0 : i32
    %c0_i32_1 = arith.constant 0 : i32
    return %c0_i32, %c0_i32_0 : i32, i32
  }
  func.func @transform_3(%arg0: i32) -> (i32, i32) {
    %c0_i32 = arith.constant 0 : i32
    %c0_i32_0 = arith.constant 0 : i32
    %c0_i32_1 = arith.constant 0 : i32
    return %c0_i32, %c0_i32_0 : i32, i32
  }
  func.func @transform_4(%arg0: i32) -> (i32, i32) {
    %c0_i32 = arith.constant 0 : i32
    %c0_i32_0 = arith.constant 0 : i32
    %c0_i32_1 = arith.constant 0 : i32
    return %c0_i32, %c0_i32_0 : i32, i32
  }
  func.func @transform_5(%arg0: i32) -> (i32, i32) {
    %c0_i32 = arith.constant 0 : i32
    %c0_i32_0 = arith.constant 0 : i32
    %c0_i32_1 = arith.constant 0 : i32
    return %c0_i32, %c0_i32_0 : i32, i32
  }
  func.func @transform_6(%arg0: i32) -> (i32, i32) {
    %c0_i32 = arith.constant 0 : i32
    %c0_i32_0 = arith.constant 0 : i32
    %c0_i32_1 = arith.constant 0 : i32
    return %c0_i32, %c0_i32_0 : i32, i32
  }
  func.func @transform_7(%arg0: i32) -> (i32, i32) {
    %c0_i32 = arith.constant 0 : i32
    %c0_i32_0 = arith.constant 0 : i32
    return %arg0, %c0_i32 : i32, i32
  }
}

module attributes {stable_mosaic.version = 11 : i64} {
  func.func @_tail_kernel(%arg0: i32, %arg1: memref<2x128xf32, #tpu.memory_space<vmem>>, %arg2: memref<2x128xf32, #tpu.memory_space<vmem>>, %arg3: memref<128x512xbf16, #tpu.memory_space<vmem>>, %arg4: memref<1x512xf32, #tpu.memory_space<vmem>>, %arg5: memref<1x512xf32, #tpu.memory_space<vmem>>, %arg6: memref<256x128xbf16, #tpu.memory_space<vmem>>, %arg7: memref<256x128xbf16, #tpu.memory_space<vmem>>, %arg8: memref<128x512xbf16, #tpu.memory_space<vmem>>, %arg9: memref<1x512xf32, #tpu.memory_space<vmem>>, %arg10: memref<1x512xf32, #tpu.memory_space<vmem>>, %arg11: memref<256x128xbf16, #tpu.memory_space<vmem>>, %arg12: memref<256x128xbf16, #tpu.memory_space<vmem>>, %arg13: memref<128x256xbf16, #tpu.memory_space<vmem>>, %arg14: memref<1x256xf32, #tpu.memory_space<vmem>>, %arg15: memref<1x256xf32, #tpu.memory_space<vmem>>, %arg16: memref<256x128xbf16, #tpu.memory_space<vmem>>, %arg17: memref<128x256xbf16, #tpu.memory_space<vmem>>, %arg18: memref<1x256xf32, #tpu.memory_space<vmem>>, %arg19: memref<1x256xf32, #tpu.memory_space<vmem>>, %arg20: memref<256x128xbf16, #tpu.memory_space<vmem>>, %arg21: memref<128x384xbf16, #tpu.memory_space<vmem>>, %arg22: memref<16x128xf32, #tpu.memory_space<vmem>>, %arg23: memref<1x16xi32, #tpu.memory_space<vmem>>, %arg24: memref<10x128xf32, #tpu.memory_space<vmem>>, %arg25: memref<10x128xf32, #tpu.memory_space<vmem>>, %arg26: memref<10x1xf32, #tpu.memory_space<vmem>>, %arg27: memref<1x10xf32, #tpu.memory_space<vmem>>, %arg28: memref<10x1xf32, #tpu.memory_space<vmem>>, %arg29: memref<1x10xf32, #tpu.memory_space<vmem>>, %arg30: memref<1x1xf32, #tpu.memory_space<vmem>>) attributes {dimension_semantics = [#tpu.dimension_semantics<arbitrary>], iteration_bounds = array<i64: 1>, scalar_prefetch = 0 : i64, scratch_operands = 0 : i64, tpu.core_type = #tpu.core_type<tc>, window_params = [{pipeline_mode = #tpu.pipeline_mode<synchronous>, transform_indices = @transform_0, window_bounds = array<i64: 2, 128>}, {pipeline_mode = #tpu.pipeline_mode<synchronous>, transform_indices = @transform_1, window_bounds = array<i64: 2, 128>}, {pipeline_mode = #tpu.pipeline_mode<synchronous>, transform_indices = @transform_2, window_bounds = array<i64: 128, 512>}, {pipeline_mode = #tpu.pipeline_mode<synchronous>, transform_indices = @transform_3, window_bounds = array<i64: 1, 512>}, {pipeline_mode = #tpu.pipeline_mode<synchronous>, transform_indices = @transform_4, window_bounds = array<i64: 1, 512>}, {pipeline_mode = #tpu.pipeline_mode<synchronous>, transform_indices = @transform_5, window_bounds = array<i64: 256, 128>}, {pipeline_mode = #tpu.pipeline_mode<synchronous>, transform_indices = @transform_6, window_bounds = array<i64: 256, 128>}, {pipeline_mode = #tpu.pipeline_mode<synchronous>, transform_indices = @transform_7, window_bounds = array<i64: 128, 512>}, {pipeline_mode = #tpu.pipeline_mode<synchronous>, transform_indices = @transform_8, window_bounds = array<i64: 1, 512>}, {pipeline_mode = #tpu.pipeline_mode<synchronous>, transform_indices = @transform_9, window_bounds = array<i64: 1, 512>}, {pipeline_mode = #tpu.pipeline_mode<synchronous>, transform_indices = @transform_10, window_bounds = array<i64: 256, 128>}, {pipeline_mode = #tpu.pipeline_mode<synchronous>, transform_indices = @transform_11, window_bounds = array<i64: 256, 128>}, {pipeline_mode = #tpu.pipeline_mode<synchronous>, transform_indices = @transform_12, window_bounds = array<i64: 128, 256>}, {pipeline_mode = #tpu.pipeline_mode<synchronous>, transform_indices = @transform_13, window_bounds = array<i64: 1, 256>}, {pipeline_mode = #tpu.pipeline_mode<synchronous>, transform_indices = @transform_14, window_bounds = array<i64: 1, 256>}, {pipeline_mode = #tpu.pipeline_mode<synchronous>, transform_indices = @transform_15, window_bounds = array<i64: 256, 128>}, {pipeline_mode = #tpu.pipeline_mode<synchronous>, transform_indices = @transform_16, window_bounds = array<i64: 128, 256>}, {pipeline_mode = #tpu.pipeline_mode<synchronous>, transform_indices = @transform_17, window_bounds = array<i64: 1, 256>}, {pipeline_mode = #tpu.pipeline_mode<synchronous>, transform_indices = @transform_18, window_bounds = array<i64: 1, 256>}, {pipeline_mode = #tpu.pipeline_mode<synchronous>, transform_indices = @transform_19, window_bounds = array<i64: 256, 128>}, {pipeline_mode = #tpu.pipeline_mode<synchronous>, transform_indices = @transform_20, window_bounds = array<i64: 128, 384>}, {pipeline_mode = #tpu.pipeline_mode<synchronous>, transform_indices = @transform_21, window_bounds = array<i64: 16, 128>}, {pipeline_mode = #tpu.pipeline_mode<synchronous>, transform_indices = @transform_22, window_bounds = array<i64: 1, 16>}, {pipeline_mode = #tpu.pipeline_mode<synchronous>, transform_indices = @transform_23, window_bounds = array<i64: 10, 128>}, {pipeline_mode = #tpu.pipeline_mode<synchronous>, transform_indices = @transform_24, window_bounds = array<i64: 10, 128>}, {pipeline_mode = #tpu.pipeline_mode<synchronous>, transform_indices = @transform_25, window_bounds = array<i64: 10, 1>}, {pipeline_mode = #tpu.pipeline_mode<synchronous>, transform_indices = @transform_26, window_bounds = array<i64: 1, 10>}, {pipeline_mode = #tpu.pipeline_mode<synchronous>, transform_indices = @transform_27, window_bounds = array<i64: 10, 1>}, {pipeline_mode = #tpu.pipeline_mode<synchronous>, transform_indices = @transform_28, window_bounds = array<i64: 1, 10>}, {pipeline_mode = #tpu.pipeline_mode<synchronous>, transform_indices = @transform_29, window_bounds = array<i64: 1, 1>}]} {
    %c0 = arith.constant 0 : index
    %c0_0 = arith.constant 0 : index
    %0 = vector.load %arg1[%c0, %c0_0] : memref<2x128xf32, #tpu.memory_space<vmem>>, vector<2x128xf32>
    %c0_1 = arith.constant 0 : index
    %c0_2 = arith.constant 0 : index
    %1 = vector.load %arg3[%c0_1, %c0_2] : memref<128x512xbf16, #tpu.memory_space<vmem>>, vector<128x512xbf16>
    %c0_3 = arith.constant 0 : index
    %c0_4 = arith.constant 0 : index
    %2 = vector.load %arg4[%c0_3, %c0_4] : memref<1x512xf32, #tpu.memory_space<vmem>>, vector<1x512xf32>
    %c0_5 = arith.constant 0 : index
    %c0_6 = arith.constant 0 : index
    %3 = vector.load %arg5[%c0_5, %c0_6] : memref<1x512xf32, #tpu.memory_space<vmem>>, vector<1x512xf32>
    %c0_7 = arith.constant 0 : index
    %c0_8 = arith.constant 0 : index
    %4 = vector.load %arg6[%c0_7, %c0_8] : memref<256x128xbf16, #tpu.memory_space<vmem>>, vector<256x128xbf16>
    %c0_9 = arith.constant 0 : index
    %c0_10 = arith.constant 0 : index
    %5 = vector.load %arg7[%c0_9, %c0_10] : memref<256x128xbf16, #tpu.memory_space<vmem>>, vector<256x128xbf16>
    %6 = arith.truncf %0 : vector<2x128xf32> to vector<2x128xbf16>
    %cst = arith.constant dense<0.000000e+00> : vector<2x512xf32>
    %7 = tpu.matmul %6, %1, %cst {dimension_numbers = #tpu.dot_dimension_numbers<[1], [0], [0], [1], [0, 0, 1, 1], [], []>} : vector<2x128xbf16>, vector<128x512xbf16>, vector<2x512xf32> -> vector<2x512xf32>
    %cst_11 = arith.constant dense<0.000000e+00> : vector<512xf32>
    %8 = vector.multi_reduction <add>, %7, %cst_11 [0] : vector<2x512xf32> to vector<512xf32>
    %9 = vector.shape_cast %8 : vector<512xf32> to vector<1x512xf32>
    %cst_12 = arith.constant 2.000000e+00 : f32
    %10 = vector.broadcast %cst_12 : f32 to vector<1x512xf32>
    %11 = arith.divf %9, %10 : vector<1x512xf32>
    %12 = vector.broadcast %11 : vector<1x512xf32> to vector<2x512xf32>
    %13 = arith.subf %7, %12 : vector<2x512xf32>
    %14 = arith.mulf %13, %13 : vector<2x512xf32>
    %cst_13 = arith.constant dense<0.000000e+00> : vector<512xf32>
    %15 = vector.multi_reduction <add>, %14, %cst_13 [0] : vector<2x512xf32> to vector<512xf32>
    %16 = vector.shape_cast %15 : vector<512xf32> to vector<1x512xf32>
    %cst_14 = arith.constant 2.000000e+00 : f32
    %17 = vector.broadcast %cst_14 : f32 to vector<1x512xf32>
    %18 = arith.divf %16, %17 : vector<1x512xf32>
    %19 = vector.broadcast %11 : vector<1x512xf32> to vector<2x512xf32>
    %20 = arith.subf %7, %19 : vector<2x512xf32>
    %cst_15 = arith.constant 9.99999974E-6 : f32
    %21 = vector.broadcast %cst_15 : f32 to vector<1x512xf32>
    %22 = arith.addf %18, %21 : vector<1x512xf32>
    %23 = math.rsqrt %22 : vector<1x512xf32>
    %24 = vector.broadcast %23 : vector<1x512xf32> to vector<2x512xf32>
    %25 = arith.mulf %20, %24 : vector<2x512xf32>
    %26 = vector.broadcast %2 : vector<1x512xf32> to vector<2x512xf32>
    %27 = arith.mulf %25, %26 : vector<2x512xf32>
    %28 = vector.broadcast %3 : vector<1x512xf32> to vector<2x512xf32>
    %29 = arith.addf %27, %28 : vector<2x512xf32>
    %cst_16 = arith.constant 0.000000e+00 : f32
    %30 = vector.broadcast %cst_16 : f32 to vector<2x512xf32>
    %31 = arith.maximumf %29, %30 : vector<2x512xf32>
    %32 = arith.truncf %31 : vector<2x512xf32> to vector<2x512xbf16>
    %33 = vector.extract_strided_slice %32 {offsets = [0, 0], sizes = [2, 256], strides = [1, 1]} : vector<2x512xbf16> to vector<2x256xbf16>
    %cst_17 = arith.constant dense<0.000000e+00> : vector<2x128xf32>
    %34 = tpu.matmul %33, %4, %cst_17 {dimension_numbers = #tpu.dot_dimension_numbers<[1], [0], [0], [1], [0, 0, 1, 1], [], []>} : vector<2x256xbf16>, vector<256x128xbf16>, vector<2x128xf32> -> vector<2x128xf32>
    %35 = vector.extract_strided_slice %32 {offsets = [0, 256], sizes = [2, 256], strides = [1, 1]} : vector<2x512xbf16> to vector<2x256xbf16>
    %cst_18 = arith.constant dense<0.000000e+00> : vector<2x128xf32>
    %36 = tpu.matmul %35, %5, %cst_18 {dimension_numbers = #tpu.dot_dimension_numbers<[1], [0], [0], [1], [0, 0, 1, 1], [], []>} : vector<2x256xbf16>, vector<256x128xbf16>, vector<2x128xf32> -> vector<2x128xf32>
    %cst_19 = arith.constant dense<0.000000e+00> : vector<128xf32>
    %37 = vector.multi_reduction <add>, %34, %cst_19 [0] : vector<2x128xf32> to vector<128xf32>
    %38 = vector.shape_cast %37 : vector<128xf32> to vector<1x128xf32>
    %cst_20 = arith.constant 2.000000e+00 : f32
    %39 = vector.broadcast %cst_20 : f32 to vector<1x128xf32>
    %40 = arith.divf %38, %39 : vector<1x128xf32>
    %41 = vector.broadcast %40 : vector<1x128xf32> to vector<2x128xf32>
    %42 = arith.subf %34, %41 : vector<2x128xf32>
    %43 = arith.mulf %42, %42 : vector<2x128xf32>
    %cst_21 = arith.constant dense<0.000000e+00> : vector<128xf32>
    %44 = vector.multi_reduction <add>, %43, %cst_21 [0] : vector<2x128xf32> to vector<128xf32>
    %45 = vector.shape_cast %44 : vector<128xf32> to vector<1x128xf32>
    %cst_22 = arith.constant 2.000000e+00 : f32
    %46 = vector.broadcast %cst_22 : f32 to vector<1x128xf32>
    %47 = arith.divf %45, %46 : vector<1x128xf32>
    %48 = vector.broadcast %40 : vector<1x128xf32> to vector<2x128xf32>
    %49 = arith.subf %34, %48 : vector<2x128xf32>
    %cst_23 = arith.constant 9.99999974E-6 : f32
    %50 = vector.broadcast %cst_23 : f32 to vector<1x128xf32>
    %51 = arith.addf %47, %50 : vector<1x128xf32>
    %52 = math.rsqrt %51 : vector<1x128xf32>
    %53 = vector.broadcast %52 : vector<1x128xf32> to vector<2x128xf32>
    %54 = arith.mulf %49, %53 : vector<2x128xf32>
    %cst_24 = arith.constant dense<0.000000e+00> : vector<128xf32>
    %55 = vector.multi_reduction <add>, %36, %cst_24 [0] : vector<2x128xf32> to vector<128xf32>
    %56 = vector.shape_cast %55 : vector<128xf32> to vector<1x128xf32>
    %cst_25 = arith.constant 2.000000e+00 : f32
    %57 = vector.broadcast %cst_25 : f32 to vector<1x128xf32>
    %58 = arith.divf %56, %57 : vector<1x128xf32>
    %59 = vector.broadcast %58 : vector<1x128xf32> to vector<2x128xf32>
    %60 = arith.subf %36, %59 : vector<2x128xf32>
    %61 = arith.mulf %60, %60 : vector<2x128xf32>
    %cst_26 = arith.constant dense<0.000000e+00> : vector<128xf32>
    %62 = vector.multi_reduction <add>, %61, %cst_26 [0] : vector<2x128xf32> to vector<128xf32>
    %63 = vector.shape_cast %62 : vector<128xf32> to vector<1x128xf32>
    %cst_27 = arith.constant 2.000000e+00 : f32
    %64 = vector.broadcast %cst_27 : f32 to vector<1x128xf32>
    %65 = arith.divf %63, %64 : vector<1x128xf32>
    %66 = vector.broadcast %58 : vector<1x128xf32> to vector<2x128xf32>
    %67 = arith.subf %36, %66 : vector<2x128xf32>
    %cst_28 = arith.constant 9.99999974E-6 : f32
    %68 = vector.broadcast %cst_28 : f32 to vector<1x128xf32>
    %69 = arith.addf %65, %68 : vector<1x128xf32>
    %70 = math.rsqrt %69 : vector<1x128xf32>
    %71 = vector.broadcast %70 : vector<1x128xf32> to vector<2x128xf32>
    %72 = arith.mulf %67, %71 : vector<2x128xf32>
    %c0_29 = arith.constant 0 : index
    %c0_30 = arith.constant 0 : index
    %73 = vector.load %arg2[%c0_29, %c0_30] : memref<2x128xf32, #tpu.memory_space<vmem>>, vector<2x128xf32>
    %c0_31 = arith.constant 0 : index
    %c0_32 = arith.constant 0 : index
    %74 = vector.load %arg8[%c0_31, %c0_32] : memref<128x512xbf16, #tpu.memory_space<vmem>>, vector<128x512xbf16>
    %c0_33 = arith.constant 0 : index
    %c0_34 = arith.constant 0 : index
    %75 = vector.load %arg9[%c0_33, %c0_34] : memref<1x512xf32, #tpu.memory_space<vmem>>, vector<1x512xf32>
    %c0_35 = arith.constant 0 : index
    %c0_36 = arith.constant 0 : index
    %76 = vector.load %arg10[%c0_35, %c0_36] : memref<1x512xf32, #tpu.memory_space<vmem>>, vector<1x512xf32>
    %c0_37 = arith.constant 0 : index
    %c0_38 = arith.constant 0 : index
    %77 = vector.load %arg11[%c0_37, %c0_38] : memref<256x128xbf16, #tpu.memory_space<vmem>>, vector<256x128xbf16>
    %c0_39 = arith.constant 0 : index
    %c0_40 = arith.constant 0 : index
    %78 = vector.load %arg12[%c0_39, %c0_40] : memref<256x128xbf16, #tpu.memory_space<vmem>>, vector<256x128xbf16>
    %79 = arith.truncf %73 : vector<2x128xf32> to vector<2x128xbf16>
    %cst_41 = arith.constant dense<0.000000e+00> : vector<2x512xf32>
    %80 = tpu.matmul %79, %74, %cst_41 {dimension_numbers = #tpu.dot_dimension_numbers<[1], [0], [0], [1], [0, 0, 1, 1], [], []>} : vector<2x128xbf16>, vector<128x512xbf16>, vector<2x512xf32> -> vector<2x512xf32>
    %cst_42 = arith.constant dense<0.000000e+00> : vector<512xf32>
    %81 = vector.multi_reduction <add>, %80, %cst_42 [0] : vector<2x512xf32> to vector<512xf32>
    %82 = vector.shape_cast %81 : vector<512xf32> to vector<1x512xf32>
    %cst_43 = arith.constant 2.000000e+00 : f32
    %83 = vector.broadcast %cst_43 : f32 to vector<1x512xf32>
    %84 = arith.divf %82, %83 : vector<1x512xf32>
    %85 = vector.broadcast %84 : vector<1x512xf32> to vector<2x512xf32>
    %86 = arith.subf %80, %85 : vector<2x512xf32>
    %87 = arith.mulf %86, %86 : vector<2x512xf32>
    %cst_44 = arith.constant dense<0.000000e+00> : vector<512xf32>
    %88 = vector.multi_reduction <add>, %87, %cst_44 [0] : vector<2x512xf32> to vector<512xf32>
    %89 = vector.shape_cast %88 : vector<512xf32> to vector<1x512xf32>
    %cst_45 = arith.constant 2.000000e+00 : f32
    %90 = vector.broadcast %cst_45 : f32 to vector<1x512xf32>
    %91 = arith.divf %89, %90 : vector<1x512xf32>
    %92 = vector.broadcast %84 : vector<1x512xf32> to vector<2x512xf32>
    %93 = arith.subf %80, %92 : vector<2x512xf32>
    %cst_46 = arith.constant 9.99999974E-6 : f32
    %94 = vector.broadcast %cst_46 : f32 to vector<1x512xf32>
    %95 = arith.addf %91, %94 : vector<1x512xf32>
    %96 = math.rsqrt %95 : vector<1x512xf32>
    %97 = vector.broadcast %96 : vector<1x512xf32> to vector<2x512xf32>
    %98 = arith.mulf %93, %97 : vector<2x512xf32>
    %99 = vector.broadcast %75 : vector<1x512xf32> to vector<2x512xf32>
    %100 = arith.mulf %98, %99 : vector<2x512xf32>
    %101 = vector.broadcast %76 : vector<1x512xf32> to vector<2x512xf32>
    %102 = arith.addf %100, %101 : vector<2x512xf32>
    %cst_47 = arith.constant 0.000000e+00 : f32
    %103 = vector.broadcast %cst_47 : f32 to vector<2x512xf32>
    %104 = arith.maximumf %102, %103 : vector<2x512xf32>
    %105 = arith.truncf %104 : vector<2x512xf32> to vector<2x512xbf16>
    %106 = vector.extract_strided_slice %105 {offsets = [0, 0], sizes = [2, 256], strides = [1, 1]} : vector<2x512xbf16> to vector<2x256xbf16>
    %cst_48 = arith.constant dense<0.000000e+00> : vector<2x128xf32>
    %107 = tpu.matmul %106, %77, %cst_48 {dimension_numbers = #tpu.dot_dimension_numbers<[1], [0], [0], [1], [0, 0, 1, 1], [], []>} : vector<2x256xbf16>, vector<256x128xbf16>, vector<2x128xf32> -> vector<2x128xf32>
    %108 = vector.extract_strided_slice %105 {offsets = [0, 256], sizes = [2, 256], strides = [1, 1]} : vector<2x512xbf16> to vector<2x256xbf16>
    %cst_49 = arith.constant dense<0.000000e+00> : vector<2x128xf32>
    %109 = tpu.matmul %108, %78, %cst_49 {dimension_numbers = #tpu.dot_dimension_numbers<[1], [0], [0], [1], [0, 0, 1, 1], [], []>} : vector<2x256xbf16>, vector<256x128xbf16>, vector<2x128xf32> -> vector<2x128xf32>
    %cst_50 = arith.constant dense<0.000000e+00> : vector<128xf32>
    %110 = vector.multi_reduction <add>, %107, %cst_50 [0] : vector<2x128xf32> to vector<128xf32>
    %111 = vector.shape_cast %110 : vector<128xf32> to vector<1x128xf32>
    %cst_51 = arith.constant 2.000000e+00 : f32
    %112 = vector.broadcast %cst_51 : f32 to vector<1x128xf32>
    %113 = arith.divf %111, %112 : vector<1x128xf32>
    %114 = vector.broadcast %113 : vector<1x128xf32> to vector<2x128xf32>
    %115 = arith.subf %107, %114 : vector<2x128xf32>
    %116 = arith.mulf %115, %115 : vector<2x128xf32>
    %cst_52 = arith.constant dense<0.000000e+00> : vector<128xf32>
    %117 = vector.multi_reduction <add>, %116, %cst_52 [0] : vector<2x128xf32> to vector<128xf32>
    %118 = vector.shape_cast %117 : vector<128xf32> to vector<1x128xf32>
    %cst_53 = arith.constant 2.000000e+00 : f32
    %119 = vector.broadcast %cst_53 : f32 to vector<1x128xf32>
    %120 = arith.divf %118, %119 : vector<1x128xf32>
    %121 = vector.broadcast %113 : vector<1x128xf32> to vector<2x128xf32>
    %122 = arith.subf %107, %121 : vector<2x128xf32>
    %cst_54 = arith.constant 9.99999974E-6 : f32
    %123 = vector.broadcast %cst_54 : f32 to vector<1x128xf32>
    %124 = arith.addf %120, %123 : vector<1x128xf32>
    %125 = math.rsqrt %124 : vector<1x128xf32>
    %126 = vector.broadcast %125 : vector<1x128xf32> to vector<2x128xf32>
    %127 = arith.mulf %122, %126 : vector<2x128xf32>
    %cst_55 = arith.constant dense<0.000000e+00> : vector<128xf32>
    %128 = vector.multi_reduction <add>, %109, %cst_55 [0] : vector<2x128xf32> to vector<128xf32>
    %129 = vector.shape_cast %128 : vector<128xf32> to vector<1x128xf32>
    %cst_56 = arith.constant 2.000000e+00 : f32
    %130 = vector.broadcast %cst_56 : f32 to vector<1x128xf32>
    %131 = arith.divf %129, %130 : vector<1x128xf32>
    %132 = vector.broadcast %131 : vector<1x128xf32> to vector<2x128xf32>
    %133 = arith.subf %109, %132 : vector<2x128xf32>
    %134 = arith.mulf %133, %133 : vector<2x128xf32>
    %cst_57 = arith.constant dense<0.000000e+00> : vector<128xf32>
    %135 = vector.multi_reduction <add>, %134, %cst_57 [0] : vector<2x128xf32> to vector<128xf32>
    %136 = vector.shape_cast %135 : vector<128xf32> to vector<1x128xf32>
    %cst_58 = arith.constant 2.000000e+00 : f32
    %137 = vector.broadcast %cst_58 : f32 to vector<1x128xf32>
    %138 = arith.divf %136, %137 : vector<1x128xf32>
    %139 = vector.broadcast %131 : vector<1x128xf32> to vector<2x128xf32>
    %140 = arith.subf %109, %139 : vector<2x128xf32>
    %cst_59 = arith.constant 9.99999974E-6 : f32
    %141 = vector.broadcast %cst_59 : f32 to vector<1x128xf32>
    %142 = arith.addf %138, %141 : vector<1x128xf32>
    %143 = math.rsqrt %142 : vector<1x128xf32>
    %144 = vector.broadcast %143 : vector<1x128xf32> to vector<2x128xf32>
    %145 = arith.mulf %140, %144 : vector<2x128xf32>
    %146 = arith.truncf %54 : vector<2x128xf32> to vector<2x128xbf16>
    %c0_60 = arith.constant 0 : index
    %c0_61 = arith.constant 0 : index
    %147 = vector.load %arg13[%c0_60, %c0_61] : memref<128x256xbf16, #tpu.memory_space<vmem>>, vector<128x256xbf16>
    %c0_62 = arith.constant 0 : index
    %c0_63 = arith.constant 0 : index
    %148 = vector.load %arg14[%c0_62, %c0_63] : memref<1x256xf32, #tpu.memory_space<vmem>>, vector<1x256xf32>
    %c0_64 = arith.constant 0 : index
    %c0_65 = arith.constant 0 : index
    %149 = vector.load %arg15[%c0_64, %c0_65] : memref<1x256xf32, #tpu.memory_space<vmem>>, vector<1x256xf32>
    %cst_66 = arith.constant dense<0.000000e+00> : vector<2x256xf32>
    %150 = tpu.matmul %146, %147, %cst_66 {dimension_numbers = #tpu.dot_dimension_numbers<[1], [0], [0], [1], [0, 0, 1, 1], [], []>} : vector<2x128xbf16>, vector<128x256xbf16>, vector<2x256xf32> -> vector<2x256xf32>
    %cst_67 = arith.constant dense<0.000000e+00> : vector<256xf32>
    %151 = vector.multi_reduction <add>, %150, %cst_67 [0] : vector<2x256xf32> to vector<256xf32>
    %152 = vector.shape_cast %151 : vector<256xf32> to vector<1x256xf32>
    %cst_68 = arith.constant 2.000000e+00 : f32
    %153 = vector.broadcast %cst_68 : f32 to vector<1x256xf32>
    %154 = arith.divf %152, %153 : vector<1x256xf32>
    %155 = vector.broadcast %154 : vector<1x256xf32> to vector<2x256xf32>
    %156 = arith.subf %150, %155 : vector<2x256xf32>
    %157 = arith.mulf %156, %156 : vector<2x256xf32>
    %cst_69 = arith.constant dense<0.000000e+00> : vector<256xf32>
    %158 = vector.multi_reduction <add>, %157, %cst_69 [0] : vector<2x256xf32> to vector<256xf32>
    %159 = vector.shape_cast %158 : vector<256xf32> to vector<1x256xf32>
    %cst_70 = arith.constant 2.000000e+00 : f32
    %160 = vector.broadcast %cst_70 : f32 to vector<1x256xf32>
    %161 = arith.divf %159, %160 : vector<1x256xf32>
    %162 = vector.broadcast %154 : vector<1x256xf32> to vector<2x256xf32>
    %163 = arith.subf %150, %162 : vector<2x256xf32>
    %cst_71 = arith.constant 9.99999974E-6 : f32
    %164 = vector.broadcast %cst_71 : f32 to vector<1x256xf32>
    %165 = arith.addf %161, %164 : vector<1x256xf32>
    %166 = math.rsqrt %165 : vector<1x256xf32>
    %167 = vector.broadcast %166 : vector<1x256xf32> to vector<2x256xf32>
    %168 = arith.mulf %163, %167 : vector<2x256xf32>
    %169 = vector.broadcast %148 : vector<1x256xf32> to vector<2x256xf32>
    %170 = arith.mulf %168, %169 : vector<2x256xf32>
    %171 = vector.broadcast %149 : vector<1x256xf32> to vector<2x256xf32>
    %172 = arith.addf %170, %171 : vector<2x256xf32>
    %cst_72 = arith.constant 0.000000e+00 : f32
    %173 = vector.broadcast %cst_72 : f32 to vector<2x256xf32>
    %174 = arith.maximumf %172, %173 : vector<2x256xf32>
    %175 = arith.truncf %174 : vector<2x256xf32> to vector<2x256xbf16>
    %c0_73 = arith.constant 0 : index
    %c0_74 = arith.constant 0 : index
    %176 = vector.load %arg16[%c0_73, %c0_74] : memref<256x128xbf16, #tpu.memory_space<vmem>>, vector<256x128xbf16>
    %cst_75 = arith.constant dense<0.000000e+00> : vector<2x128xf32>
    %177 = tpu.matmul %175, %176, %cst_75 {dimension_numbers = #tpu.dot_dimension_numbers<[1], [0], [0], [1], [0, 0, 1, 1], [], []>} : vector<2x256xbf16>, vector<256x128xbf16>, vector<2x128xf32> -> vector<2x128xf32>
    %178 = arith.mulf %177, %177 : vector<2x128xf32>
    %cst_76 = arith.constant dense<0.000000e+00> : vector<2xf32>
    %179 = vector.multi_reduction <add>, %178, %cst_76 [1] : vector<2x128xf32> to vector<2xf32>
    %180 = vector.shape_cast %179 : vector<2xf32> to vector<2x1xf32>
    %cst_77 = arith.constant 1.000000e-24 : f32
    %181 = vector.broadcast %cst_77 : f32 to vector<2x1xf32>
    %182 = arith.maximumf %180, %181 : vector<2x1xf32>
    %183 = math.rsqrt %182 : vector<2x1xf32>
    %184 = vector.broadcast %183 : vector<2x1xf32> to vector<2x128xf32>
    %185 = arith.mulf %177, %184 : vector<2x128xf32>
    %186 = arith.mulf %127, %127 : vector<2x128xf32>
    %cst_78 = arith.constant dense<0.000000e+00> : vector<2xf32>
    %187 = vector.multi_reduction <add>, %186, %cst_78 [1] : vector<2x128xf32> to vector<2xf32>
    %188 = vector.shape_cast %187 : vector<2xf32> to vector<2x1xf32>
    %cst_79 = arith.constant 1.000000e-24 : f32
    %189 = vector.broadcast %cst_79 : f32 to vector<2x1xf32>
    %190 = arith.maximumf %188, %189 : vector<2x1xf32>
    %191 = math.rsqrt %190 : vector<2x1xf32>
    %192 = vector.broadcast %191 : vector<2x1xf32> to vector<2x128xf32>
    %193 = arith.mulf %127, %192 : vector<2x128xf32>
    %194 = arith.mulf %185, %193 : vector<2x128xf32>
    %cst_80 = arith.constant dense<0.000000e+00> : vector<2xf32>
    %195 = vector.multi_reduction <add>, %194, %cst_80 [1] : vector<2x128xf32> to vector<2xf32>
    %196 = vector.shape_cast %195 : vector<2xf32> to vector<2x1xf32>
    %cst_81 = arith.constant 2.000000e+00 : f32
    %197 = vector.broadcast %cst_81 : f32 to vector<2x1xf32>
    %198 = arith.mulf %197, %196 : vector<2x1xf32>
    %cst_82 = arith.constant 2.000000e+00 : f32
    %199 = vector.broadcast %cst_82 : f32 to vector<2x1xf32>
    %200 = arith.subf %199, %198 : vector<2x1xf32>
    %201 = vector.shape_cast %200 : vector<2x1xf32> to vector<1x2x1xf32>
    %cst_83 = arith.constant dense<0.000000e+00> : vector<1xf32>
    %202 = vector.multi_reduction <add>, %201, %cst_83 [1, 2] : vector<1x2x1xf32> to vector<1xf32>
    %203 = vector.shape_cast %202 : vector<1xf32> to vector<1x1x1xf32>
    %204 = vector.extract %203[0, 0, 0] : f32 from vector<1x1x1xf32>
    %cst_84 = arith.constant 2.000000e+00 : f32
    %205 = arith.divf %204, %cst_84 : f32
    %206 = arith.truncf %72 : vector<2x128xf32> to vector<2x128xbf16>
    %c0_85 = arith.constant 0 : index
    %c0_86 = arith.constant 0 : index
    %207 = vector.load %arg17[%c0_85, %c0_86] : memref<128x256xbf16, #tpu.memory_space<vmem>>, vector<128x256xbf16>
    %c0_87 = arith.constant 0 : index
    %c0_88 = arith.constant 0 : index
    %208 = vector.load %arg18[%c0_87, %c0_88] : memref<1x256xf32, #tpu.memory_space<vmem>>, vector<1x256xf32>
    %c0_89 = arith.constant 0 : index
    %c0_90 = arith.constant 0 : index
    %209 = vector.load %arg19[%c0_89, %c0_90] : memref<1x256xf32, #tpu.memory_space<vmem>>, vector<1x256xf32>
    %cst_91 = arith.constant dense<0.000000e+00> : vector<2x256xf32>
    %210 = tpu.matmul %206, %207, %cst_91 {dimension_numbers = #tpu.dot_dimension_numbers<[1], [0], [0], [1], [0, 0, 1, 1], [], []>} : vector<2x128xbf16>, vector<128x256xbf16>, vector<2x256xf32> -> vector<2x256xf32>
    %cst_92 = arith.constant dense<0.000000e+00> : vector<256xf32>
    %211 = vector.multi_reduction <add>, %210, %cst_92 [0] : vector<2x256xf32> to vector<256xf32>
    %212 = vector.shape_cast %211 : vector<256xf32> to vector<1x256xf32>
    %cst_93 = arith.constant 2.000000e+00 : f32
    %213 = vector.broadcast %cst_93 : f32 to vector<1x256xf32>
    %214 = arith.divf %212, %213 : vector<1x256xf32>
    %215 = vector.broadcast %214 : vector<1x256xf32> to vector<2x256xf32>
    %216 = arith.subf %210, %215 : vector<2x256xf32>
    %217 = arith.mulf %216, %216 : vector<2x256xf32>
    %cst_94 = arith.constant dense<0.000000e+00> : vector<256xf32>
    %218 = vector.multi_reduction <add>, %217, %cst_94 [0] : vector<2x256xf32> to vector<256xf32>
    %219 = vector.shape_cast %218 : vector<256xf32> to vector<1x256xf32>
    %cst_95 = arith.constant 2.000000e+00 : f32
    %220 = vector.broadcast %cst_95 : f32 to vector<1x256xf32>
    %221 = arith.divf %219, %220 : vector<1x256xf32>
    %222 = vector.broadcast %214 : vector<1x256xf32> to vector<2x256xf32>
    %223 = arith.subf %210, %222 : vector<2x256xf32>
    %cst_96 = arith.constant 9.99999974E-6 : f32
    %224 = vector.broadcast %cst_96 : f32 to vector<1x256xf32>
    %225 = arith.addf %221, %224 : vector<1x256xf32>
    %226 = math.rsqrt %225 : vector<1x256xf32>
    %227 = vector.broadcast %226 : vector<1x256xf32> to vector<2x256xf32>
    %228 = arith.mulf %223, %227 : vector<2x256xf32>
    %229 = vector.broadcast %208 : vector<1x256xf32> to vector<2x256xf32>
    %230 = arith.mulf %228, %229 : vector<2x256xf32>
    %231 = vector.broadcast %209 : vector<1x256xf32> to vector<2x256xf32>
    %232 = arith.addf %230, %231 : vector<2x256xf32>
    %cst_97 = arith.constant 0.000000e+00 : f32
    %233 = vector.broadcast %cst_97 : f32 to vector<2x256xf32>
    %234 = arith.maximumf %232, %233 : vector<2x256xf32>
    %235 = arith.truncf %234 : vector<2x256xf32> to vector<2x256xbf16>
    %c0_98 = arith.constant 0 : index
    %c0_99 = arith.constant 0 : index
    %236 = vector.load %arg20[%c0_98, %c0_99] : memref<256x128xbf16, #tpu.memory_space<vmem>>, vector<256x128xbf16>
    %cst_100 = arith.constant dense<0.000000e+00> : vector<2x128xf32>
    %237 = tpu.matmul %235, %236, %cst_100 {dimension_numbers = #tpu.dot_dimension_numbers<[1], [0], [0], [1], [0, 0, 1, 1], [], []>} : vector<2x256xbf16>, vector<256x128xbf16>, vector<2x128xf32> -> vector<2x128xf32>
    %238 = arith.mulf %145, %145 : vector<2x128xf32>
    %cst_101 = arith.constant dense<0.000000e+00> : vector<2xf32>
    %239 = vector.multi_reduction <add>, %238, %cst_101 [1] : vector<2x128xf32> to vector<2xf32>
    %240 = vector.shape_cast %239 : vector<2xf32> to vector<2x1xf32>
    %cst_102 = arith.constant 1.000000e-24 : f32
    %241 = vector.broadcast %cst_102 : f32 to vector<2x1xf32>
    %242 = arith.maximumf %240, %241 : vector<2x1xf32>
    %243 = math.rsqrt %242 : vector<2x1xf32>
    %244 = vector.broadcast %243 : vector<2x1xf32> to vector<2x128xf32>
    %245 = arith.mulf %145, %244 : vector<2x128xf32>
    %246 = arith.mulf %237, %237 : vector<2x128xf32>
    %cst_103 = arith.constant dense<0.000000e+00> : vector<2xf32>
    %247 = vector.multi_reduction <add>, %246, %cst_103 [1] : vector<2x128xf32> to vector<2xf32>
    %248 = vector.shape_cast %247 : vector<2xf32> to vector<2x1xf32>
    %cst_104 = arith.constant 1.000000e-24 : f32
    %249 = vector.broadcast %cst_104 : f32 to vector<2x1xf32>
    %250 = arith.maximumf %248, %249 : vector<2x1xf32>
    %251 = math.rsqrt %250 : vector<2x1xf32>
    %252 = vector.broadcast %251 : vector<2x1xf32> to vector<2x128xf32>
    %253 = arith.mulf %237, %252 : vector<2x128xf32>
    %cst_105 = arith.constant dense<0.000000e+00> : vector<2x2xf32>
    %254 = tpu.matmul %245, %245, %cst_105 {dimension_numbers = #tpu.dot_dimension_numbers<[1], [1], [0], [0], [0, 0, 1, 0], [], []>} : vector<2x128xf32>, vector<2x128xf32>, vector<2x2xf32> -> vector<2x2xf32>
    %cst_106 = arith.constant dense<0.000000e+00> : vector<2x2xf32>
    %255 = tpu.matmul %253, %253, %cst_106 {dimension_numbers = #tpu.dot_dimension_numbers<[1], [1], [0], [0], [0, 0, 1, 0], [], []>} : vector<2x128xf32>, vector<2x128xf32>, vector<2x2xf32> -> vector<2x2xf32>
    %cst_107 = arith.constant dense<0xFF800000> : vector<2xf32>
    %256 = vector.multi_reduction <maximumf>, %254, %cst_107 [1] : vector<2x2xf32> to vector<2xf32>
    %257 = vector.shape_cast %256 : vector<2xf32> to vector<2x1xf32>
    %258 = vector.broadcast %257 : vector<2x1xf32> to vector<2x2xf32>
    %259 = arith.subf %254, %258 : vector<2x2xf32>
    %260 = math.exp %259 : vector<2x2xf32>
    %cst_108 = arith.constant dense<0.000000e+00> : vector<2xf32>
    %261 = vector.multi_reduction <add>, %260, %cst_108 [1] : vector<2x2xf32> to vector<2xf32>
    %262 = vector.shape_cast %261 : vector<2xf32> to vector<2x1xf32>
    %263 = math.log %262 : vector<2x1xf32>
    %264 = arith.addf %263, %257 : vector<2x1xf32>
    %cst_109 = arith.constant dense<0xFF800000> : vector<2xf32>
    %265 = vector.multi_reduction <maximumf>, %255, %cst_109 [1] : vector<2x2xf32> to vector<2xf32>
    %266 = vector.shape_cast %265 : vector<2xf32> to vector<2x1xf32>
    %267 = vector.broadcast %266 : vector<2x1xf32> to vector<2x2xf32>
    %268 = arith.subf %255, %267 : vector<2x2xf32>
    %269 = math.exp %268 : vector<2x2xf32>
    %cst_110 = arith.constant dense<0.000000e+00> : vector<2xf32>
    %270 = vector.multi_reduction <add>, %269, %cst_110 [1] : vector<2x2xf32> to vector<2xf32>
    %271 = vector.shape_cast %270 : vector<2xf32> to vector<2x1xf32>
    %272 = math.log %271 : vector<2x1xf32>
    %273 = arith.addf %272, %266 : vector<2x1xf32>
    %274 = vector.broadcast %264 : vector<2x1xf32> to vector<2x2xf32>
    %275 = arith.subf %254, %274 : vector<2x2xf32>
    %276 = vector.broadcast %273 : vector<2x1xf32> to vector<2x2xf32>
    %277 = arith.subf %255, %276 : vector<2x2xf32>
    %278 = math.exp %275 : vector<2x2xf32>
    %279 = arith.subf %275, %277 : vector<2x2xf32>
    %280 = arith.mulf %278, %279 : vector<2x2xf32>
    %281 = vector.shape_cast %280 : vector<2x2xf32> to vector<1x2x2xf32>
    %cst_111 = arith.constant dense<0.000000e+00> : vector<1xf32>
    %282 = vector.multi_reduction <add>, %281, %cst_111 [1, 2] : vector<1x2x2xf32> to vector<1xf32>
    %283 = vector.shape_cast %282 : vector<1xf32> to vector<1x1x1xf32>
    %284 = vector.extract %283[0, 0, 0] : f32 from vector<1x1x1xf32>
    %cst_112 = arith.constant 5.000000e-01 : f32
    %285 = arith.mulf %284, %cst_112 : f32
    %c0_113 = arith.constant 0 : index
    %c0_114 = arith.constant 0 : index
    %286 = vector.load %arg22[%c0_113, %c0_114] : memref<16x128xf32, #tpu.memory_space<vmem>>, vector<16x128xf32>
    %287 = arith.truncf %286 : vector<16x128xf32> to vector<16x128xbf16>
    %c0_115 = arith.constant 0 : index
    %c0_116 = arith.constant 0 : index
    %288 = vector.load %arg21[%c0_115, %c0_116] : memref<128x384xbf16, #tpu.memory_space<vmem>>, vector<128x384xbf16>
    %cst_117 = arith.constant dense<0.000000e+00> : vector<16x384xf32>
    %289 = tpu.matmul %287, %288, %cst_117 {dimension_numbers = #tpu.dot_dimension_numbers<[1], [0], [0], [1], [0, 0, 1, 1], [], []>} : vector<16x128xbf16>, vector<128x384xbf16>, vector<16x384xf32> -> vector<16x384xf32>
    %c0_118 = arith.constant 0 : index
    %c0_119 = arith.constant 0 : index
    %290 = vector.load %arg23[%c0_118, %c0_119] : memref<1x16xi32, #tpu.memory_space<vmem>>, vector<1x16xi32>
    %291 = arith.sitofp %290 : vector<1x16xi32> to vector<1x16xf32>
    %292 = tpu.iota {dimensions = array<i32: 0>} : vector<16x16xi32>
    %293 = tpu.iota {dimensions = array<i32: 1>} : vector<16x16xi32>
    %294 = arith.cmpi eq, %292, %293 : vector<16x16xi32>
    %cst_120 = arith.constant 0.000000e+00 : f32
    %295 = vector.shape_cast %291 : vector<1x16xf32> to vector<1x16xf32>
    %296 = vector.broadcast %295 : vector<1x16xf32> to vector<16x16xf32>
    %297 = vector.broadcast %cst_120 : f32 to vector<16x16xf32>
    %298 = arith.select %294, %296, %297 : vector<16x16xi1>, vector<16x16xf32>
    %cst_121 = arith.constant dense<0.000000e+00> : vector<16xf32>
    %299 = vector.multi_reduction <add>, %298, %cst_121 [1] : vector<16x16xf32> to vector<16xf32>
    %300 = vector.shape_cast %299 : vector<16xf32> to vector<16x1xf32>
    %cst_122 = arith.constant 0.000000e+00 : f32
    %301 = vector.broadcast %cst_122 : f32 to vector<16x1xf32>
    %302 = arith.cmpf oge, %300, %301 : vector<16x1xf32>
    %303 = arith.extui %302 : vector<16x1xi1> to vector<16x1xi32>
    %304 = arith.sitofp %303 : vector<16x1xi32> to vector<16x1xf32>
    %cst_123 = arith.constant dense<0xFF800000> : vector<16xf32>
    %305 = vector.multi_reduction <maximumf>, %289, %cst_123 [1] : vector<16x384xf32> to vector<16xf32>
    %306 = vector.shape_cast %305 : vector<16xf32> to vector<16x1xf32>
    %307 = vector.broadcast %306 : vector<16x1xf32> to vector<16x384xf32>
    %308 = arith.subf %289, %307 : vector<16x384xf32>
    %309 = math.exp %308 : vector<16x384xf32>
    %cst_124 = arith.constant dense<0.000000e+00> : vector<16xf32>
    %310 = vector.multi_reduction <add>, %309, %cst_124 [1] : vector<16x384xf32> to vector<16xf32>
    %311 = vector.shape_cast %310 : vector<16xf32> to vector<16x1xf32>
    %312 = math.log %311 : vector<16x1xf32>
    %313 = arith.addf %312, %306 : vector<16x1xf32>
    %314 = tpu.iota {dimensions = array<i32: 1>} : vector<16x384xi32>
    %cst_125 = arith.constant 0.000000e+00 : f32
    %315 = vector.broadcast %cst_125 : f32 to vector<16x1xf32>
    %316 = arith.select %302, %300, %315 : vector<16x1xi1>, vector<16x1xf32>
    %317 = arith.fptosi %316 : vector<16x1xf32> to vector<16x1xi32>
    %318 = vector.broadcast %317 : vector<16x1xi32> to vector<16x384xi32>
    %319 = arith.cmpi eq, %314, %318 : vector<16x384xi32>
    %cst_126 = arith.constant 0.000000e+00 : f32
    %320 = vector.broadcast %cst_126 : f32 to vector<16x384xf32>
    %321 = arith.select %319, %289, %320 : vector<16x384xi1>, vector<16x384xf32>
    %cst_127 = arith.constant dense<0.000000e+00> : vector<16xf32>
    %322 = vector.multi_reduction <add>, %321, %cst_127 [1] : vector<16x384xf32> to vector<16xf32>
    %323 = vector.shape_cast %322 : vector<16xf32> to vector<16x1xf32>
    %324 = arith.subf %313, %323 : vector<16x1xf32>
    %325 = arith.mulf %324, %304 : vector<16x1xf32>
    %326 = vector.shape_cast %325 : vector<16x1xf32> to vector<1x16x1xf32>
    %cst_128 = arith.constant dense<0.000000e+00> : vector<1xf32>
    %327 = vector.multi_reduction <add>, %326, %cst_128 [1, 2] : vector<1x16x1xf32> to vector<1xf32>
    %328 = vector.shape_cast %327 : vector<1xf32> to vector<1x1x1xf32>
    %329 = vector.extract %328[0, 0, 0] : f32 from vector<1x1x1xf32>
    %330 = vector.shape_cast %304 : vector<16x1xf32> to vector<1x16x1xf32>
    %cst_129 = arith.constant dense<0.000000e+00> : vector<1xf32>
    %331 = vector.multi_reduction <add>, %330, %cst_129 [1, 2] : vector<1x16x1xf32> to vector<1xf32>
    %332 = vector.shape_cast %331 : vector<1xf32> to vector<1x1x1xf32>
    %333 = vector.extract %332[0, 0, 0] : f32 from vector<1x1x1xf32>
    %cst_130 = arith.constant 1.000000e+00 : f32
    %334 = arith.maximumf %333, %cst_130 : f32
    %335 = arith.divf %329, %334 : f32
    %c0_131 = arith.constant 0 : index
    %c0_132 = arith.constant 0 : index
    %336 = vector.load %arg24[%c0_131, %c0_132] : memref<10x128xf32, #tpu.memory_space<vmem>>, vector<10x128xf32>
    %c0_133 = arith.constant 0 : index
    %c0_134 = arith.constant 0 : index
    %337 = vector.load %arg25[%c0_133, %c0_134] : memref<10x128xf32, #tpu.memory_space<vmem>>, vector<10x128xf32>
    %cst_135 = arith.constant dense<0.000000e+00> : vector<10x10xf32>
    %338 = tpu.matmul %336, %337, %cst_135 {dimension_numbers = #tpu.dot_dimension_numbers<[1], [1], [0], [0], [0, 0, 1, 0], [], []>} : vector<10x128xf32>, vector<10x128xf32>, vector<10x10xf32> -> vector<10x10xf32>
    %c0_136 = arith.constant 0 : index
    %c0_137 = arith.constant 0 : index
    %339 = vector.load %arg28[%c0_136, %c0_137] : memref<10x1xf32, #tpu.memory_space<vmem>>, vector<10x1xf32>
    %c0_138 = arith.constant 0 : index
    %c0_139 = arith.constant 0 : index
    %340 = vector.load %arg29[%c0_138, %c0_139] : memref<1x10xf32, #tpu.memory_space<vmem>>, vector<1x10xf32>
    %341 = vector.broadcast %339 : vector<10x1xf32> to vector<10x10xf32>
    %342 = vector.broadcast %340 : vector<1x10xf32> to vector<10x10xf32>
    %343 = arith.cmpf oeq, %341, %342 : vector<10x10xf32>
    %c0_140 = arith.constant 0 : index
    %c0_141 = arith.constant 0 : index
    %344 = vector.load %arg27[%c0_140, %c0_141] : memref<1x10xf32, #tpu.memory_space<vmem>>, vector<1x10xf32>
    %cst_142 = arith.constant 0.000000e+00 : f32
    %345 = vector.broadcast %cst_142 : f32 to vector<1x10xf32>
    %346 = arith.cmpf ogt, %344, %345 : vector<1x10xf32>
    %347 = vector.broadcast %346 : vector<1x10xi1> to vector<10x10xi1>
    %348 = arith.andi %343, %347 : vector<10x10xi1>
    %cst_143 = arith.constant -1.000000e+30 : f32
    %349 = vector.broadcast %cst_143 : f32 to vector<10x10xf32>
    %350 = arith.select %348, %338, %349 : vector<10x10xi1>, vector<10x10xf32>
    %cst_144 = arith.constant dense<0xFF800000> : vector<10xf32>
    %351 = vector.multi_reduction <maximumf>, %350, %cst_144 [1] : vector<10x10xf32> to vector<10xf32>
    %352 = vector.shape_cast %351 : vector<10xf32> to vector<10x1xf32>
    %353 = vector.broadcast %352 : vector<10x1xf32> to vector<10x10xf32>
    %354 = arith.subf %350, %353 : vector<10x10xf32>
    %355 = math.exp %354 : vector<10x10xf32>
    %cst_145 = arith.constant dense<0.000000e+00> : vector<10xf32>
    %356 = vector.multi_reduction <add>, %355, %cst_145 [1] : vector<10x10xf32> to vector<10xf32>
    %357 = vector.shape_cast %356 : vector<10xf32> to vector<10x1xf32>
    %358 = math.log %357 : vector<10x1xf32>
    %359 = arith.addf %358, %352 : vector<10x1xf32>
    %360 = tpu.iota {dimensions = array<i32: 0>} : vector<10x10xi32>
    %361 = tpu.iota {dimensions = array<i32: 1>} : vector<10x10xi32>
    %362 = arith.cmpi eq, %360, %361 : vector<10x10xi32>
    %cst_146 = arith.constant 0.000000e+00 : f32
    %363 = vector.broadcast %cst_146 : f32 to vector<10x10xf32>
    %364 = arith.select %362, %338, %363 : vector<10x10xi1>, vector<10x10xf32>
    %cst_147 = arith.constant dense<0.000000e+00> : vector<10xf32>
    %365 = vector.multi_reduction <add>, %364, %cst_147 [1] : vector<10x10xf32> to vector<10xf32>
    %366 = vector.shape_cast %365 : vector<10xf32> to vector<10x1xf32>
    %367 = arith.subf %366, %359 : vector<10x1xf32>
    %c0_148 = arith.constant 0 : index
    %c0_149 = arith.constant 0 : index
    %368 = vector.load %arg26[%c0_148, %c0_149] : memref<10x1xf32, #tpu.memory_space<vmem>>, vector<10x1xf32>
    %cst_150 = arith.constant 0.000000e+00 : f32
    %369 = vector.broadcast %cst_150 : f32 to vector<10x1xf32>
    %370 = arith.cmpf oeq, %339, %369 : vector<10x1xf32>
    %371 = arith.extui %370 : vector<10x1xi1> to vector<10x1xi32>
    %372 = arith.sitofp %371 : vector<10x1xi32> to vector<10x1xf32>
    %cst_151 = arith.constant 0.000000e+00 : f32
    %373 = vector.broadcast %cst_151 : f32 to vector<10x1xf32>
    %374 = arith.subf %373, %367 : vector<10x1xf32>
    %375 = arith.mulf %374, %368 : vector<10x1xf32>
    %376 = arith.mulf %375, %372 : vector<10x1xf32>
    %377 = vector.shape_cast %376 : vector<10x1xf32> to vector<1x10x1xf32>
    %cst_152 = arith.constant dense<0.000000e+00> : vector<1xf32>
    %378 = vector.multi_reduction <add>, %377, %cst_152 [1, 2] : vector<1x10x1xf32> to vector<1xf32>
    %379 = vector.shape_cast %378 : vector<1xf32> to vector<1x1x1xf32>
    %380 = vector.extract %379[0, 0, 0] : f32 from vector<1x1x1xf32>
    %381 = arith.mulf %368, %372 : vector<10x1xf32>
    %382 = vector.shape_cast %381 : vector<10x1xf32> to vector<1x10x1xf32>
    %cst_153 = arith.constant dense<0.000000e+00> : vector<1xf32>
    %383 = vector.multi_reduction <add>, %382, %cst_153 [1, 2] : vector<1x10x1xf32> to vector<1xf32>
    %384 = vector.shape_cast %383 : vector<1xf32> to vector<1x1x1xf32>
    %385 = vector.extract %384[0, 0, 0] : f32 from vector<1x1x1xf32>
    %cst_154 = arith.constant 0.000000e+00 : f32
    %386 = arith.cmpf ogt, %385, %cst_154 : f32
    %387 = arith.extui %386 : i1 to i32
    %388 = arith.sitofp %387 : i32 to f32
    %389 = arith.mulf %388, %380 : f32
    %cst_155 = arith.constant 9.99999996E-13 : f32
    %390 = arith.maximumf %385, %cst_155 : f32
    %391 = arith.divf %389, %390 : f32
    %cst_156 = arith.constant 0.000000e+00 : f32
    %392 = arith.addf %cst_156, %391 : f32
    %cst_157 = arith.constant 0.000000e+00 : f32
    %393 = arith.addf %cst_157, %388 : f32
    %cst_158 = arith.constant 1.000000e+00 : f32
    %394 = vector.broadcast %cst_158 : f32 to vector<10x1xf32>
    %395 = arith.cmpf oeq, %339, %394 : vector<10x1xf32>
    %396 = arith.extui %395 : vector<10x1xi1> to vector<10x1xi32>
    %397 = arith.sitofp %396 : vector<10x1xi32> to vector<10x1xf32>
    %cst_159 = arith.constant 0.000000e+00 : f32
    %398 = vector.broadcast %cst_159 : f32 to vector<10x1xf32>
    %399 = arith.subf %398, %367 : vector<10x1xf32>
    %400 = arith.mulf %399, %368 : vector<10x1xf32>
    %401 = arith.mulf %400, %397 : vector<10x1xf32>
    %402 = vector.shape_cast %401 : vector<10x1xf32> to vector<1x10x1xf32>
    %cst_160 = arith.constant dense<0.000000e+00> : vector<1xf32>
    %403 = vector.multi_reduction <add>, %402, %cst_160 [1, 2] : vector<1x10x1xf32> to vector<1xf32>
    %404 = vector.shape_cast %403 : vector<1xf32> to vector<1x1x1xf32>
    %405 = vector.extract %404[0, 0, 0] : f32 from vector<1x1x1xf32>
    %406 = arith.mulf %368, %397 : vector<10x1xf32>
    %407 = vector.shape_cast %406 : vector<10x1xf32> to vector<1x10x1xf32>
    %cst_161 = arith.constant dense<0.000000e+00> : vector<1xf32>
    %408 = vector.multi_reduction <add>, %407, %cst_161 [1, 2] : vector<1x10x1xf32> to vector<1xf32>
    %409 = vector.shape_cast %408 : vector<1xf32> to vector<1x1x1xf32>
    %410 = vector.extract %409[0, 0, 0] : f32 from vector<1x1x1xf32>
    %cst_162 = arith.constant 0.000000e+00 : f32
    %411 = arith.cmpf ogt, %410, %cst_162 : f32
    %412 = arith.extui %411 : i1 to i32
    %413 = arith.sitofp %412 : i32 to f32
    %414 = arith.mulf %413, %405 : f32
    %cst_163 = arith.constant 9.99999996E-13 : f32
    %415 = arith.maximumf %410, %cst_163 : f32
    %416 = arith.divf %414, %415 : f32
    %417 = arith.addf %392, %416 : f32
    %418 = arith.addf %393, %413 : f32
    %cst_164 = arith.constant 1.000000e+00 : f32
    %419 = arith.maximumf %418, %cst_164 : f32
    %420 = arith.divf %417, %419 : f32
    %421 = arith.addf %205, %335 : f32
    %422 = arith.addf %421, %420 : f32
    %cst_165 = arith.constant 1.000000e+01 : f32
    %423 = arith.mulf %cst_165, %285 : f32
    %424 = arith.addf %422, %423 : f32
    %425 = vector.broadcast %424 : f32 to vector<1x1xf32>
    %c0_166 = arith.constant 0 : index
    %c0_167 = arith.constant 0 : index
    %426 = vector.load %arg30[%c0_166, %c0_167] : memref<1x1xf32, #tpu.memory_space<vmem>>, vector<1x1xf32>
    tpu.vector_store %arg30[%c0_166, %c0_167], %425 {strides = array<i32>} : memref<1x1xf32, #tpu.memory_space<vmem>>, vector<1x1xf32>,
    return
  }
  func.func @transform_0(%arg0: i32) -> (i32, i32) {
    %c0_i32 = arith.constant 0 : i32
    %c0_i32_0 = arith.constant 0 : i32
    %c0_i32_1 = arith.constant 0 : i32
    return %c0_i32, %c0_i32_0 : i32, i32
  }
  func.func @transform_1(%arg0: i32) -> (i32, i32) {
    %c0_i32 = arith.constant 0 : i32
    %c0_i32_0 = arith.constant 0 : i32
    %c0_i32_1 = arith.constant 0 : i32
    return %c0_i32, %c0_i32_0 : i32, i32
  }
  func.func @transform_2(%arg0: i32) -> (i32, i32) {
    %c0_i32 = arith.constant 0 : i32
    %c0_i32_0 = arith.constant 0 : i32
    %c0_i32_1 = arith.constant 0 : i32
    return %c0_i32, %c0_i32_0 : i32, i32
  }
  func.func @transform_3(%arg0: i32) -> (i32, i32) {
    %c0_i32 = arith.constant 0 : i32
    %c0_i32_0 = arith.constant 0 : i32
    %c0_i32_1 = arith.constant 0 : i32
    return %c0_i32, %c0_i32_0 : i32, i32
  }
  func.func @transform_4(%arg0: i32) -> (i32, i32) {
    %c0_i32 = arith.constant 0 : i32
    %c0_i32_0 = arith.constant 0 : i32
    %c0_i32_1 = arith.constant 0 : i32
    return %c0_i32, %c0_i32_0 : i32, i32
  }
  func.func @transform_5(%arg0: i32) -> (i32, i32) {
    %c0_i32 = arith.constant 0 : i32
    %c0_i32_0 = arith.constant 0 : i32
    %c0_i32_1 = arith.constant 0 : i32
    return %c0_i32, %c0_i32_0 : i32, i32
  }
  func.func @transform_6(%arg0: i32) -> (i32, i32) {
    %c0_i32 = arith.constant 0 : i32
    %c0_i32_0 = arith.constant 0 : i32
    %c0_i32_1 = arith.constant 0 : i32
    return %c0_i32, %c0_i32_0 : i32, i32
  }
  func.func @transform_7(%arg0: i32) -> (i32, i32) {
    %c0_i32 = arith.constant 0 : i32
    %c0_i32_0 = arith.constant 0 : i32
    %c0_i32_1 = arith.constant 0 : i32
    return %c0_i32, %c0_i32_0 : i32, i32
  }
  func.func @transform_8(%arg0: i32) -> (i32, i32) {
    %c0_i32 = arith.constant 0 : i32
    %c0_i32_0 = arith.constant 0 : i32
    %c0_i32_1 = arith.constant 0 : i32
    return %c0_i32, %c0_i32_0 : i32, i32
  }
  func.func @transform_9(%arg0: i32) -> (i32, i32) {
    %c0_i32 = arith.constant 0 : i32
    %c0_i32_0 = arith.constant 0 : i32
    %c0_i32_1 = arith.constant 0 : i32
    return %c0_i32, %c0_i32_0 : i32, i32
  }
  func.func @transform_10(%arg0: i32) -> (i32, i32) {
    %c0_i32 = arith.constant 0 : i32
    %c0_i32_0 = arith.constant 0 : i32
    %c0_i32_1 = arith.constant 0 : i32
    return %c0_i32, %c0_i32_0 : i32, i32
  }
  func.func @transform_11(%arg0: i32) -> (i32, i32) {
    %c0_i32 = arith.constant 0 : i32
    %c0_i32_0 = arith.constant 0 : i32
    %c0_i32_1 = arith.constant 0 : i32
    return %c0_i32, %c0_i32_0 : i32, i32
  }
  func.func @transform_12(%arg0: i32) -> (i32, i32) {
    %c0_i32 = arith.constant 0 : i32
    %c0_i32_0 = arith.constant 0 : i32
    %c0_i32_1 = arith.constant 0 : i32
    return %c0_i32, %c0_i32_0 : i32, i32
  }
  func.func @transform_13(%arg0: i32) -> (i32, i32) {
    %c0_i32 = arith.constant 0 : i32
    %c0_i32_0 = arith.constant 0 : i32
    %c0_i32_1 = arith.constant 0 : i32
    return %c0_i32, %c0_i32_0 : i32, i32
  }
  func.func @transform_14(%arg0: i32) -> (i32, i32) {
    %c0_i32 = arith.constant 0 : i32
    %c0_i32_0 = arith.constant 0 : i32
    %c0_i32_1 = arith.constant 0 : i32
    return %c0_i32, %c0_i32_0 : i32, i32
  }
  func.func @transform_15(%arg0: i32) -> (i32, i32) {
    %c0_i32 = arith.constant 0 : i32
    %c0_i32_0 = arith.constant 0 : i32
    %c0_i32_1 = arith.constant 0 : i32
    return %c0_i32, %c0_i32_0 : i32, i32
  }
  func.func @transform_16(%arg0: i32) -> (i32, i32) {
    %c0_i32 = arith.constant 0 : i32
    %c0_i32_0 = arith.constant 0 : i32
    %c0_i32_1 = arith.constant 0 : i32
    return %c0_i32, %c0_i32_0 : i32, i32
  }
  func.func @transform_17(%arg0: i32) -> (i32, i32) {
    %c0_i32 = arith.constant 0 : i32
    %c0_i32_0 = arith.constant 0 : i32
    %c0_i32_1 = arith.constant 0 : i32
    return %c0_i32, %c0_i32_0 : i32, i32
  }
  func.func @transform_18(%arg0: i32) -> (i32, i32) {
    %c0_i32 = arith.constant 0 : i32
    %c0_i32_0 = arith.constant 0 : i32
    %c0_i32_1 = arith.constant 0 : i32
    return %c0_i32, %c0_i32_0 : i32, i32
  }
  func.func @transform_19(%arg0: i32) -> (i32, i32) {
    %c0_i32 = arith.constant 0 : i32
    %c0_i32_0 = arith.constant 0 : i32
    %c0_i32_1 = arith.constant 0 : i32
    return %c0_i32, %c0_i32_0 : i32, i32
  }
  func.func @transform_20(%arg0: i32) -> (i32, i32) {
    %c0_i32 = arith.constant 0 : i32
    %c0_i32_0 = arith.constant 0 : i32
    %c0_i32_1 = arith.constant 0 : i32
    return %c0_i32, %c0_i32_0 : i32, i32
  }
  func.func @transform_21(%arg0: i32) -> (i32, i32) {
    %c0_i32 = arith.constant 0 : i32
    %c0_i32_0 = arith.constant 0 : i32
    %c0_i32_1 = arith.constant 0 : i32
    return %c0_i32, %c0_i32_0 : i32, i32
  }
  func.func @transform_22(%arg0: i32) -> (i32, i32) {
    %c0_i32 = arith.constant 0 : i32
    %c0_i32_0 = arith.constant 0 : i32
    %c0_i32_1 = arith.constant 0 : i32
    return %c0_i32, %c0_i32_0 : i32, i32
  }
  func.func @transform_23(%arg0: i32) -> (i32, i32) {
    %c0_i32 = arith.constant 0 : i32
    %c0_i32_0 = arith.constant 0 : i32
    %c0_i32_1 = arith.constant 0 : i32
    return %c0_i32, %c0_i32_0 : i32, i32
  }
  func.func @transform_24(%arg0: i32) -> (i32, i32) {
    %c0_i32 = arith.constant 0 : i32
    %c0_i32_0 = arith.constant 0 : i32
    %c0_i32_1 = arith.constant 0 : i32
    return %c0_i32, %c0_i32_0 : i32, i32
  }
  func.func @transform_25(%arg0: i32) -> (i32, i32) {
    %c0_i32 = arith.constant 0 : i32
    %c0_i32_0 = arith.constant 0 : i32
    %c0_i32_1 = arith.constant 0 : i32
    return %c0_i32, %c0_i32_0 : i32, i32
  }
  func.func @transform_26(%arg0: i32) -> (i32, i32) {
    %c0_i32 = arith.constant 0 : i32
    %c0_i32_0 = arith.constant 0 : i32
    %c0_i32_1 = arith.constant 0 : i32
    return %c0_i32, %c0_i32_0 : i32, i32
  }
  func.func @transform_27(%arg0: i32) -> (i32, i32) {
    %c0_i32 = arith.constant 0 : i32
    %c0_i32_0 = arith.constant 0 : i32
    %c0_i32_1 = arith.constant 0 : i32
    return %c0_i32, %c0_i32_0 : i32, i32
  }
  func.func @transform_28(%arg0: i32) -> (i32, i32) {
    %c0_i32 = arith.constant 0 : i32
    %c0_i32_0 = arith.constant 0 : i32
    %c0_i32_1 = arith.constant 0 : i32
    return %c0_i32, %c0_i32_0 : i32, i32
  }
  func.func @transform_29(%arg0: i32) -> (i32, i32) {
    %c0_i32 = arith.constant 0 : i32
    %c0_i32_0 = arith.constant 0 : i32
    %c0_i32_1 = arith.constant 0 : i32
    return %c0_i32, %c0_i32_0 : i32, i32
  }
}

</mosaic_0001>

<llo_original>
// kernel: _mmkd_forward.3
$region0: #{_mmkd_forward.3}
  #allocation0 [shape = 'u32[]', space=smem, size = 0x4, offset = 0x4, fixed_abs, tag = 'smem constant byte address 0x4 - core index']
  #allocation1 [shape = 'u32[144,128]{1,0:T(1,128)}', space=vmem, size = 0x12000, scoped, tag = 'internal scratch']
  %s0 = inlined_call_operand.vmem [shape: f32[48,128], index: 0, kind: input, shape index: {}]
  %s1 = inlined_call_operand.vmem [shape: bf16[128,256], index: 1, kind: input, shape index: {}]
  %s2 = inlined_call_operand.vmem [shape: f32[1,256], index: 2, kind: input, shape index: {}]
  %s3 = inlined_call_operand.vmem [shape: bf16[256,128], index: 3, kind: input, shape index: {}]
  %s4 = inlined_call_operand.vmem [shape: f32[1,128], index: 4, kind: input, shape index: {}]
  %s5 = inlined_call_operand.vmem [shape: f32[1,128], index: 5, kind: input, shape index: {}]
  %s6 = inlined_call_operand.vmem [shape: f32[1,128], index: 6, kind: input, shape index: {}]
  %s7 = inlined_call_operand.vmem [shape: f32[48,128], index: 7, kind: output, shape index: {}]
  %s8 = sld [smem:[#allocation0]]
  $region61: #{_mmkd_forward.3} parent=0
    _
  %s10 = ssub.s32 1, %s8
  %s11 = scalar_select 0, %s10, %s8
  loop: start=0, step=1, limit=4
  $region2: #{_mmkd_forward.3} parent=0 // loop_pre_header
    _
  $region3: #{_mmkd_forward.3} parent=0 // loop_header
    %s13 = sphi 0, %s17
    %p14 = scmp.ge.s32.totalorder %s13, 4
    %s23 = sphi 0, %s25
    %s26 = sphi 0, %s23
    %s27 = sphi 0, %s26
    %s43 = sphi 0, %s27
    %s47 = sphi 0, %s47
    %s49 = sphi 0, %s47
    %s50 = sphi 0, %s49
    %s64 = sphi 0, %s50
    %s68 = sphi 0, %s68
    %s70 = sphi 0, %s68
    %s71 = sphi 0, %s70
    %s85 = sphi 0, %s71
    %s89 = sphi 0, %s89
    %s91 = sphi 0, %s89
    %s92 = sphi 0, %s91
    %s106 = sphi 0, %s92
    %s110 = sphi 0, %s110
    %s112 = sphi 0, %s110
    %s113 = sphi 0, %s112
    %s127 = sphi 0, %s113
    %s131 = sphi 0, %s131
    %s133 = sphi 0, %s131
    %s134 = sphi 0, %s133
    %s148 = sphi 0, %s134
    %s152 = sphi 0, %s152
    %s154 = sphi 0, %s152
    %s155 = sphi 0, %s154
    %s169 = sphi 0, %s155
    %s175 = sphi 0, %s177
    %s178 = sphi 0, %s175
    %s179 = sphi 0, %s178
    %s195 = sphi 0, %s179
  $region4: #{_mmkd_forward.3} parent=0 // loop_header_branch
    %16 = sbr.rel (%p14) target = $region8
  $region5: #{_mmkd_forward.3} parent=0 // loop_body
    %s18 = ssub.s32 %s13, 1
    %s19 = ssub.s32 %s13, 2
    %s20 = sadd.s32 %s13, 1
    %s21 = ssub.s32 %s13, %s20
    %p22 = scmp.eq.s32.totalorder %s21, 0
    %s24 = sadd.s32 %s23, 1
    %s25 = scalar_select %p22, %s23, %s24
    %p28 = pneg %p22
    %p29 = scmp.eq.s32.totalorder %s13, 1
    %p30 = por %p28, %p29
    %p31 = scmp.ne.s32.totalorder %s23, %s26
    %p32 = scmp.eq.s32.totalorder %s13, 0
    %p33 = por %p31, %p32
    %p34 = scmp.ne.s32.totalorder %s23, %s26
    %p35 = scmp.eq.s32.totalorder %s18, 1
    %p36 = por %p34, %p35
    %p37 = scmp.ne.s32.totalorder %s26, %s27
    %p38 = scmp.eq.s32.totalorder %s18, 0
    %p39 = por %p37, %p38
    %p40 = scmp.ne.s32.totalorder %s26, %s27
    %p41 = scmp.eq.s32.totalorder %s19, 1
    %p42 = por %p40, %p41
    %p44 = scmp.ne.s32.totalorder %s27, %s43
    %p45 = scmp.eq.s32.totalorder %s19, 0
    %p46 = por %p44, %p45
    %s48 = sadd.s32 %s47, 1
    %p51 = scmp.eq.s32.totalorder %s13, 1
    %p52 = scmp.ne.s32.totalorder %s47, %s49
    %p53 = scmp.eq.s32.totalorder %s13, 0
    %p54 = por %p52, %p53
    %p55 = scmp.ne.s32.totalorder %s47, %s49
    %p56 = scmp.eq.s32.totalorder %s18, 1
    %p57 = por %p55, %p56
    %p58 = scmp.ne.s32.totalorder %s49, %s50
    %p59 = scmp.eq.s32.totalorder %s18, 0
    %p60 = por %p58, %p59
    %p61 = scmp.ne.s32.totalorder %s49, %s50
    %p62 = scmp.eq.s32.totalorder %s19, 1
    %p63 = por %p61, %p62
    %p65 = scmp.ne.s32.totalorder %s50, %s64
    %p66 = scmp.eq.s32.totalorder %s19, 0
    %p67 = por %p65, %p66
    %s69 = sadd.s32 %s68, 1
    %p72 = scmp.eq.s32.totalorder %s13, 1
    %p73 = scmp.ne.s32.totalorder %s68, %s70
    %p74 = scmp.eq.s32.totalorder %s13, 0
    %p75 = por %p73, %p74
    %p76 = scmp.ne.s32.totalorder %s68, %s70
    %p77 = scmp.eq.s32.totalorder %s18, 1
    %p78 = por %p76, %p77
    %p79 = scmp.ne.s32.totalorder %s70, %s71
    %p80 = scmp.eq.s32.totalorder %s18, 0
    %p81 = por %p79, %p80
    %p82 = scmp.ne.s32.totalorder %s70, %s71
    %p83 = scmp.eq.s32.totalorder %s19, 1
    %p84 = por %p82, %p83
    %p86 = scmp.ne.s32.totalorder %s71, %s85
    %p87 = scmp.eq.s32.totalorder %s19, 0
    %p88 = por %p86, %p87
    %s90 = sadd.s32 %s89, 1
    %p93 = scmp.eq.s32.totalorder %s13, 1
    %p94 = scmp.ne.s32.totalorder %s89, %s91
    %p95 = scmp.eq.s32.totalorder %s13, 0
    %p96 = por %p94, %p95
    %p97 = scmp.ne.s32.totalorder %s89, %s91
    %p98 = scmp.eq.s32.totalorder %s18, 1
    %p99 = por %p97, %p98
    %p100 = scmp.ne.s32.totalorder %s91, %s92
    %p101 = scmp.eq.s32.totalorder %s18, 0
    %p102 = por %p100, %p101
    %p103 = scmp.ne.s32.totalorder %s91, %s92
    %p104 = scmp.eq.s32.totalorder %s19, 1
    %p105 = por %p103, %p104
    %p107 = scmp.ne.s32.totalorder %s92, %s106
    %p108 = scmp.eq.s32.totalorder %s19, 0
    %p109 = por %p107, %p108
    %s111 = sadd.s32 %s110, 1
    %p114 = scmp.eq.s32.totalorder %s13, 1
    %p115 = scmp.ne.s32.totalorder %s110, %s112
    %p116 = scmp.eq.s32.totalorder %s13, 0
    %p117 = por %p115, %p116
    %p118 = scmp.ne.s32.totalorder %s110, %s112
    %p119 = scmp.eq.s32.totalorder %s18, 1
    %p120 = por %p118, %p119
    %p121 = scmp.ne.s32.totalorder %s112, %s113
    %p122 = scmp.eq.s32.totalorder %s18, 0
    %p123 = por %p121, %p122
    %p124 = scmp.ne.s32.totalorder %s112, %s113
    %p125 = scmp.eq.s32.totalorder %s19, 1
    %p126 = por %p124, %p125
    %p128 = scmp.ne.s32.totalorder %s113, %s127
    %p129 = scmp.eq.s32.totalorder %s19, 0
    %p130 = por %p128, %p129
    %s132 = sadd.s32 %s131, 1
    %p135 = scmp.eq.s32.totalorder %s13, 1
    %p136 = scmp.ne.s32.totalorder %s131, %s133
    %p137 = scmp.eq.s32.totalorder %s13, 0
    %p138 = por %p136, %p137
    %p139 = scmp.ne.s32.totalorder %s131, %s133
    %p140 = scmp.eq.s32.totalorder %s18, 1
    %p141 = por %p139, %p140
    %p142 = scmp.ne.s32.totalorder %s133, %s134
    %p143 = scmp.eq.s32.totalorder %s18, 0
    %p144 = por %p142, %p143
    %p145 = scmp.ne.s32.totalorder %s133, %s134
    %p146 = scmp.eq.s32.totalorder %s19, 1
    %p147 = por %p145, %p146
    %p149 = scmp.ne.s32.totalorder %s134, %s148
    %p150 = scmp.eq.s32.totalorder %s19, 0
    %p151 = por %p149, %p150
    %s153 = sadd.s32 %s152, 1
    %p156 = scmp.eq.s32.totalorder %s13, 1
    %p157 = scmp.ne.s32.totalorder %s152, %s154
    %p158 = scmp.eq.s32.totalorder %s13, 0
    %p159 = por %p157, %p158
    %p160 = scmp.ne.s32.totalorder %s152, %s154
    %p161 = scmp.eq.s32.totalorder %s18, 1
    %p162 = por %p160, %p161
    %p163 = scmp.ne.s32.totalorder %s154, %s155
    %p164 = scmp.eq.s32.totalorder %s18, 0
    %p165 = por %p163, %p164
    %p166 = scmp.ne.s32.totalorder %s154, %s155
    %p167 = scmp.eq.s32.totalorder %s19, 1
    %p168 = por %p166, %p167
    %p170 = scmp.ne.s32.totalorder %s155, %s169
    %p171 = scmp.eq.s32.totalorder %s19, 0
    %p172 = por %p170, %p171
    %s173 = ssub.s32 %s13, %s20
    %p174 = scmp.eq.s32.totalorder %s173, 0
    %s176 = sadd.s32 %s175, 1
    %s177 = scalar_select %p174, %s175, %s176
    %p180 = pneg %p174
    %p181 = scmp.eq.s32.totalorder %s13, 1
    %p182 = por %p180, %p181
    %p183 = scmp.ne.s32.totalorder %s175, %s178
    %p184 = scmp.eq.s32.totalorder %s13, 0
    %p185 = por %p183, %p184
    %p186 = scmp.ne.s32.totalorder %s175, %s178
    %p187 = scmp.eq.s32.totalorder %s18, 1
    %p188 = por %p186, %p187
    %p189 = scmp.ne.s32.totalorder %s178, %s179
    %p190 = scmp.eq.s32.totalorder %s18, 0
    %p191 = por %p189, %p190
    %p192 = scmp.ne.s32.totalorder %s178, %s179
    %p193 = scmp.eq.s32.totalorder %s19, 1
    %p194 = por %p192, %p193
    %p196 = scmp.ne.s32.totalorder %s179, %s195
    %p197 = scmp.eq.s32.totalorder %s19, 0
    %p198 = por %p196, %p197
    %p199 = scmp.le.s32.totalorder 1, %s13
    %p200 = scmp.lt.s32.totalorder %s13, 3
    %p201 = pnand %p199, %p200
    %p202 = pneg %p201
    // Predicated region
    $region9: #{_mmkd_forward.3} parent=5 // pred_check
      _
    $region10: #{_mmkd_forward.3} parent=5 // pred_check_branch
      %204 = sbr.rel (%p201) target = $region12
    $region11: #{_mmkd_forward.3} parent=5 // pred_region
      %s205 = ssub.s32 %s13, 1
      // Predicated region
      $region13: #{_mmkd_forward.3} parent=11 // pred_check
        %p206 = pneg %p60
      $region14: #{_mmkd_forward.3} parent=11 // pred_check_branch
        %208 = sbr.rel (%p206) target = $region16
      $region15: #{_mmkd_forward.3} parent=11 // pred_region
        _
      $region16: #{_mmkd_forward.3} parent=11 // pred_fallthru
        _
      // Predicated region
      $region17: #{_mmkd_forward.3} parent=11 // pred_check
        %p209 = pneg %p81
      $region18: #{_mmkd_forward.3} parent=11 // pred_check_branch
        %211 = sbr.rel (%p209) target = $region20
      $region19: #{_mmkd_forward.3} parent=11 // pred_region
        _
      $region20: #{_mmkd_forward.3} parent=11 // pred_fallthru
        _
      // Predicated region
      $region21: #{_mmkd_forward.3} parent=11 // pred_check
        %p212 = pneg %p102
      $region22: #{_mmkd_forward.3} parent=11 // pred_check_branch
        %214 = sbr.rel (%p212) target = $region24
      $region23: #{_mmkd_forward.3} parent=11 // pred_region
        _
      $region24: #{_mmkd_forward.3} parent=11 // pred_fallthru
        _
      // Predicated region
      $region25: #{_mmkd_forward.3} parent=11 // pred_check
        %p215 = pneg %p123
      $region26: #{_mmkd_forward.3} parent=11 // pred_check_branch
        %217 = sbr.rel (%p215) target = $region28
      $region27: #{_mmkd_forward.3} parent=11 // pred_region
        _
      $region28: #{_mmkd_forward.3} parent=11 // pred_fallthru
        _
      // Predicated region
      $region29: #{_mmkd_forward.3} parent=11 // pred_check
        %p218 = pneg %p144
      $region30: #{_mmkd_forward.3} parent=11 // pred_check_branch
        %220 = sbr.rel (%p218) target = $region32
      $region31: #{_mmkd_forward.3} parent=11 // pred_region
        _
      $region32: #{_mmkd_forward.3} parent=11 // pred_fallthru
        _
      // Predicated region
      $region33: #{_mmkd_forward.3} parent=11 // pred_check
        %p221 = pneg %p165
      $region34: #{_mmkd_forward.3} parent=11 // pred_check_branch
        %223 = sbr.rel (%p221) target = $region36
      $region35: #{_mmkd_forward.3} parent=11 // pred_region
        _
      $region36: #{_mmkd_forward.3} parent=11 // pred_fallthru
        _
    $region12: #{_mmkd_forward.3} parent=5 // pred_fallthru
      _
    %p224 = scmp.lt.s32.totalorder %s13, 2
    // Predicated region
    $region37: #{_mmkd_forward.3} parent=5 // pred_check
      %p225 = pneg %p224
    $region38: #{_mmkd_forward.3} parent=5 // pred_check_branch
      %227 = sbr.rel (%p225) target = $region40
    $region39: #{_mmkd_forward.3} parent=5 // pred_region
      // Predicated region
      $region41: #{_mmkd_forward.3} parent=39 // pred_check
        %p228 = pneg %p33
      $region42: #{_mmkd_forward.3} parent=39 // pred_check_branch
        %230 = sbr.rel (%p228) target = $region44
      $region43: #{_mmkd_forward.3} parent=39 // pred_region
        %s231 = smul.u32 3, %s13
        %p232 = scmp.lt.s32.totalorder %s231, 5
        %s233 = scalar_select %p232, %s231, 5
        %s234 = smul.addr %s233, 8
        %s235 = scalar_lea.vmem %s0, %s234
        %s236 = smul.u32 3, %s13
      $region44: #{_mmkd_forward.3} parent=39 // pred_fallthru
        _
    $region40: #{_mmkd_forward.3} parent=5 // pred_fallthru
      _
    %p237 = scmp.le.s32.totalorder 1, %s13
    %p238 = scmp.lt.s32.totalorder %s13, 3
    %p239 = pnand %p237, %p238
    %p240 = pneg %p239
    // Predicated region
    $region45: #{_mmkd_forward.3} parent=5 // pred_check
      _
    $region46: #{_mmkd_forward.3} parent=5 // pred_check_branch
      %242 = sbr.rel (%p239) target = $region48
    $region47: #{_mmkd_forward.3} parent=5 // pred_region
      %s243 = ssub.s32 %s13, 1
      %s244 = smul.u32 3, %s18
      %p245 = scmp.lt.s32.totalorder %s244, 5
      %s246 = scalar_select %p245, %s244, 5
      %s247 = smul.addr %s246, 8
      %s248 = scalar_lea.vmem %s0, %s247
      %p249 = pneg %p39
      %p250 = pneg %p36
      %p251 = pneg %p60
      %p252 = pneg %p57
      %p253 = pneg %p81
      %p254 = pneg %p78
      %p255 = pneg %p102
      %p256 = pneg %p99
      %p257 = pneg %p123
      %p258 = pneg %p120
      %p259 = pneg %p144
      %p260 = pneg %p141
      %p261 = pneg %p165
      %p262 = pneg %p162
      %p263 = pneg %p191
      %p264 = pneg %p188
      %s265 = smul.u32 3, %s18
      %p266 = scmp.lt.s32.totalorder %s265, 5
      %s267 = scalar_select %p266, %s265, 5
      %s268 = smul.addr %s267, 8
      %s269 = scalar_lea.vmem %s7, %s268
      %s270 = smul.u32 3, %s18
      %p271 = scmp.lt.s32.totalorder %s270, 5
      %s272 = scalar_select %p271, %s270, 5
      %s273 = smul.addr %s272, 8
      %s274 = scalar_lea.vmem %s0, %s273
      %s275 = smul.u32 3, %s18
      %s276 = smul.u32 3, %s18
      %p277 = scmp.lt.s32.totalorder %s276, 5
      %s278 = scalar_select %p277, %s276, 5
      %s279 = smul.addr %s278, 8
      %s280 = scalar_lea.vmem %s7, %s279
      %s281 = smul.u32 3, %s18
      %v283 = vld [vmem:[%s274] sm:$0xff]
      %v284 = vld [vmem:[%s274 + $0x8] sm:$0xff]
      %v285 = vld [vmem:[%s274 + $0x10] sm:$0xff]
      %v286 = vpack.c.bf16 %v284, %v283
      %v287 = vpack.c.bf16 %v285, %v285
      %v288 = vld [vmem:[%s1] sm:$0xff]
      %v289 = vld [vmem:[%s1 + $0x8] sm:$0xff]
      %v290 = vld [vmem:[%s1 + $0x10] sm:$0xff]
      %v291 = vld [vmem:[%s1 + $0x18] sm:$0xff]
      %v292 = vld [vmem:[%s1 + $0x20] sm:$0xff]
      %v293 = vld [vmem:[%s1 + $0x28] sm:$0xff]
      %v294 = vld [vmem:[%s1 + $0x30] sm:$0xff]
      %v295 = vld [vmem:[%s1 + $0x38] sm:$0xff]
      %v296 = vld [vmem:[%s1 + $0x40] sm:$0xff]
      %v297 = vld [vmem:[%s1 + $0x48] sm:$0xff]
      %v298 = vld [vmem:[%s1 + $0x50] sm:$0xff]
      %v299 = vld [vmem:[%s1 + $0x58] sm:$0xff]
      %v300 = vld [vmem:[%s1 + $0x60] sm:$0xff]
      %v301 = vld [vmem:[%s1 + $0x68] sm:$0xff]
      %v302 = vld [vmem:[%s1 + $0x70] sm:$0xff]
      %v303 = vld [vmem:[%s1 + $0x78] sm:$0xff]
      %v304 = vld [vmem:[%s2] sm:$0x3]
      %v306 = vlaneseq
      %v307 = vshrl.u32 %v306, 7
      %v308 = vsub.s32 0, %v307
      %v309 = vrot.slane %v304, %v308
      %v310 = vlaneseq
      %v311 = vshrl.u32 %v310, 7
      %v312 = vsub.s32 1, %v311
      %v313 = vrot.slane %v304, %v312
      %v332 = vunpack.c.l.b16 %v288
      %v333 = vunpack.c.h.b16 %v288
      %v334 = vunpack.c.l.b16 %v289
      %v335 = vunpack.c.h.b16 %v289
      %v336 = vunpack.c.l.b16 %v290
      %v337 = vunpack.c.h.b16 %v290
      %v338 = vunpack.c.l.b16 %v291
      %v339 = vunpack.c.h.b16 %v291
      %v340 = vunpack.c.l.b16 %v292
      %v341 = vunpack.c.h.b16 %v292
      %v342 = vunpack.c.l.b16 %v293
      %v343 = vunpack.c.h.b16 %v293
      %v344 = vunpack.c.l.b16 %v294
      %v345 = vunpack.c.h.b16 %v294
      %v346 = vunpack.c.l.b16 %v295
      %v347 = vunpack.c.h.b16 %v295
      %v348 = vunpack.c.l.b16 %v296
      %v349 = vunpack.c.h.b16 %v296
      %v350 = vunpack.c.l.b16 %v297
      %v351 = vunpack.c.h.b16 %v297
      %v352 = vunpack.c.l.b16 %v298
      %v353 = vunpack.c.h.b16 %v298
      %v354 = vunpack.c.l.b16 %v299
      %v355 = vunpack.c.h.b16 %v299
      %v356 = vunpack.c.l.b16 %v300
      %v357 = vunpack.c.h.b16 %v300
      %v358 = vunpack.c.l.b16 %v301
      %v359 = vunpack.c.h.b16 %v301
      %v360 = vunpack.c.l.b16 %v302
      %v361 = vunpack.c.h.b16 %v302
      %v362 = vunpack.c.l.b16 %v303
      %v363 = vunpack.c.h.b16 %v303
      %v364 = vpack.c.b16 %v334, %v332
      %v365 = vpack.c.b16 %v335, %v333
      %v366 = vpack.c.b16 %v338, %v336
      %v367 = vpack.c.b16 %v339, %v337
      %v368 = vpack.c.b16 %v342, %v340
      %v369 = vpack.c.b16 %v343, %v341
      %v370 = vpack.c.b16 %v346, %v344
      %v371 = vpack.c.b16 %v347, %v345
      %v372 = vpack.c.b16 %v350, %v348
      %v373 = vpack.c.b16 %v351, %v349
      %v374 = vpack.c.b16 %v354, %v352
      %v375 = vpack.c.b16 %v355, %v353
      %v376 = vpack.c.b16 %v358, %v356
      %v377 = vpack.c.b16 %v359, %v357
      %v378 = vpack.c.b16 %v362, %v360
      %v379 = vpack.c.b16 %v363, %v361
      %396 = vmatprep.subr.bf16.mxu0 %v379
      %397 = vmatpush1.bf16.msra.mxu0 %v378
      %398 = vmatprep.subr.bf16.mxu0 %v377
      %399 = vmatpush1.bf16.msra.mxu0 %v376
      %400 = vmatprep.subr.bf16.mxu0 %v375
      %401 = vmatpush1.bf16.msra.mxu0 %v374
      %402 = vmatprep.subr.bf16.mxu0 %v373
      %403 = vmatpush1.bf16.msra.mxu0 %v372
      %404 = vmatprep.subr.bf16.mxu0 %v371
      %405 = vmatpush1.bf16.msra.mxu0 %v370
      %406 = vmatprep.subr.bf16.mxu0 %v369
      %407 = vmatpush1.bf16.msra.mxu0 %v368
      %408 = vmatprep.subr.bf16.mxu0 %v367
      %409 = vmatpush1.bf16.msra.mxu0 %v366
      %410 = vmatprep.subr.bf16.mxu0 %v365
      %411 = vmatpush1.bf16.msra.mxu0 %v364
      %412 = vmatprep.subr.bf16.mxu0 0
      %413 = vmatpush2.bf16.msra.mxu0 0
      %414 = vmatprep.subr.bf16.mxu0 0
      %415 = vmatpush2.bf16.msra.mxu0 0
      %416 = vmatprep.subr.bf16.mxu0 0
      %417 = vmatpush2.bf16.msra.mxu0 0
      %418 = vmatprep.subr.bf16.mxu0 0
      %419 = vmatpush2.bf16.msra.mxu0 0
      %420 = vmatprep.subr.bf16.mxu0 0
      %421 = vmatpush2.bf16.msra.mxu0 0
      %422 = vmatprep.subr.bf16.mxu0 0
      %423 = vmatpush2.bf16.msra.mxu0 0
      %424 = vmatprep.subr.bf16.mxu0 0
      %425 = vmatpush2.bf16.msra.mxu0 0
      %426 = vmatprep.subr.bf16.mxu0 0
      %427 = vmatpush2.bf16.msra.mxu0 0
      %428 = vmatprep.mubr.bf16.mxu0 0
      %429 = vmatmul.mubr.bf16.gmra.mxu0 %v286
      %v430 = vpop.f32.mrf.mxu0
      %v431 = vadd.f32 %v309, %v430
      %v432 = vpop.f32.mrf.mxu0
      %v433 = vadd.f32 %v313, %v432
      %v434 = vpop.f32.mrf.mxu0
      %v435 = vadd.f32 %v309, %v434
      %v436 = vpop.f32.mrf.mxu0
      %v437 = vadd.f32 %v313, %v436
      %438 = vmatprep.mubr.bf16.mxu0 0
      %439 = vmatmul.mubr.bf16.gmra.mxu0 %v287
      %v440 = vpop.f32.mrf.mxu0
      %v441 = vadd.f32 %v309, %v440
      %v442 = vpop.f32.mrf.mxu0
      %v443 = vadd.f32 %v313, %v442
      %v444 = vpop.f32.mrf.mxu0
      %v445 = vpop.f32.mrf.mxu0
      %446 = vdwg.mxu0
      %v447 = vmul.f32 %v431, %v431
      %v448 = vmul.f32 %v433, %v433
      %v449 = vmul.f32 %v435, %v435
      %v450 = vmul.f32 %v437, %v437
      %v451 = vmul.f32 %v441, %v441
      %v452 = vmul.f32 %v443, %v443
      %v453 = vmul.f32 %v431, %v447
      %v454 = vmul.f32 %v433, %v448
      %v455 = vmul.f32 %v435, %v449
      %v456 = vmul.f32 %v437, %v450
      %v457 = vmul.f32 %v441, %v451
      %v458 = vmul.f32 %v443, %v452
      %v459 = vmul.f32 %v453, 0.044715
      %v460 = vmul.f32 %v454, 0.044715
      %v461 = vmul.f32 %v455, 0.044715
      %v462 = vmul.f32 %v456, 0.044715
      %v463 = vmul.f32 %v457, 0.044715
      %v464 = vmul.f32 %v458, 0.044715
      %v465 = vadd.f32 %v431, %v459
      %v466 = vadd.f32 %v433, %v460
      %v467 = vadd.f32 %v435, %v461
      %v468 = vadd.f32 %v437, %v462
      %v469 = vadd.f32 %v441, %v463
      %v470 = vadd.f32 %v443, %v464
      %v471 = vmul.f32 %v465, 0.7978846
      %v472 = vmul.f32 %v466, 0.7978846
      %v473 = vmul.f32 %v467, 0.7978846
      %v474 = vmul.f32 %v468, 0.7978846
      %v475 = vmul.f32 %v469, 0.7978846
      %v476 = vmul.f32 %v470, 0.7978846
      %v477 = vtanh.pop %v471
      %v478 = vtanh.pop %v472
      %v479 = vtanh.pop %v473
      %v480 = vtanh.pop %v474
      %v481 = vtanh.pop %v475
      %v482 = vtanh.pop %v476
      %v483 = vadd.f32 %v477, 1.0
      %v484 = vadd.f32 %v478, 1.0
      %v485 = vadd.f32 %v479, 1.0
      %v486 = vadd.f32 %v480, 1.0
      %v487 = vadd.f32 %v481, 1.0
      %v488 = vadd.f32 %v482, 1.0
      %v489 = vmul.f32 %v483, 0.5
      %v490 = vmul.f32 %v484, 0.5
      %v491 = vmul.f32 %v485, 0.5
      %v492 = vmul.f32 %v486, 0.5
      %v493 = vmul.f32 %v487, 0.5
      %v494 = vmul.f32 %v488, 0.5
      %v495 = vmul.f32 %v431, %v489
      %v496 = vmul.f32 %v433, %v490
      %v497 = vmul.f32 %v435, %v491
      %v498 = vmul.f32 %v437, %v492
      %v499 = vmul.f32 %v441, %v493
      %v500 = vmul.f32 %v443, %v494
      %v501 = vpack.c.bf16 %v497, %v495
      %v502 = vpack.c.bf16 %v498, %v496
      %v503 = vpack.c.bf16 %v499, %v499
      %v504 = vpack.c.bf16 %v500, %v500
      %v505 = vld [vmem:[%s3] sm:$0xf]
      %v506 = vld [vmem:[%s3 + $0x4] sm:$0xf]
      %v507 = vld [vmem:[%s3 + $0x8] sm:$0xf]
      %v508 = vld [vmem:[%s3 + $0xc] sm:$0xf]
      %v509 = vld [vmem:[%s3 + $0x10] sm:$0xf]
      %v510 = vld [vmem:[%s3 + $0x14] sm:$0xf]
      %v511 = vld [vmem:[%s3 + $0x18] sm:$0xf]
      %v512 = vld [vmem:[%s3 + $0x1c] sm:$0xf]
      %v513 = vld [vmem:[%s3 + $0x20] sm:$0xf]
      %v514 = vld [vmem:[%s3 + $0x24] sm:$0xf]
      %v515 = vld [vmem:[%s3 + $0x28] sm:$0xf]
      %v516 = vld [vmem:[%s3 + $0x2c] sm:$0xf]
      %v517 = vld [vmem:[%s3 + $0x30] sm:$0xf]
      %v518 = vld [vmem:[%s3 + $0x34] sm:$0xf]
      %v519 = vld [vmem:[%s3 + $0x38] sm:$0xf]
      %v520 = vld [vmem:[%s3 + $0x3c] sm:$0xf]
      %v521 = vld [vmem:[%s3 + $0x40] sm:$0xf]
      %v522 = vld [vmem:[%s3 + $0x44] sm:$0xf]
      %v523 = vld [vmem:[%s3 + $0x48] sm:$0xf]
      %v524 = vld [vmem:[%s3 + $0x4c] sm:$0xf]
      %v525 = vld [vmem:[%s3 + $0x50] sm:$0xf]
      %v526 = vld [vmem:[%s3 + $0x54] sm:$0xf]
      %v527 = vld [vmem:[%s3 + $0x58] sm:$0xf]
      %v528 = vld [vmem:[%s3 + $0x5c] sm:$0xf]
      %v529 = vld [vmem:[%s3 + $0x60] sm:$0xf]
      %v530 = vld [vmem:[%s3 + $0x64] sm:$0xf]
      %v531 = vld [vmem:[%s3 + $0x68] sm:$0xf]
      %v532 = vld [vmem:[%s3 + $0x6c] sm:$0xf]
      %v533 = vld [vmem:[%s3 + $0x70] sm:$0xf]
      %v534 = vld [vmem:[%s3 + $0x74] sm:$0xf]
      %v535 = vld [vmem:[%s3 + $0x78] sm:$0xf]
      %v536 = vld [vmem:[%s3 + $0x7c] sm:$0xf]
      %v537 = vld [vmem:[%s4] sm:$0x1]
      %v539 = vlaneseq
      %v540 = vshrl.u32 %v539, 7
      %v541 = vsub.s32 0, %v540
      %v542 = vrot.slane %v537, %v541
      %v576 = vunpack.c.l.b16 %v505
      %v577 = vunpack.c.l.b16 %v506
      %v578 = vunpack.c.l.b16 %v507
      %v579 = vunpack.c.l.b16 %v508
      %v580 = vunpack.c.l.b16 %v509
      %v581 = vunpack.c.l.b16 %v510
      %v582 = vunpack.c.l.b16 %v511
      %v583 = vunpack.c.l.b16 %v512
      %v584 = vunpack.c.l.b16 %v513
      %v585 = vunpack.c.l.b16 %v514
      %v586 = vunpack.c.l.b16 %v515
      %v587 = vunpack.c.l.b16 %v516
      %v588 = vunpack.c.l.b16 %v517
      %v589 = vunpack.c.l.b16 %v518
      %v590 = vunpack.c.l.b16 %v519
      %v591 = vunpack.c.l.b16 %v520
      %v592 = vunpack.c.l.b16 %v521
      %v593 = vunpack.c.l.b16 %v522
      %v594 = vunpack.c.l.b16 %v523
      %v595 = vunpack.c.l.b16 %v524
      %v596 = vunpack.c.l.b16 %v525
      %v597 = vunpack.c.l.b16 %v526
      %v598 = vunpack.c.l.b16 %v527
      %v599 = vunpack.c.l.b16 %v528
      %v600 = vunpack.c.l.b16 %v529
      %v601 = vunpack.c.l.b16 %v530
      %v602 = vunpack.c.l.b16 %v531
      %v603 = vunpack.c.l.b16 %v532
      %v604 = vunpack.c.l.b16 %v533
      %v605 = vunpack.c.l.b16 %v534
      %v606 = vunpack.c.l.b16 %v535
      %v607 = vunpack.c.l.b16 %v536
      %v608 = vpack.c.b16 %v577, %v576
      %v609 = vpack.c.b16 %v579, %v578
      %v610 = vpack.c.b16 %v581, %v580
      %v611 = vpack.c.b16 %v583, %v582
      %v612 = vpack.c.b16 %v585, %v584
      %v613 = vpack.c.b16 %v587, %v586
      %v614 = vpack.c.b16 %v589, %v588
      %v615 = vpack.c.b16 %v591, %v590
      %v616 = vpack.c.b16 %v593, %v592
      %v617 = vpack.c.b16 %v595, %v594
      %v618 = vpack.c.b16 %v597, %v596
      %v619 = vpack.c.b16 %v599, %v598
      %v620 = vpack.c.b16 %v601, %v600
      %v621 = vpack.c.b16 %v603, %v602
      %v622 = vpack.c.b16 %v605, %v604
      %v623 = vpack.c.b16 %v607, %v606
      %640 = vmatprep.subr.bf16.mxu0 0
      %641 = vmatpush1.bf16.msra.mxu0 %v615
      %642 = vmatprep.subr.bf16.mxu0 0
      %643 = vmatpush1.bf16.msra.mxu0 %v614
      %644 = vmatprep.subr.bf16.mxu0 0
      %645 = vmatpush1.bf16.msra.mxu0 %v613
      %646 = vmatprep.subr.bf16.mxu0 0
      %647 = vmatpush1.bf16.msra.mxu0 %v612
      %648 = vmatprep.subr.bf16.mxu0 0
      %649 = vmatpush1.bf16.msra.mxu0 %v611
      %650 = vmatprep.subr.bf16.mxu0 0
      %651 = vmatpush1.bf16.msra.mxu0 %v610
      %652 = vmatprep.subr.bf16.mxu0 0
      %653 = vmatpush1.bf16.msra.mxu0 %v609
      %654 = vmatprep.subr.bf16.mxu0 0
      %655 = vmatpush1.bf16.msra.mxu0 %v608
      %656 = vmatprep.subr.bf16.mxu0 0
      %657 = vmatpush2.bf16.msra.mxu0 %v623
      %658 = vmatprep.subr.bf16.mxu0 0
      %659 = vmatpush2.bf16.msra.mxu0 %v622
      %660 = vmatprep.subr.bf16.mxu0 0
      %661 = vmatpush2.bf16.msra.mxu0 %v621
      %662 = vmatprep.subr.bf16.mxu0 0
      %663 = vmatpush2.bf16.msra.mxu0 %v620
      %664 = vmatprep.subr.bf16.mxu0 0
      %665 = vmatpush2.bf16.msra.mxu0 %v619
      %666 = vmatprep.subr.bf16.mxu0 0
      %667 = vmatpush2.bf16.msra.mxu0 %v618
      %668 = vmatprep.subr.bf16.mxu0 0
      %669 = vmatpush2.bf16.msra.mxu0 %v617
      %670 = vmatprep.subr.bf16.mxu0 0
      %671 = vmatpush2.bf16.msra.mxu0 %v616
      %672 = vmatprep.mubr.bf16.mxu0 %v502
      %673 = vmatmul.mubr.bf16.gmra.mxu0 %v501
      %v674 = vpop.f32.mrf.mxu0
      %v675 = vadd.f32 %v542, %v674
      %v676 = vpop.f32.mrf.mxu0
      %v677 = vpop.f32.mrf.mxu0
      %v678 = vadd.f32 %v542, %v677
      %v679 = vpop.f32.mrf.mxu0
      %680 = vmatprep.mubr.bf16.mxu0 %v504
      %681 = vmatmul.mubr.bf16.gmra.mxu0 %v503
      %v682 = vpop.f32.mrf.mxu0
      %v683 = vadd.f32 %v542, %v682
      %v684 = vpop.f32.mrf.mxu0
      %v685 = vpop.f32.mrf.mxu0
      %v686 = vpop.f32.mrf.mxu0
      %687 = vdwg.mxu0
      %v688 = vadd.f32 %v283, %v675
      %v689 = vadd.f32 %v284, %v678
      %v690 = vadd.f32 %v285, %v683
      %691 = vadd.xlane.f32.xlu0 %v688
      %v692 = vpop.xlane.xlu0 %691
      %693 = vadd.xlane.f32.xlu0 %v689
      %v694 = vpop.xlane.xlu0 %693
      %695 = vadd.xlane.f32.xlu0 %v690
      %v696 = vpop.xlane.xlu0 %695
      %v697 = vrcp.pop 128.0
      %v698 = vmul.f32 %v692, %v697
      %v699 = vmul.f32 %v694, %v697
      %v700 = vmul.f32 %v696, %v697
      %v701 = vsub.f32 %v688, %v698
      %v702 = vsub.f32 %v689, %v699
      %v703 = vsub.f32 %v690, %v700
      %v704 = vmul.f32 %v701, %v701
      %v705 = vmul.f32 %v702, %v702
      %v706 = vmul.f32 %v703, %v703
      %707 = vadd.xlane.f32.xlu0 %v704
      %v708 = vpop.xlane.xlu0 %707
      %709 = vadd.xlane.f32.xlu0 %v705
      %v710 = vpop.xlane.xlu0 %709
      %711 = vadd.xlane.f32.xlu0 %v706
      %v712 = vpop.xlane.xlu0 %711
      %v713 = vmul.f32 %v708, %v697
      %v714 = vmul.f32 %v710, %v697
      %v715 = vmul.f32 %v712, %v697
      %v716 = vadd.f32 %v713, 1e-12
      %v717 = vadd.f32 %v714, 1e-12
      %v718 = vadd.f32 %v715, 1e-12
      %v719 = vrsqrt.pop %v716
      %v720 = vrsqrt.pop %v717
      %v721 = vrsqrt.pop %v718
      %v722 = vmul.f32 %v701, %v719
      %v723 = vmul.f32 %v702, %v720
      %v724 = vmul.f32 %v703, %v721
      %v725 = vld [vmem:[%s5] sm:$0x1]
      %v727 = vlaneseq
      %v728 = vshrl.u32 %v727, 7
      %v729 = vsub.s32 0, %v728
      %v730 = vrot.slane %v725, %v729
      %v732 = vmul.f32 %v722, %v730
      %v733 = vmul.f32 %v723, %v730
      %v734 = vmul.f32 %v724, %v730
      %v735 = vld [vmem:[%s6] sm:$0x1]
      %v737 = vlaneseq
      %v738 = vshrl.u32 %v737, 7
      %v739 = vsub.s32 0, %v738
      %v740 = vrot.slane %v735, %v739
      %v742 = vadd.f32 %v732, %v740
      %v743 = vadd.f32 %v733, %v740
      %v744 = vadd.f32 %v734, %v740
      %745 = vst [vmem:[%s280] sm:$0xff] %v742
      %746 = vst [vmem:[%s280 + $0x8] sm:$0xff] %v743
      %747 = vst [vmem:[%s280 + $0x10] sm:$0xff] %v744
      %s748 = smul.u32 3, %s18
      %p749 = scmp.lt.s32.totalorder %s748, 5
      %s750 = scalar_select %p749, %s748, 5
      %s751 = smul.addr %s750, 8
      %s752 = scalar_lea.vmem %s7, %s751
      // Predicated region
      $region49: #{_mmkd_forward.3} parent=47 // pred_check
        %p753 = pneg %p188
      $region50: #{_mmkd_forward.3} parent=47 // pred_check_branch
        %755 = sbr.rel (%p753) target = $region52
      $region51: #{_mmkd_forward.3} parent=47 // pred_region
        %s756 = smul.u32 3, %s18
      $region52: #{_mmkd_forward.3} parent=47 // pred_fallthru
        _
    $region48: #{_mmkd_forward.3} parent=5 // pred_fallthru
      _
    %p757 = scmp.le.s32.totalorder 2, %s13
    // Predicated region
    $region53: #{_mmkd_forward.3} parent=5 // pred_check
      %p758 = pneg %p757
    $region54: #{_mmkd_forward.3} parent=5 // pred_check_branch
      %760 = sbr.rel (%p758) target = $region56
    $region55: #{_mmkd_forward.3} parent=5 // pred_region
      %s761 = ssub.s32 %s13, 2
      // Predicated region
      $region57: #{_mmkd_forward.3} parent=55 // pred_check
        %p762 = pneg %p194
      $region58: #{_mmkd_forward.3} parent=55 // pred_check_branch
        %764 = sbr.rel (%p762) target = $region60
      $region59: #{_mmkd_forward.3} parent=55 // pred_region
        %s765 = smul.u32 3, %s19
        %p766 = scmp.lt.s32.totalorder %s765, 5
        %s767 = scalar_select %p766, %s765, 5
        %s768 = smul.addr %s767, 8
        %s769 = scalar_lea.vmem %s7, %s768
      $region60: #{_mmkd_forward.3} parent=55 // pred_fallthru
        _
    $region56: #{_mmkd_forward.3} parent=5 // pred_fallthru
      _
  $region6: #{_mmkd_forward.3} parent=0 // loop_footer
    %s17 = sadd.s32 1, %s13
  $region7: #{_mmkd_forward.3} parent=0 // loop_footer_branch
    %12 = sbr.rel target = $region3
  $region8: #{_mmkd_forward.3} parent=0 // loop_exit
    _

// kernel: _mmkd_forward.4
$region0: #{_mmkd_forward.4}
  #allocation0 [shape = 'u32[]', space=smem, size = 0x4, offset = 0x4, fixed_abs, tag = 'smem constant byte address 0x4 - core index']
  #allocation1 [shape = 'u32[144,128]{1,0:T(1,128)}', space=vmem, size = 0x12000, scoped, tag = 'internal scratch']
  %s0 = inlined_call_operand.vmem [shape: f32[32,128], index: 0, kind: input, shape index: {}]
  %s1 = inlined_call_operand.vmem [shape: bf16[128,256], index: 1, kind: input, shape index: {}]
  %s2 = inlined_call_operand.vmem [shape: f32[1,256], index: 2, kind: input, shape index: {}]
  %s3 = inlined_call_operand.vmem [shape: bf16[256,128], index: 3, kind: input, shape index: {}]
  %s4 = inlined_call_operand.vmem [shape: f32[1,128], index: 4, kind: input, shape index: {}]
  %s5 = inlined_call_operand.vmem [shape: f32[1,128], index: 5, kind: input, shape index: {}]
  %s6 = inlined_call_operand.vmem [shape: f32[1,128], index: 6, kind: input, shape index: {}]
  %s7 = inlined_call_operand.vmem [shape: f32[32,128], index: 7, kind: output, shape index: {}]
  %s8 = sld [smem:[#allocation0]]
  $region61: #{_mmkd_forward.4} parent=0
    _
  %s10 = ssub.s32 1, %s8
  %s11 = scalar_select 0, %s10, %s8
  loop: start=0, step=1, limit=4
  $region2: #{_mmkd_forward.4} parent=0 // loop_pre_header
    _
  $region3: #{_mmkd_forward.4} parent=0 // loop_header
    %s13 = sphi 0, %s17
    %p14 = scmp.ge.s32.totalorder %s13, 4
    %s23 = sphi 0, %s25
    %s26 = sphi 0, %s23
    %s27 = sphi 0, %s26
    %s43 = sphi 0, %s27
    %s47 = sphi 0, %s47
    %s49 = sphi 0, %s47
    %s50 = sphi 0, %s49
    %s64 = sphi 0, %s50
    %s68 = sphi 0, %s68
    %s70 = sphi 0, %s68
    %s71 = sphi 0, %s70
    %s85 = sphi 0, %s71
    %s89 = sphi 0, %s89
    %s91 = sphi 0, %s89
    %s92 = sphi 0, %s91
    %s106 = sphi 0, %s92
    %s110 = sphi 0, %s110
    %s112 = sphi 0, %s110
    %s113 = sphi 0, %s112
    %s127 = sphi 0, %s113
    %s131 = sphi 0, %s131
    %s133 = sphi 0, %s131
    %s134 = sphi 0, %s133
    %s148 = sphi 0, %s134
    %s152 = sphi 0, %s152
    %s154 = sphi 0, %s152
    %s155 = sphi 0, %s154
    %s169 = sphi 0, %s155
    %s175 = sphi 0, %s177
    %s178 = sphi 0, %s175
    %s179 = sphi 0, %s178
    %s195 = sphi 0, %s179
  $region4: #{_mmkd_forward.4} parent=0 // loop_header_branch
    %16 = sbr.rel (%p14) target = $region8
  $region5: #{_mmkd_forward.4} parent=0 // loop_body
    %s18 = ssub.s32 %s13, 1
    %s19 = ssub.s32 %s13, 2
    %s20 = sadd.s32 %s13, 1
    %s21 = ssub.s32 %s13, %s20
    %p22 = scmp.eq.s32.totalorder %s21, 0
    %s24 = sadd.s32 %s23, 1
    %s25 = scalar_select %p22, %s23, %s24
    %p28 = pneg %p22
    %p29 = scmp.eq.s32.totalorder %s13, 1
    %p30 = por %p28, %p29
    %p31 = scmp.ne.s32.totalorder %s23, %s26
    %p32 = scmp.eq.s32.totalorder %s13, 0
    %p33 = por %p31, %p32
    %p34 = scmp.ne.s32.totalorder %s23, %s26
    %p35 = scmp.eq.s32.totalorder %s18, 1
    %p36 = por %p34, %p35
    %p37 = scmp.ne.s32.totalorder %s26, %s27
    %p38 = scmp.eq.s32.totalorder %s18, 0
    %p39 = por %p37, %p38
    %p40 = scmp.ne.s32.totalorder %s26, %s27
    %p41 = scmp.eq.s32.totalorder %s19, 1
    %p42 = por %p40, %p41
    %p44 = scmp.ne.s32.totalorder %s27, %s43
    %p45 = scmp.eq.s32.totalorder %s19, 0
    %p46 = por %p44, %p45
    %s48 = sadd.s32 %s47, 1
    %p51 = scmp.eq.s32.totalorder %s13, 1
    %p52 = scmp.ne.s32.totalorder %s47, %s49
    %p53 = scmp.eq.s32.totalorder %s13, 0
    %p54 = por %p52, %p53
    %p55 = scmp.ne.s32.totalorder %s47, %s49
    %p56 = scmp.eq.s32.totalorder %s18, 1
    %p57 = por %p55, %p56
    %p58 = scmp.ne.s32.totalorder %s49, %s50
    %p59 = scmp.eq.s32.totalorder %s18, 0
    %p60 = por %p58, %p59
    %p61 = scmp.ne.s32.totalorder %s49, %s50
    %p62 = scmp.eq.s32.totalorder %s19, 1
    %p63 = por %p61, %p62
    %p65 = scmp.ne.s32.totalorder %s50, %s64
    %p66 = scmp.eq.s32.totalorder %s19, 0
    %p67 = por %p65, %p66
    %s69 = sadd.s32 %s68, 1
    %p72 = scmp.eq.s32.totalorder %s13, 1
    %p73 = scmp.ne.s32.totalorder %s68, %s70
    %p74 = scmp.eq.s32.totalorder %s13, 0
    %p75 = por %p73, %p74
    %p76 = scmp.ne.s32.totalorder %s68, %s70
    %p77 = scmp.eq.s32.totalorder %s18, 1
    %p78 = por %p76, %p77
    %p79 = scmp.ne.s32.totalorder %s70, %s71
    %p80 = scmp.eq.s32.totalorder %s18, 0
    %p81 = por %p79, %p80
    %p82 = scmp.ne.s32.totalorder %s70, %s71
    %p83 = scmp.eq.s32.totalorder %s19, 1
    %p84 = por %p82, %p83
    %p86 = scmp.ne.s32.totalorder %s71, %s85
    %p87 = scmp.eq.s32.totalorder %s19, 0
    %p88 = por %p86, %p87
    %s90 = sadd.s32 %s89, 1
    %p93 = scmp.eq.s32.totalorder %s13, 1
    %p94 = scmp.ne.s32.totalorder %s89, %s91
    %p95 = scmp.eq.s32.totalorder %s13, 0
    %p96 = por %p94, %p95
    %p97 = scmp.ne.s32.totalorder %s89, %s91
    %p98 = scmp.eq.s32.totalorder %s18, 1
    %p99 = por %p97, %p98
    %p100 = scmp.ne.s32.totalorder %s91, %s92
    %p101 = scmp.eq.s32.totalorder %s18, 0
    %p102 = por %p100, %p101
    %p103 = scmp.ne.s32.totalorder %s91, %s92
    %p104 = scmp.eq.s32.totalorder %s19, 1
    %p105 = por %p103, %p104
    %p107 = scmp.ne.s32.totalorder %s92, %s106
    %p108 = scmp.eq.s32.totalorder %s19, 0
    %p109 = por %p107, %p108
    %s111 = sadd.s32 %s110, 1
    %p114 = scmp.eq.s32.totalorder %s13, 1
    %p115 = scmp.ne.s32.totalorder %s110, %s112
    %p116 = scmp.eq.s32.totalorder %s13, 0
    %p117 = por %p115, %p116
    %p118 = scmp.ne.s32.totalorder %s110, %s112
    %p119 = scmp.eq.s32.totalorder %s18, 1
    %p120 = por %p118, %p119
    %p121 = scmp.ne.s32.totalorder %s112, %s113
    %p122 = scmp.eq.s32.totalorder %s18, 0
    %p123 = por %p121, %p122
    %p124 = scmp.ne.s32.totalorder %s112, %s113
    %p125 = scmp.eq.s32.totalorder %s19, 1
    %p126 = por %p124, %p125
    %p128 = scmp.ne.s32.totalorder %s113, %s127
    %p129 = scmp.eq.s32.totalorder %s19, 0
    %p130 = por %p128, %p129
    %s132 = sadd.s32 %s131, 1
    %p135 = scmp.eq.s32.totalorder %s13, 1
    %p136 = scmp.ne.s32.totalorder %s131, %s133
    %p137 = scmp.eq.s32.totalorder %s13, 0
    %p138 = por %p136, %p137
    %p139 = scmp.ne.s32.totalorder %s131, %s133
    %p140 = scmp.eq.s32.totalorder %s18, 1
    %p141 = por %p139, %p140
    %p142 = scmp.ne.s32.totalorder %s133, %s134
    %p143 = scmp.eq.s32.totalorder %s18, 0
    %p144 = por %p142, %p143
    %p145 = scmp.ne.s32.totalorder %s133, %s134
    %p146 = scmp.eq.s32.totalorder %s19, 1
    %p147 = por %p145, %p146
    %p149 = scmp.ne.s32.totalorder %s134, %s148
    %p150 = scmp.eq.s32.totalorder %s19, 0
    %p151 = por %p149, %p150
    %s153 = sadd.s32 %s152, 1
    %p156 = scmp.eq.s32.totalorder %s13, 1
    %p157 = scmp.ne.s32.totalorder %s152, %s154
    %p158 = scmp.eq.s32.totalorder %s13, 0
    %p159 = por %p157, %p158
    %p160 = scmp.ne.s32.totalorder %s152, %s154
    %p161 = scmp.eq.s32.totalorder %s18, 1
    %p162 = por %p160, %p161
    %p163 = scmp.ne.s32.totalorder %s154, %s155
    %p164 = scmp.eq.s32.totalorder %s18, 0
    %p165 = por %p163, %p164
    %p166 = scmp.ne.s32.totalorder %s154, %s155
    %p167 = scmp.eq.s32.totalorder %s19, 1
    %p168 = por %p166, %p167
    %p170 = scmp.ne.s32.totalorder %s155, %s169
    %p171 = scmp.eq.s32.totalorder %s19, 0
    %p172 = por %p170, %p171
    %s173 = ssub.s32 %s13, %s20
    %p174 = scmp.eq.s32.totalorder %s173, 0
    %s176 = sadd.s32 %s175, 1
    %s177 = scalar_select %p174, %s175, %s176
    %p180 = pneg %p174
    %p181 = scmp.eq.s32.totalorder %s13, 1
    %p182 = por %p180, %p181
    %p183 = scmp.ne.s32.totalorder %s175, %s178
    %p184 = scmp.eq.s32.totalorder %s13, 0
    %p185 = por %p183, %p184
    %p186 = scmp.ne.s32.totalorder %s175, %s178
    %p187 = scmp.eq.s32.totalorder %s18, 1
    %p188 = por %p186, %p187
    %p189 = scmp.ne.s32.totalorder %s178, %s179
    %p190 = scmp.eq.s32.totalorder %s18, 0
    %p191 = por %p189, %p190
    %p192 = scmp.ne.s32.totalorder %s178, %s179
    %p193 = scmp.eq.s32.totalorder %s19, 1
    %p194 = por %p192, %p193
    %p196 = scmp.ne.s32.totalorder %s179, %s195
    %p197 = scmp.eq.s32.totalorder %s19, 0
    %p198 = por %p196, %p197
    %p199 = scmp.le.s32.totalorder 1, %s13
    %p200 = scmp.lt.s32.totalorder %s13, 3
    %p201 = pnand %p199, %p200
    %p202 = pneg %p201
    // Predicated region
    $region9: #{_mmkd_forward.4} parent=5 // pred_check
      _
    $region10: #{_mmkd_forward.4} parent=5 // pred_check_branch
      %204 = sbr.rel (%p201) target = $region12
    $region11: #{_mmkd_forward.4} parent=5 // pred_region
      %s205 = ssub.s32 %s13, 1
      // Predicated region
      $region13: #{_mmkd_forward.4} parent=11 // pred_check
        %p206 = pneg %p60
      $region14: #{_mmkd_forward.4} parent=11 // pred_check_branch
        %208 = sbr.rel (%p206) target = $region16
      $region15: #{_mmkd_forward.4} parent=11 // pred_region
        _
      $region16: #{_mmkd_forward.4} parent=11 // pred_fallthru
        _
      // Predicated region
      $region17: #{_mmkd_forward.4} parent=11 // pred_check
        %p209 = pneg %p81
      $region18: #{_mmkd_forward.4} parent=11 // pred_check_branch
        %211 = sbr.rel (%p209) target = $region20
      $region19: #{_mmkd_forward.4} parent=11 // pred_region
        _
      $region20: #{_mmkd_forward.4} parent=11 // pred_fallthru
        _
      // Predicated region
      $region21: #{_mmkd_forward.4} parent=11 // pred_check
        %p212 = pneg %p102
      $region22: #{_mmkd_forward.4} parent=11 // pred_check_branch
        %214 = sbr.rel (%p212) target = $region24
      $region23: #{_mmkd_forward.4} parent=11 // pred_region
        _
      $region24: #{_mmkd_forward.4} parent=11 // pred_fallthru
        _
      // Predicated region
      $region25: #{_mmkd_forward.4} parent=11 // pred_check
        %p215 = pneg %p123
      $region26: #{_mmkd_forward.4} parent=11 // pred_check_branch
        %217 = sbr.rel (%p215) target = $region28
      $region27: #{_mmkd_forward.4} parent=11 // pred_region
        _
      $region28: #{_mmkd_forward.4} parent=11 // pred_fallthru
        _
      // Predicated region
      $region29: #{_mmkd_forward.4} parent=11 // pred_check
        %p218 = pneg %p144
      $region30: #{_mmkd_forward.4} parent=11 // pred_check_branch
        %220 = sbr.rel (%p218) target = $region32
      $region31: #{_mmkd_forward.4} parent=11 // pred_region
        _
      $region32: #{_mmkd_forward.4} parent=11 // pred_fallthru
        _
      // Predicated region
      $region33: #{_mmkd_forward.4} parent=11 // pred_check
        %p221 = pneg %p165
      $region34: #{_mmkd_forward.4} parent=11 // pred_check_branch
        %223 = sbr.rel (%p221) target = $region36
      $region35: #{_mmkd_forward.4} parent=11 // pred_region
        _
      $region36: #{_mmkd_forward.4} parent=11 // pred_fallthru
        _
    $region12: #{_mmkd_forward.4} parent=5 // pred_fallthru
      _
    %p224 = scmp.lt.s32.totalorder %s13, 2
    // Predicated region
    $region37: #{_mmkd_forward.4} parent=5 // pred_check
      %p225 = pneg %p224
    $region38: #{_mmkd_forward.4} parent=5 // pred_check_branch
      %227 = sbr.rel (%p225) target = $region40
    $region39: #{_mmkd_forward.4} parent=5 // pred_region
      // Predicated region
      $region41: #{_mmkd_forward.4} parent=39 // pred_check
        %p228 = pneg %p33
      $region42: #{_mmkd_forward.4} parent=39 // pred_check_branch
        %230 = sbr.rel (%p228) target = $region44
      $region43: #{_mmkd_forward.4} parent=39 // pred_region
        %s231 = smul.u32 2, %s13
        %p232 = scmp.lt.s32.totalorder %s231, 3
        %s233 = scalar_select %p232, %s231, 3
        %s234 = smul.addr %s233, 8
        %s235 = scalar_lea.vmem %s0, %s234
        %s236 = smul.u32 2, %s13
      $region44: #{_mmkd_forward.4} parent=39 // pred_fallthru
        _
    $region40: #{_mmkd_forward.4} parent=5 // pred_fallthru
      _
    %p237 = scmp.le.s32.totalorder 1, %s13
    %p238 = scmp.lt.s32.totalorder %s13, 3
    %p239 = pnand %p237, %p238
    %p240 = pneg %p239
    // Predicated region
    $region45: #{_mmkd_forward.4} parent=5 // pred_check
      _
    $region46: #{_mmkd_forward.4} parent=5 // pred_check_branch
      %242 = sbr.rel (%p239) target = $region48
    $region47: #{_mmkd_forward.4} parent=5 // pred_region
      %s243 = ssub.s32 %s13, 1
      %s244 = smul.u32 2, %s18
      %p245 = scmp.lt.s32.totalorder %s244, 3
      %s246 = scalar_select %p245, %s244, 3
      %s247 = smul.addr %s246, 8
      %s248 = scalar_lea.vmem %s0, %s247
      %p249 = pneg %p39
      %p250 = pneg %p36
      %p251 = pneg %p60
      %p252 = pneg %p57
      %p253 = pneg %p81
      %p254 = pneg %p78
      %p255 = pneg %p102
      %p256 = pneg %p99
      %p257 = pneg %p123
      %p258 = pneg %p120
      %p259 = pneg %p144
      %p260 = pneg %p141
      %p261 = pneg %p165
      %p262 = pneg %p162
      %p263 = pneg %p191
      %p264 = pneg %p188
      %s265 = smul.u32 2, %s18
      %p266 = scmp.lt.s32.totalorder %s265, 3
      %s267 = scalar_select %p266, %s265, 3
      %s268 = smul.addr %s267, 8
      %s269 = scalar_lea.vmem %s7, %s268
      %s270 = smul.u32 2, %s18
      %p271 = scmp.lt.s32.totalorder %s270, 3
      %s272 = scalar_select %p271, %s270, 3
      %s273 = smul.addr %s272, 8
      %s274 = scalar_lea.vmem %s0, %s273
      %s275 = smul.u32 2, %s18
      %s276 = smul.u32 2, %s18
      %p277 = scmp.lt.s32.totalorder %s276, 3
      %s278 = scalar_select %p277, %s276, 3
      %s279 = smul.addr %s278, 8
      %s280 = scalar_lea.vmem %s7, %s279
      %s281 = smul.u32 2, %s18
      %v283 = vld [vmem:[%s274] sm:$0xff]
      %v284 = vld [vmem:[%s274 + $0x8] sm:$0xff]
      %v285 = vpack.c.bf16 %v284, %v283
      %v286 = vld [vmem:[%s1] sm:$0xff]
      %v287 = vld [vmem:[%s1 + $0x8] sm:$0xff]
      %v288 = vld [vmem:[%s1 + $0x10] sm:$0xff]
      %v289 = vld [vmem:[%s1 + $0x18] sm:$0xff]
      %v290 = vld [vmem:[%s1 + $0x20] sm:$0xff]
      %v291 = vld [vmem:[%s1 + $0x28] sm:$0xff]
      %v292 = vld [vmem:[%s1 + $0x30] sm:$0xff]
      %v293 = vld [vmem:[%s1 + $0x38] sm:$0xff]
      %v294 = vld [vmem:[%s1 + $0x40] sm:$0xff]
      %v295 = vld [vmem:[%s1 + $0x48] sm:$0xff]
      %v296 = vld [vmem:[%s1 + $0x50] sm:$0xff]
      %v297 = vld [vmem:[%s1 + $0x58] sm:$0xff]
      %v298 = vld [vmem:[%s1 + $0x60] sm:$0xff]
      %v299 = vld [vmem:[%s1 + $0x68] sm:$0xff]
      %v300 = vld [vmem:[%s1 + $0x70] sm:$0xff]
      %v301 = vld [vmem:[%s1 + $0x78] sm:$0xff]
      %v302 = vld [vmem:[%s2] sm:$0x3]
      %v304 = vlaneseq
      %v305 = vshrl.u32 %v304, 7
      %v306 = vsub.s32 0, %v305
      %v307 = vrot.slane %v302, %v306
      %v308 = vlaneseq
      %v309 = vshrl.u32 %v308, 7
      %v310 = vsub.s32 1, %v309
      %v311 = vrot.slane %v302, %v310
      %v330 = vunpack.c.l.b16 %v286
      %v331 = vunpack.c.h.b16 %v286
      %v332 = vunpack.c.l.b16 %v287
      %v333 = vunpack.c.h.b16 %v287
      %v334 = vunpack.c.l.b16 %v288
      %v335 = vunpack.c.h.b16 %v288
      %v336 = vunpack.c.l.b16 %v289
      %v337 = vunpack.c.h.b16 %v289
      %v338 = vunpack.c.l.b16 %v290
      %v339 = vunpack.c.h.b16 %v290
      %v340 = vunpack.c.l.b16 %v291
      %v341 = vunpack.c.h.b16 %v291
      %v342 = vunpack.c.l.b16 %v292
      %v343 = vunpack.c.h.b16 %v292
      %v344 = vunpack.c.l.b16 %v293
      %v345 = vunpack.c.h.b16 %v293
      %v346 = vunpack.c.l.b16 %v294
      %v347 = vunpack.c.h.b16 %v294
      %v348 = vunpack.c.l.b16 %v295
      %v349 = vunpack.c.h.b16 %v295
      %v350 = vunpack.c.l.b16 %v296
      %v351 = vunpack.c.h.b16 %v296
      %v352 = vunpack.c.l.b16 %v297
      %v353 = vunpack.c.h.b16 %v297
      %v354 = vunpack.c.l.b16 %v298
      %v355 = vunpack.c.h.b16 %v298
      %v356 = vunpack.c.l.b16 %v299
      %v357 = vunpack.c.h.b16 %v299
      %v358 = vunpack.c.l.b16 %v300
      %v359 = vunpack.c.h.b16 %v300
      %v360 = vunpack.c.l.b16 %v301
      %v361 = vunpack.c.h.b16 %v301
      %v362 = vpack.c.b16 %v332, %v330
      %v363 = vpack.c.b16 %v333, %v331
      %v364 = vpack.c.b16 %v336, %v334
      %v365 = vpack.c.b16 %v337, %v335
      %v366 = vpack.c.b16 %v340, %v338
      %v367 = vpack.c.b16 %v341, %v339
      %v368 = vpack.c.b16 %v344, %v342
      %v369 = vpack.c.b16 %v345, %v343
      %v370 = vpack.c.b16 %v348, %v346
      %v371 = vpack.c.b16 %v349, %v347
      %v372 = vpack.c.b16 %v352, %v350
      %v373 = vpack.c.b16 %v353, %v351
      %v374 = vpack.c.b16 %v356, %v354
      %v375 = vpack.c.b16 %v357, %v355
      %v376 = vpack.c.b16 %v360, %v358
      %v377 = vpack.c.b16 %v361, %v359
      %394 = vmatprep.subr.bf16.mxu0 %v377
      %395 = vmatpush1.bf16.msra.mxu0 %v376
      %396 = vmatprep.subr.bf16.mxu0 %v375
      %397 = vmatpush1.bf16.msra.mxu0 %v374
      %398 = vmatprep.subr.bf16.mxu0 %v373
      %399 = vmatpush1.bf16.msra.mxu0 %v372
      %400 = vmatprep.subr.bf16.mxu0 %v371
      %401 = vmatpush1.bf16.msra.mxu0 %v370
      %402 = vmatprep.subr.bf16.mxu0 %v369
      %403 = vmatpush1.bf16.msra.mxu0 %v368
      %404 = vmatprep.subr.bf16.mxu0 %v367
      %405 = vmatpush1.bf16.msra.mxu0 %v366
      %406 = vmatprep.subr.bf16.mxu0 %v365
      %407 = vmatpush1.bf16.msra.mxu0 %v364
      %408 = vmatprep.subr.bf16.mxu0 %v363
      %409 = vmatpush1.bf16.msra.mxu0 %v362
      %410 = vmatprep.subr.bf16.mxu0 0
      %411 = vmatpush2.bf16.msra.mxu0 0
      %412 = vmatprep.subr.bf16.mxu0 0
      %413 = vmatpush2.bf16.msra.mxu0 0
      %414 = vmatprep.subr.bf16.mxu0 0
      %415 = vmatpush2.bf16.msra.mxu0 0
      %416 = vmatprep.subr.bf16.mxu0 0
      %417 = vmatpush2.bf16.msra.mxu0 0
      %418 = vmatprep.subr.bf16.mxu0 0
      %419 = vmatpush2.bf16.msra.mxu0 0
      %420 = vmatprep.subr.bf16.mxu0 0
      %421 = vmatpush2.bf16.msra.mxu0 0
      %422 = vmatprep.subr.bf16.mxu0 0
      %423 = vmatpush2.bf16.msra.mxu0 0
      %424 = vmatprep.subr.bf16.mxu0 0
      %425 = vmatpush2.bf16.msra.mxu0 0
      %426 = vmatprep.mubr.bf16.mxu0 0
      %427 = vmatmul.mubr.bf16.gmra.mxu0 %v285
      %v428 = vpop.f32.mrf.mxu0
      %v429 = vadd.f32 %v307, %v428
      %v430 = vpop.f32.mrf.mxu0
      %v431 = vadd.f32 %v311, %v430
      %v432 = vpop.f32.mrf.mxu0
      %v433 = vadd.f32 %v307, %v432
      %v434 = vpop.f32.mrf.mxu0
      %v435 = vadd.f32 %v311, %v434
      %436 = vdwg.mxu0
      %v437 = vmul.f32 %v429, %v429
      %v438 = vmul.f32 %v431, %v431
      %v439 = vmul.f32 %v433, %v433
      %v440 = vmul.f32 %v435, %v435
      %v441 = vmul.f32 %v429, %v437
      %v442 = vmul.f32 %v431, %v438
      %v443 = vmul.f32 %v433, %v439
      %v444 = vmul.f32 %v435, %v440
      %v445 = vmul.f32 %v441, 0.044715
      %v446 = vmul.f32 %v442, 0.044715
      %v447 = vmul.f32 %v443, 0.044715
      %v448 = vmul.f32 %v444, 0.044715
      %v449 = vadd.f32 %v429, %v445
      %v450 = vadd.f32 %v431, %v446
      %v451 = vadd.f32 %v433, %v447
      %v452 = vadd.f32 %v435, %v448
      %v453 = vmul.f32 %v449, 0.7978846
      %v454 = vmul.f32 %v450, 0.7978846
      %v455 = vmul.f32 %v451, 0.7978846
      %v456 = vmul.f32 %v452, 0.7978846
      %v457 = vtanh.pop %v453
      %v458 = vtanh.pop %v454
      %v459 = vtanh.pop %v455
      %v460 = vtanh.pop %v456
      %v461 = vadd.f32 %v457, 1.0
      %v462 = vadd.f32 %v458, 1.0
      %v463 = vadd.f32 %v459, 1.0
      %v464 = vadd.f32 %v460, 1.0
      %v465 = vmul.f32 %v461, 0.5
      %v466 = vmul.f32 %v462, 0.5
      %v467 = vmul.f32 %v463, 0.5
      %v468 = vmul.f32 %v464, 0.5
      %v469 = vmul.f32 %v429, %v465
      %v470 = vmul.f32 %v431, %v466
      %v471 = vmul.f32 %v433, %v467
      %v472 = vmul.f32 %v435, %v468
      %v473 = vpack.c.bf16 %v471, %v469
      %v474 = vpack.c.bf16 %v472, %v470
      %v475 = vld [vmem:[%s3] sm:$0xf]
      %v476 = vld [vmem:[%s3 + $0x4] sm:$0xf]
      %v477 = vld [vmem:[%s3 + $0x8] sm:$0xf]
      %v478 = vld [vmem:[%s3 + $0xc] sm:$0xf]
      %v479 = vld [vmem:[%s3 + $0x10] sm:$0xf]
      %v480 = vld [vmem:[%s3 + $0x14] sm:$0xf]
      %v481 = vld [vmem:[%s3 + $0x18] sm:$0xf]
      %v482 = vld [vmem:[%s3 + $0x1c] sm:$0xf]
      %v483 = vld [vmem:[%s3 + $0x20] sm:$0xf]
      %v484 = vld [vmem:[%s3 + $0x24] sm:$0xf]
      %v485 = vld [vmem:[%s3 + $0x28] sm:$0xf]
      %v486 = vld [vmem:[%s3 + $0x2c] sm:$0xf]
      %v487 = vld [vmem:[%s3 + $0x30] sm:$0xf]
      %v488 = vld [vmem:[%s3 + $0x34] sm:$0xf]
      %v489 = vld [vmem:[%s3 + $0x38] sm:$0xf]
      %v490 = vld [vmem:[%s3 + $0x3c] sm:$0xf]
      %v491 = vld [vmem:[%s3 + $0x40] sm:$0xf]
      %v492 = vld [vmem:[%s3 + $0x44] sm:$0xf]
      %v493 = vld [vmem:[%s3 + $0x48] sm:$0xf]
      %v494 = vld [vmem:[%s3 + $0x4c] sm:$0xf]
      %v495 = vld [vmem:[%s3 + $0x50] sm:$0xf]
      %v496 = vld [vmem:[%s3 + $0x54] sm:$0xf]
      %v497 = vld [vmem:[%s3 + $0x58] sm:$0xf]
      %v498 = vld [vmem:[%s3 + $0x5c] sm:$0xf]
      %v499 = vld [vmem:[%s3 + $0x60] sm:$0xf]
      %v500 = vld [vmem:[%s3 + $0x64] sm:$0xf]
      %v501 = vld [vmem:[%s3 + $0x68] sm:$0xf]
      %v502 = vld [vmem:[%s3 + $0x6c] sm:$0xf]
      %v503 = vld [vmem:[%s3 + $0x70] sm:$0xf]
      %v504 = vld [vmem:[%s3 + $0x74] sm:$0xf]
      %v505 = vld [vmem:[%s3 + $0x78] sm:$0xf]
      %v506 = vld [vmem:[%s3 + $0x7c] sm:$0xf]
      %v507 = vld [vmem:[%s4] sm:$0x1]
      %v509 = vlaneseq
      %v510 = vshrl.u32 %v509, 7
      %v511 = vsub.s32 0, %v510
      %v512 = vrot.slane %v507, %v511
      %v546 = vunpack.c.l.b16 %v475
      %v547 = vunpack.c.l.b16 %v476
      %v548 = vunpack.c.l.b16 %v477
      %v549 = vunpack.c.l.b16 %v478
      %v550 = vunpack.c.l.b16 %v479
      %v551 = vunpack.c.l.b16 %v480
      %v552 = vunpack.c.l.b16 %v481
      %v553 = vunpack.c.l.b16 %v482
      %v554 = vunpack.c.l.b16 %v483
      %v555 = vunpack.c.l.b16 %v484
      %v556 = vunpack.c.l.b16 %v485
      %v557 = vunpack.c.l.b16 %v486
      %v558 = vunpack.c.l.b16 %v487
      %v559 = vunpack.c.l.b16 %v488
      %v560 = vunpack.c.l.b16 %v489
      %v561 = vunpack.c.l.b16 %v490
      %v562 = vunpack.c.l.b16 %v491
      %v563 = vunpack.c.l.b16 %v492
      %v564 = vunpack.c.l.b16 %v493
      %v565 = vunpack.c.l.b16 %v494
      %v566 = vunpack.c.l.b16 %v495
      %v567 = vunpack.c.l.b16 %v496
      %v568 = vunpack.c.l.b16 %v497
      %v569 = vunpack.c.l.b16 %v498
      %v570 = vunpack.c.l.b16 %v499
      %v571 = vunpack.c.l.b16 %v500
      %v572 = vunpack.c.l.b16 %v501
      %v573 = vunpack.c.l.b16 %v502
      %v574 = vunpack.c.l.b16 %v503
      %v575 = vunpack.c.l.b16 %v504
      %v576 = vunpack.c.l.b16 %v505
      %v577 = vunpack.c.l.b16 %v506
      %v578 = vpack.c.b16 %v547, %v546
      %v579 = vpack.c.b16 %v549, %v548
      %v580 = vpack.c.b16 %v551, %v550
      %v581 = vpack.c.b16 %v553, %v552
      %v582 = vpack.c.b16 %v555, %v554
      %v583 = vpack.c.b16 %v557, %v556
      %v584 = vpack.c.b16 %v559, %v558
      %v585 = vpack.c.b16 %v561, %v560
      %v586 = vpack.c.b16 %v563, %v562
      %v587 = vpack.c.b16 %v565, %v564
      %v588 = vpack.c.b16 %v567, %v566
      %v589 = vpack.c.b16 %v569, %v568
      %v590 = vpack.c.b16 %v571, %v570
      %v591 = vpack.c.b16 %v573, %v572
      %v592 = vpack.c.b16 %v575, %v574
      %v593 = vpack.c.b16 %v577, %v576
      %610 = vmatprep.subr.bf16.mxu0 0
      %611 = vmatpush1.bf16.msra.mxu0 %v585
      %612 = vmatprep.subr.bf16.mxu0 0
      %613 = vmatpush1.bf16.msra.mxu0 %v584
      %614 = vmatprep.subr.bf16.mxu0 0
      %615 = vmatpush1.bf16.msra.mxu0 %v583
      %616 = vmatprep.subr.bf16.mxu0 0
      %617 = vmatpush1.bf16.msra.mxu0 %v582
      %618 = vmatprep.subr.bf16.mxu0 0
      %619 = vmatpush1.bf16.msra.mxu0 %v581
      %620 = vmatprep.subr.bf16.mxu0 0
      %621 = vmatpush1.bf16.msra.mxu0 %v580
      %622 = vmatprep.subr.bf16.mxu0 0
      %623 = vmatpush1.bf16.msra.mxu0 %v579
      %624 = vmatprep.subr.bf16.mxu0 0
      %625 = vmatpush1.bf16.msra.mxu0 %v578
      %626 = vmatprep.subr.bf16.mxu0 0
      %627 = vmatpush2.bf16.msra.mxu0 %v593
      %628 = vmatprep.subr.bf16.mxu0 0
      %629 = vmatpush2.bf16.msra.mxu0 %v592
      %630 = vmatprep.subr.bf16.mxu0 0
      %631 = vmatpush2.bf16.msra.mxu0 %v591
      %632 = vmatprep.subr.bf16.mxu0 0
      %633 = vmatpush2.bf16.msra.mxu0 %v590
      %634 = vmatprep.subr.bf16.mxu0 0
      %635 = vmatpush2.bf16.msra.mxu0 %v589
      %636 = vmatprep.subr.bf16.mxu0 0
      %637 = vmatpush2.bf16.msra.mxu0 %v588
      %638 = vmatprep.subr.bf16.mxu0 0
      %639 = vmatpush2.bf16.msra.mxu0 %v587
      %640 = vmatprep.subr.bf16.mxu0 0
      %641 = vmatpush2.bf16.msra.mxu0 %v586
      %642 = vmatprep.mubr.bf16.mxu0 %v474
      %643 = vmatmul.mubr.bf16.gmra.mxu0 %v473
      %v644 = vpop.f32.mrf.mxu0
      %v645 = vadd.f32 %v512, %v644
      %v646 = vpop.f32.mrf.mxu0
      %v647 = vpop.f32.mrf.mxu0
      %v648 = vadd.f32 %v512, %v647
      %v649 = vpop.f32.mrf.mxu0
      %650 = vdwg.mxu0
      %v651 = vadd.f32 %v283, %v645
      %v652 = vadd.f32 %v284, %v648
      %653 = vadd.xlane.f32.xlu0 %v651
      %v654 = vpop.xlane.xlu0 %653
      %655 = vadd.xlane.f32.xlu0 %v652
      %v656 = vpop.xlane.xlu0 %655
      %v657 = vrcp.pop 128.0
      %v658 = vmul.f32 %v654, %v657
      %v659 = vmul.f32 %v656, %v657
      %v660 = vsub.f32 %v651, %v658
      %v661 = vsub.f32 %v652, %v659
      %v662 = vmul.f32 %v660, %v660
      %v663 = vmul.f32 %v661, %v661
      %664 = vadd.xlane.f32.xlu0 %v662
      %v665 = vpop.xlane.xlu0 %664
      %666 = vadd.xlane.f32.xlu0 %v663
      %v667 = vpop.xlane.xlu0 %666
      %v668 = vmul.f32 %v665, %v657
      %v669 = vmul.f32 %v667, %v657
      %v670 = vadd.f32 %v668, 1e-12
      %v671 = vadd.f32 %v669, 1e-12
      %v672 = vrsqrt.pop %v670
      %v673 = vrsqrt.pop %v671
      %v674 = vmul.f32 %v660, %v672
      %v675 = vmul.f32 %v661, %v673
      %v676 = vld [vmem:[%s5] sm:$0x1]
      %v678 = vlaneseq
      %v679 = vshrl.u32 %v678, 7
      %v680 = vsub.s32 0, %v679
      %v681 = vrot.slane %v676, %v680
      %v683 = vmul.f32 %v674, %v681
      %v684 = vmul.f32 %v675, %v681
      %v685 = vld [vmem:[%s6] sm:$0x1]
      %v687 = vlaneseq
      %v688 = vshrl.u32 %v687, 7
      %v689 = vsub.s32 0, %v688
      %v690 = vrot.slane %v685, %v689
      %v692 = vadd.f32 %v683, %v690
      %v693 = vadd.f32 %v684, %v690
      %694 = vst [vmem:[%s280] sm:$0xff] %v692
      %695 = vst [vmem:[%s280 + $0x8] sm:$0xff] %v693
      %s696 = smul.u32 2, %s18
      %p697 = scmp.lt.s32.totalorder %s696, 3
      %s698 = scalar_select %p697, %s696, 3
      %s699 = smul.addr %s698, 8
      %s700 = scalar_lea.vmem %s7, %s699
      // Predicated region
      $region49: #{_mmkd_forward.4} parent=47 // pred_check
        %p701 = pneg %p188
      $region50: #{_mmkd_forward.4} parent=47 // pred_check_branch
        %703 = sbr.rel (%p701) target = $region52
      $region51: #{_mmkd_forward.4} parent=47 // pred_region
        %s704 = smul.u32 2, %s18
      $region52: #{_mmkd_forward.4} parent=47 // pred_fallthru
        _
    $region48: #{_mmkd_forward.4} parent=5 // pred_fallthru
      _
    %p705 = scmp.le.s32.totalorder 2, %s13
    // Predicated region
    $region53: #{_mmkd_forward.4} parent=5 // pred_check
      %p706 = pneg %p705
    $region54: #{_mmkd_forward.4} parent=5 // pred_check_branch
      %708 = sbr.rel (%p706) target = $region56
    $region55: #{_mmkd_forward.4} parent=5 // pred_region
      %s709 = ssub.s32 %s13, 2
      // Predicated region
      $region57: #{_mmkd_forward.4} parent=55 // pred_check
        %p710 = pneg %p194
      $region58: #{_mmkd_forward.4} parent=55 // pred_check_branch
        %712 = sbr.rel (%p710) target = $region60
      $region59: #{_mmkd_forward.4} parent=55 // pred_region
        %s713 = smul.u32 2, %s19
        %p714 = scmp.lt.s32.totalorder %s713, 3
        %s715 = scalar_select %p714, %s713, 3
        %s716 = smul.addr %s715, 8
        %s717 = scalar_lea.vmem %s7, %s716
      $region60: #{_mmkd_forward.4} parent=55 // pred_fallthru
        _
    $region56: #{_mmkd_forward.4} parent=5 // pred_fallthru
      _
  $region6: #{_mmkd_forward.4} parent=0 // loop_footer
    %s17 = sadd.s32 1, %s13
  $region7: #{_mmkd_forward.4} parent=0 // loop_footer_branch
    %12 = sbr.rel target = $region3
  $region8: #{_mmkd_forward.4} parent=0 // loop_exit
    _

// kernel: _mmkd_forward.5
$region0: #{_mmkd_forward.5}
  #allocation0 [shape = 'u32[]', space=smem, size = 0x4, offset = 0x4, fixed_abs, tag = 'smem constant byte address 0x4 - core index']
  #allocation1 [shape = 'u32[144,128]{1,0:T(1,128)}', space=vmem, size = 0x12000, scoped, tag = 'internal scratch']
  %s0 = inlined_call_operand.smem [shape: u32[30], index: -1, kind: input, shape index: {}]
  %s1 = sld [smem:[%s0]]
  %s2 = scalar_lea.smem %s0, 1
  %s3 = sld [smem:[%s2]]
  %s4 = scalar_lea.smem %s0, 2
  %s5 = sld [smem:[%s4]]
  %s6 = scalar_lea.smem %s0, 3
  %s7 = sld [smem:[%s6]]
  %s8 = scalar_lea.smem %s0, 4
  %s9 = sld [smem:[%s8]]
  %s10 = scalar_lea.smem %s0, 5
  %s11 = sld [smem:[%s10]]
  %s12 = scalar_lea.smem %s0, 6
  %s13 = sld [smem:[%s12]]
  %s14 = scalar_lea.smem %s0, 7
  %s15 = sld [smem:[%s14]]
  %s16 = scalar_lea.smem %s0, 8
  %s17 = sld [smem:[%s16]]
  %s18 = scalar_lea.smem %s0, 9
  %s19 = sld [smem:[%s18]]
  %s20 = scalar_lea.smem %s0, 10
  %s21 = sld [smem:[%s20]]
  %s22 = scalar_lea.smem %s0, 11
  %s23 = sld [smem:[%s22]]
  %s24 = scalar_lea.smem %s0, 12
  %s25 = sld [smem:[%s24]]
  %s26 = scalar_lea.smem %s0, 13
  %s27 = sld [smem:[%s26]]
  %s28 = scalar_lea.smem %s0, 14
  %s29 = sld [smem:[%s28]]
  %s30 = scalar_lea.smem %s0, 15
  %s31 = sld [smem:[%s30]]
  %s32 = scalar_lea.smem %s0, 16
  %s33 = sld [smem:[%s32]]
  %s34 = scalar_lea.smem %s0, 17
  %s35 = sld [smem:[%s34]]
  %s36 = scalar_lea.smem %s0, 18
  %s37 = sld [smem:[%s36]]
  %s38 = scalar_lea.smem %s0, 19
  %s39 = sld [smem:[%s38]]
  %s40 = scalar_lea.smem %s0, 20
  %s41 = sld [smem:[%s40]]
  %s42 = scalar_lea.smem %s0, 21
  %s43 = sld [smem:[%s42]]
  %s44 = scalar_lea.smem %s0, 22
  %s45 = sld [smem:[%s44]]
  %s46 = scalar_lea.smem %s0, 23
  %s47 = sld [smem:[%s46]]
  %s48 = scalar_lea.smem %s0, 24
  %s49 = sld [smem:[%s48]]
  %s50 = scalar_lea.smem %s0, 25
  %s51 = sld [smem:[%s50]]
  %s52 = scalar_lea.smem %s0, 26
  %s53 = sld [smem:[%s52]]
  %s54 = scalar_lea.smem %s0, 27
  %s55 = sld [smem:[%s54]]
  %s56 = scalar_lea.smem %s0, 28
  %s57 = sld [smem:[%s56]]
  %s58 = scalar_lea.smem %s0, 29
  %s59 = sld [smem:[%s58]]
  %s60 = sld [smem:[#allocation0]]
  $region126: #{_mmkd_forward.5} parent=0
    _
  %s62 = ssub.s32 1, %s60
  %s63 = scalar_select 0, %s62, %s60
  $region1: #{_mmkd_forward.5} parent=0
    #allocation2 [shape = 'u8[512]{0}', space=vmem, size = 0x400, scoped, tag = 'output window, operand 0, single buffered']
    #allocation3 [shape = 's32[1]{0}', space=sflag, size = 0x4, scoped, tag = 'scoped memory for _mmkd_forward.5']
    %64 = vsyncpa [#allocation3], 0
    // Predicated region
    $region2: #{_mmkd_forward.5} parent=1 // pred_check
      _
    $region3: #{_mmkd_forward.5} parent=1 // pred_check_branch
      %66 = sbr.rel (0) target = $region5
    $region4: #{_mmkd_forward.5} parent=1 // pred_region
      _
    $region5: #{_mmkd_forward.5} parent=1 // pred_fallthru
      _
    // Predicated region
    $region6: #{_mmkd_forward.5} parent=1 // pred_check
      _
    $region7: #{_mmkd_forward.5} parent=1 // pred_check_branch
      %68 = sbr.rel (0) target = $region9
    $region8: #{_mmkd_forward.5} parent=1 // pred_region
      _
    $region9: #{_mmkd_forward.5} parent=1 // pred_fallthru
      _
    // Predicated region
    $region10: #{_mmkd_forward.5} parent=1 // pred_check
      _
    $region11: #{_mmkd_forward.5} parent=1 // pred_check_branch
      %70 = sbr.rel (0) target = $region13
    $region12: #{_mmkd_forward.5} parent=1 // pred_region
      _
    $region13: #{_mmkd_forward.5} parent=1 // pred_fallthru
      _
    // Predicated region
    $region14: #{_mmkd_forward.5} parent=1 // pred_check
      _
    $region15: #{_mmkd_forward.5} parent=1 // pred_check_branch
      %72 = sbr.rel (0) target = $region17
    $region16: #{_mmkd_forward.5} parent=1 // pred_region
      _
    $region17: #{_mmkd_forward.5} parent=1 // pred_fallthru
      _
    // Predicated region
    $region18: #{_mmkd_forward.5} parent=1 // pred_check
      _
    $region19: #{_mmkd_forward.5} parent=1 // pred_check_branch
      %74 = sbr.rel (0) target = $region21
    $region20: #{_mmkd_forward.5} parent=1 // pred_region
      _
    $region21: #{_mmkd_forward.5} parent=1 // pred_fallthru
      _
    // Predicated region
    $region22: #{_mmkd_forward.5} parent=1 // pred_check
      _
    $region23: #{_mmkd_forward.5} parent=1 // pred_check_branch
      %76 = sbr.rel (0) target = $region25
    $region24: #{_mmkd_forward.5} parent=1 // pred_region
      _
    $region25: #{_mmkd_forward.5} parent=1 // pred_fallthru
      _
    // Predicated region
    $region26: #{_mmkd_forward.5} parent=1 // pred_check
      _
    $region27: #{_mmkd_forward.5} parent=1 // pred_check_branch
      %78 = sbr.rel (0) target = $region29
    $region28: #{_mmkd_forward.5} parent=1 // pred_region
      _
    $region29: #{_mmkd_forward.5} parent=1 // pred_fallthru
      _
    // Predicated region
    $region30: #{_mmkd_forward.5} parent=1 // pred_check
      _
    $region31: #{_mmkd_forward.5} parent=1 // pred_check_branch
      %80 = sbr.rel (0) target = $region33
    $region32: #{_mmkd_forward.5} parent=1 // pred_region
      _
    $region33: #{_mmkd_forward.5} parent=1 // pred_fallthru
      _
    // Predicated region
    $region34: #{_mmkd_forward.5} parent=1 // pred_check
      _
    $region35: #{_mmkd_forward.5} parent=1 // pred_check_branch
      %82 = sbr.rel (0) target = $region37
    $region36: #{_mmkd_forward.5} parent=1 // pred_region
      _
    $region37: #{_mmkd_forward.5} parent=1 // pred_fallthru
      _
    // Predicated region
    $region38: #{_mmkd_forward.5} parent=1 // pred_check
      _
    $region39: #{_mmkd_forward.5} parent=1 // pred_check_branch
      %84 = sbr.rel (0) target = $region41
    $region40: #{_mmkd_forward.5} parent=1 // pred_region
      _
    $region41: #{_mmkd_forward.5} parent=1 // pred_fallthru
      _
    // Predicated region
    $region42: #{_mmkd_forward.5} parent=1 // pred_check
      _
    $region43: #{_mmkd_forward.5} parent=1 // pred_check_branch
      %86 = sbr.rel (0) target = $region45
    $region44: #{_mmkd_forward.5} parent=1 // pred_region
      _
    $region45: #{_mmkd_forward.5} parent=1 // pred_fallthru
      _
    // Predicated region
    $region46: #{_mmkd_forward.5} parent=1 // pred_check
      _
    $region47: #{_mmkd_forward.5} parent=1 // pred_check_branch
      %88 = sbr.rel (0) target = $region49
    $region48: #{_mmkd_forward.5} parent=1 // pred_region
      _
    $region49: #{_mmkd_forward.5} parent=1 // pred_fallthru
      _
    // Predicated region
    $region50: #{_mmkd_forward.5} parent=1 // pred_check
      _
    $region51: #{_mmkd_forward.5} parent=1 // pred_check_branch
      %90 = sbr.rel (0) target = $region53
    $region52: #{_mmkd_forward.5} parent=1 // pred_region
      _
    $region53: #{_mmkd_forward.5} parent=1 // pred_fallthru
      _
    // Predicated region
    $region54: #{_mmkd_forward.5} parent=1 // pred_check
      _
    $region55: #{_mmkd_forward.5} parent=1 // pred_check_branch
      %92 = sbr.rel (0) target = $region57
    $region56: #{_mmkd_forward.5} parent=1 // pred_region
      _
    $region57: #{_mmkd_forward.5} parent=1 // pred_fallthru
      _
    // Predicated region
    $region58: #{_mmkd_forward.5} parent=1 // pred_check
      _
    $region59: #{_mmkd_forward.5} parent=1 // pred_check_branch
      %94 = sbr.rel (0) target = $region61
    $region60: #{_mmkd_forward.5} parent=1 // pred_region
      _
    $region61: #{_mmkd_forward.5} parent=1 // pred_fallthru
      _
    // Predicated region
    $region62: #{_mmkd_forward.5} parent=1 // pred_check
      _
    $region63: #{_mmkd_forward.5} parent=1 // pred_check_branch
      %96 = sbr.rel (0) target = $region65
    $region64: #{_mmkd_forward.5} parent=1 // pred_region
      _
    $region65: #{_mmkd_forward.5} parent=1 // pred_fallthru
      _
    // Predicated region
    $region66: #{_mmkd_forward.5} parent=1 // pred_check
      _
    $region67: #{_mmkd_forward.5} parent=1 // pred_check_branch
      %98 = sbr.rel (0) target = $region69
    $region68: #{_mmkd_forward.5} parent=1 // pred_region
      _
    $region69: #{_mmkd_forward.5} parent=1 // pred_fallthru
      _
    // Predicated region
    $region70: #{_mmkd_forward.5} parent=1 // pred_check
      _
    $region71: #{_mmkd_forward.5} parent=1 // pred_check_branch
      %100 = sbr.rel (0) target = $region73
    $region72: #{_mmkd_forward.5} parent=1 // pred_region
      _
    $region73: #{_mmkd_forward.5} parent=1 // pred_fallthru
      _
    // Predicated region
    $region74: #{_mmkd_forward.5} parent=1 // pred_check
      _
    $region75: #{_mmkd_forward.5} parent=1 // pred_check_branch
      %102 = sbr.rel (0) target = $region77
    $region76: #{_mmkd_forward.5} parent=1 // pred_region
      _
    $region77: #{_mmkd_forward.5} parent=1 // pred_fallthru
      _
    // Predicated region
    $region78: #{_mmkd_forward.5} parent=1 // pred_check
      _
    $region79: #{_mmkd_forward.5} parent=1 // pred_check_branch
      %104 = sbr.rel (0) target = $region81
    $region80: #{_mmkd_forward.5} parent=1 // pred_region
      _
    $region81: #{_mmkd_forward.5} parent=1 // pred_fallthru
      _
    // Predicated region
    $region82: #{_mmkd_forward.5} parent=1 // pred_check
      _
    $region83: #{_mmkd_forward.5} parent=1 // pred_check_branch
      %106 = sbr.rel (0) target = $region85
    $region84: #{_mmkd_forward.5} parent=1 // pred_region
      _
    $region85: #{_mmkd_forward.5} parent=1 // pred_fallthru
      _
    // Predicated region
    $region86: #{_mmkd_forward.5} parent=1 // pred_check
      _
    $region87: #{_mmkd_forward.5} parent=1 // pred_check_branch
      %108 = sbr.rel (0) target = $region89
    $region88: #{_mmkd_forward.5} parent=1 // pred_region
      _
    $region89: #{_mmkd_forward.5} parent=1 // pred_fallthru
      _
    // Predicated region
    $region90: #{_mmkd_forward.5} parent=1 // pred_check
      _
    $region91: #{_mmkd_forward.5} parent=1 // pred_check_branch
      %110 = sbr.rel (0) target = $region93
    $region92: #{_mmkd_forward.5} parent=1 // pred_region
      _
    $region93: #{_mmkd_forward.5} parent=1 // pred_fallthru
      _
    // Predicated region
    $region94: #{_mmkd_forward.5} parent=1 // pred_check
      _
    $region95: #{_mmkd_forward.5} parent=1 // pred_check_branch
      %112 = sbr.rel (0) target = $region97
    $region96: #{_mmkd_forward.5} parent=1 // pred_region
      _
    $region97: #{_mmkd_forward.5} parent=1 // pred_fallthru
      _
    // Predicated region
    $region98: #{_mmkd_forward.5} parent=1 // pred_check
      _
    $region99: #{_mmkd_forward.5} parent=1 // pred_check_branch
      %114 = sbr.rel (0) target = $region101
    $region100: #{_mmkd_forward.5} parent=1 // pred_region
      _
    $region101: #{_mmkd_forward.5} parent=1 // pred_fallthru
      _
    // Predicated region
    $region102: #{_mmkd_forward.5} parent=1 // pred_check
      _
    $region103: #{_mmkd_forward.5} parent=1 // pred_check_branch
      %116 = sbr.rel (0) target = $region105
    $region104: #{_mmkd_forward.5} parent=1 // pred_region
      _
    $region105: #{_mmkd_forward.5} parent=1 // pred_fallthru
      _
    // Predicated region
    $region106: #{_mmkd_forward.5} parent=1 // pred_check
      _
    $region107: #{_mmkd_forward.5} parent=1 // pred_check_branch
      %118 = sbr.rel (0) target = $region109
    $region108: #{_mmkd_forward.5} parent=1 // pred_region
      _
    $region109: #{_mmkd_forward.5} parent=1 // pred_fallthru
      _
    // Predicated region
    $region110: #{_mmkd_forward.5} parent=1 // pred_check
      _
    $region111: #{_mmkd_forward.5} parent=1 // pred_check_branch
      %120 = sbr.rel (0) target = $region113
    $region112: #{_mmkd_forward.5} parent=1 // pred_region
      _
    $region113: #{_mmkd_forward.5} parent=1 // pred_fallthru
      _
    // Predicated region
    $region114: #{_mmkd_forward.5} parent=1 // pred_check
      _
    $region115: #{_mmkd_forward.5} parent=1 // pred_check_branch
      %122 = sbr.rel (0) target = $region117
    $region116: #{_mmkd_forward.5} parent=1 // pred_region
      _
    $region117: #{_mmkd_forward.5} parent=1 // pred_fallthru
      _
    %v124 = vld [vmem:[%s1] sm:$0x3]
    %v125 = vld [vmem:[%s5] sm:$0xff]
    %v126 = vld [vmem:[%s5 + $0x8] sm:$0xff]
    %v127 = vld [vmem:[%s5 + $0x10] sm:$0xff]
    %v128 = vld [vmem:[%s5 + $0x18] sm:$0xff]
    %v129 = vld [vmem:[%s5 + $0x20] sm:$0xff]
    %v130 = vld [vmem:[%s5 + $0x28] sm:$0xff]
    %v131 = vld [vmem:[%s5 + $0x30] sm:$0xff]
    %v132 = vld [vmem:[%s5 + $0x38] sm:$0xff]
    %v133 = vld [vmem:[%s5 + $0x40] sm:$0xff]
    %v134 = vld [vmem:[%s5 + $0x48] sm:$0xff]
    %v135 = vld [vmem:[%s5 + $0x50] sm:$0xff]
    %v136 = vld [vmem:[%s5 + $0x58] sm:$0xff]
    %v137 = vld [vmem:[%s5 + $0x60] sm:$0xff]
    %v138 = vld [vmem:[%s5 + $0x68] sm:$0xff]
    %v139 = vld [vmem:[%s5 + $0x70] sm:$0xff]
    %v140 = vld [vmem:[%s5 + $0x78] sm:$0xff]
    %v141 = vld [vmem:[%s5 + $0x80] sm:$0xff]
    %v142 = vld [vmem:[%s5 + $0x88] sm:$0xff]
    %v143 = vld [vmem:[%s5 + $0x90] sm:$0xff]
    %v144 = vld [vmem:[%s5 + $0x98] sm:$0xff]
    %v145 = vld [vmem:[%s5 + $0xa0] sm:$0xff]
    %v146 = vld [vmem:[%s5 + $0xa8] sm:$0xff]
    %v147 = vld [vmem:[%s5 + $0xb0] sm:$0xff]
    %v148 = vld [vmem:[%s5 + $0xb8] sm:$0xff]
    %v149 = vld [vmem:[%s5 + $0xc0] sm:$0xff]
    %v150 = vld [vmem:[%s5 + $0xc8] sm:$0xff]
    %v151 = vld [vmem:[%s5 + $0xd0] sm:$0xff]
    %v152 = vld [vmem:[%s5 + $0xd8] sm:$0xff]
    %v153 = vld [vmem:[%s5 + $0xe0] sm:$0xff]
    %v154 = vld [vmem:[%s5 + $0xe8] sm:$0xff]
    %v155 = vld [vmem:[%s5 + $0xf0] sm:$0xff]
    %v156 = vld [vmem:[%s5 + $0xf8] sm:$0xff]
    %v157 = vld [vmem:[%s7] sm:$0xf]
    %v158 = vld [vmem:[%s9] sm:$0xf]
    %v159 = vld [vmem:[%s11] sm:$0xf]
    %v160 = vld [vmem:[%s11 + $0x4] sm:$0xf]
    %v161 = vld [vmem:[%s11 + $0x8] sm:$0xf]
    %v162 = vld [vmem:[%s11 + $0xc] sm:$0xf]
    %v163 = vld [vmem:[%s11 + $0x10] sm:$0xf]
    %v164 = vld [vmem:[%s11 + $0x14] sm:$0xf]
    %v165 = vld [vmem:[%s11 + $0x18] sm:$0xf]
    %v166 = vld [vmem:[%s11 + $0x1c] sm:$0xf]
    %v167 = vld [vmem:[%s11 + $0x20] sm:$0xf]
    %v168 = vld [vmem:[%s11 + $0x24] sm:$0xf]
    %v169 = vld [vmem:[%s11 + $0x28] sm:$0xf]
    %v170 = vld [vmem:[%s11 + $0x2c] sm:$0xf]
    %v171 = vld [vmem:[%s11 + $0x30] sm:$0xf]
    %v172 = vld [vmem:[%s11 + $0x34] sm:$0xf]
    %v173 = vld [vmem:[%s11 + $0x38] sm:$0xf]
    %v174 = vld [vmem:[%s11 + $0x3c] sm:$0xf]
    %v175 = vld [vmem:[%s11 + $0x40] sm:$0xf]
    %v176 = vld [vmem:[%s11 + $0x44] sm:$0xf]
    %v177 = vld [vmem:[%s11 + $0x48] sm:$0xf]
    %v178 = vld [vmem:[%s11 + $0x4c] sm:$0xf]
    %v179 = vld [vmem:[%s11 + $0x50] sm:$0xf]
    %v180 = vld [vmem:[%s11 + $0x54] sm:$0xf]
    %v181 = vld [vmem:[%s11 + $0x58] sm:$0xf]
    %v182 = vld [vmem:[%s11 + $0x5c] sm:$0xf]
    %v183 = vld [vmem:[%s11 + $0x60] sm:$0xf]
    %v184 = vld [vmem:[%s11 + $0x64] sm:$0xf]
    %v185 = vld [vmem:[%s11 + $0x68] sm:$0xf]
    %v186 = vld [vmem:[%s11 + $0x6c] sm:$0xf]
    %v187 = vld [vmem:[%s11 + $0x70] sm:$0xf]
    %v188 = vld [vmem:[%s11 + $0x74] sm:$0xf]
    %v189 = vld [vmem:[%s11 + $0x78] sm:$0xf]
    %v190 = vld [vmem:[%s11 + $0x7c] sm:$0xf]
    %v191 = vld [vmem:[%s13] sm:$0xf]
    %v192 = vld [vmem:[%s13 + $0x4] sm:$0xf]
    %v193 = vld [vmem:[%s13 + $0x8] sm:$0xf]
    %v194 = vld [vmem:[%s13 + $0xc] sm:$0xf]
    %v195 = vld [vmem:[%s13 + $0x10] sm:$0xf]
    %v196 = vld [vmem:[%s13 + $0x14] sm:$0xf]
    %v197 = vld [vmem:[%s13 + $0x18] sm:$0xf]
    %v198 = vld [vmem:[%s13 + $0x1c] sm:$0xf]
    %v199 = vld [vmem:[%s13 + $0x20] sm:$0xf]
    %v200 = vld [vmem:[%s13 + $0x24] sm:$0xf]
    %v201 = vld [vmem:[%s13 + $0x28] sm:$0xf]
    %v202 = vld [vmem:[%s13 + $0x2c] sm:$0xf]
    %v203 = vld [vmem:[%s13 + $0x30] sm:$0xf]
    %v204 = vld [vmem:[%s13 + $0x34] sm:$0xf]
    %v205 = vld [vmem:[%s13 + $0x38] sm:$0xf]
    %v206 = vld [vmem:[%s13 + $0x3c] sm:$0xf]
    %v207 = vld [vmem:[%s13 + $0x40] sm:$0xf]
    %v208 = vld [vmem:[%s13 + $0x44] sm:$0xf]
    %v209 = vld [vmem:[%s13 + $0x48] sm:$0xf]
    %v210 = vld [vmem:[%s13 + $0x4c] sm:$0xf]
    %v211 = vld [vmem:[%s13 + $0x50] sm:$0xf]
    %v212 = vld [vmem:[%s13 + $0x54] sm:$0xf]
    %v213 = vld [vmem:[%s13 + $0x58] sm:$0xf]
    %v214 = vld [vmem:[%s13 + $0x5c] sm:$0xf]
    %v215 = vld [vmem:[%s13 + $0x60] sm:$0xf]
    %v216 = vld [vmem:[%s13 + $0x64] sm:$0xf]
    %v217 = vld [vmem:[%s13 + $0x68] sm:$0xf]
    %v218 = vld [vmem:[%s13 + $0x6c] sm:$0xf]
    %v219 = vld [vmem:[%s13 + $0x70] sm:$0xf]
    %v220 = vld [vmem:[%s13 + $0x74] sm:$0xf]
    %v221 = vld [vmem:[%s13 + $0x78] sm:$0xf]
    %v222 = vld [vmem:[%s13 + $0x7c] sm:$0xf]
    %v223 = vpack.c.bf16 %v124, %v124
    %v256 = vunpack.c.l.b16 %v125
    %v257 = vunpack.c.h.b16 %v125
    %v258 = vunpack.c.l.b16 %v126
    %v259 = vunpack.c.h.b16 %v126
    %v260 = vunpack.c.l.b16 %v127
    %v261 = vunpack.c.h.b16 %v127
    %v262 = vunpack.c.l.b16 %v128
    %v263 = vunpack.c.h.b16 %v128
    %v264 = vunpack.c.l.b16 %v129
    %v265 = vunpack.c.h.b16 %v129
    %v266 = vunpack.c.l.b16 %v130
    %v267 = vunpack.c.h.b16 %v130
    %v268 = vunpack.c.l.b16 %v131
    %v269 = vunpack.c.h.b16 %v131
    %v270 = vunpack.c.l.b16 %v132
    %v271 = vunpack.c.h.b16 %v132
    %v272 = vunpack.c.l.b16 %v133
    %v273 = vunpack.c.h.b16 %v133
    %v274 = vunpack.c.l.b16 %v134
    %v275 = vunpack.c.h.b16 %v134
    %v276 = vunpack.c.l.b16 %v135
    %v277 = vunpack.c.h.b16 %v135
    %v278 = vunpack.c.l.b16 %v136
    %v279 = vunpack.c.h.b16 %v136
    %v280 = vunpack.c.l.b16 %v137
    %v281 = vunpack.c.h.b16 %v137
    %v282 = vunpack.c.l.b16 %v138
    %v283 = vunpack.c.h.b16 %v138
    %v284 = vunpack.c.l.b16 %v139
    %v285 = vunpack.c.h.b16 %v139
    %v286 = vunpack.c.l.b16 %v140
    %v287 = vunpack.c.h.b16 %v140
    %v288 = vunpack.c.l.b16 %v141
    %v289 = vunpack.c.h.b16 %v141
    %v290 = vunpack.c.l.b16 %v142
    %v291 = vunpack.c.h.b16 %v142
    %v292 = vunpack.c.l.b16 %v143
    %v293 = vunpack.c.h.b16 %v143
    %v294 = vunpack.c.l.b16 %v144
    %v295 = vunpack.c.h.b16 %v144
    %v296 = vunpack.c.l.b16 %v145
    %v297 = vunpack.c.h.b16 %v145
    %v298 = vunpack.c.l.b16 %v146
    %v299 = vunpack.c.h.b16 %v146
    %v300 = vunpack.c.l.b16 %v147
    %v301 = vunpack.c.h.b16 %v147
    %v302 = vunpack.c.l.b16 %v148
    %v303 = vunpack.c.h.b16 %v148
    %v304 = vunpack.c.l.b16 %v149
    %v305 = vunpack.c.h.b16 %v149
    %v306 = vunpack.c.l.b16 %v150
    %v307 = vunpack.c.h.b16 %v150
    %v308 = vunpack.c.l.b16 %v151
    %v309 = vunpack.c.h.b16 %v151
    %v310 = vunpack.c.l.b16 %v152
    %v311 = vunpack.c.h.b16 %v152
    %v312 = vunpack.c.l.b16 %v153
    %v313 = vunpack.c.h.b16 %v153
    %v314 = vunpack.c.l.b16 %v154
    %v315 = vunpack.c.h.b16 %v154
    %v316 = vunpack.c.l.b16 %v155
    %v317 = vunpack.c.h.b16 %v155
    %v318 = vunpack.c.l.b16 %v156
    %v319 = vunpack.c.h.b16 %v156
    %v320 = vpack.c.b16 %v260, %v256
    %v321 = vpack.c.b16 %v261, %v257
    %v322 = vpack.c.b16 %v262, %v258
    %v323 = vpack.c.b16 %v263, %v259
    %v324 = vpack.c.b16 %v268, %v264
    %v325 = vpack.c.b16 %v269, %v265
    %v326 = vpack.c.b16 %v270, %v266
    %v327 = vpack.c.b16 %v271, %v267
    %v328 = vpack.c.b16 %v276, %v272
    %v329 = vpack.c.b16 %v277, %v273
    %v330 = vpack.c.b16 %v278, %v274
    %v331 = vpack.c.b16 %v279, %v275
    %v332 = vpack.c.b16 %v284, %v280
    %v333 = vpack.c.b16 %v285, %v281
    %v334 = vpack.c.b16 %v286, %v282
    %v335 = vpack.c.b16 %v287, %v283
    %v336 = vpack.c.b16 %v292, %v288
    %v337 = vpack.c.b16 %v293, %v289
    %v338 = vpack.c.b16 %v294, %v290
    %v339 = vpack.c.b16 %v295, %v291
    %v340 = vpack.c.b16 %v300, %v296
    %v341 = vpack.c.b16 %v301, %v297
    %v342 = vpack.c.b16 %v302, %v298
    %v343 = vpack.c.b16 %v303, %v299
    %v344 = vpack.c.b16 %v308, %v304
    %v345 = vpack.c.b16 %v309, %v305
    %v346 = vpack.c.b16 %v310, %v306
    %v347 = vpack.c.b16 %v311, %v307
    %v348 = vpack.c.b16 %v316, %v312
    %v349 = vpack.c.b16 %v317, %v313
    %v350 = vpack.c.b16 %v318, %v314
    %v351 = vpack.c.b16 %v319, %v315
    %384 = vmatprep.subr.bf16.mxu0 %v349
    %385 = vmatpush1.bf16.msra.mxu0 %v348
    %386 = vmatprep.subr.bf16.mxu0 %v345
    %387 = vmatpush1.bf16.msra.mxu0 %v344
    %388 = vmatprep.subr.bf16.mxu0 %v341
    %389 = vmatpush1.bf16.msra.mxu0 %v340
    %390 = vmatprep.subr.bf16.mxu0 %v337
    %391 = vmatpush1.bf16.msra.mxu0 %v336
    %392 = vmatprep.subr.bf16.mxu0 %v333
    %393 = vmatpush1.bf16.msra.mxu0 %v332
    %394 = vmatprep.subr.bf16.mxu0 %v329
    %395 = vmatpush1.bf16.msra.mxu0 %v328
    %396 = vmatprep.subr.bf16.mxu0 %v325
    %397 = vmatpush1.bf16.msra.mxu0 %v324
    %398 = vmatprep.subr.bf16.mxu0 %v321
    %399 = vmatpush1.bf16.msra.mxu0 %v320
    %400 = vmatprep.subr.bf16.mxu0 0
    %401 = vmatpush2.bf16.msra.mxu0 0
    %402 = vmatprep.subr.bf16.mxu0 0
    %403 = vmatpush2.bf16.msra.mxu0 0
    %404 = vmatprep.subr.bf16.mxu0 0
    %405 = vmatpush2.bf16.msra.mxu0 0
    %406 = vmatprep.subr.bf16.mxu0 0
    %407 = vmatpush2.bf16.msra.mxu0 0
    %408 = vmatprep.subr.bf16.mxu0 0
    %409 = vmatpush2.bf16.msra.mxu0 0
    %410 = vmatprep.subr.bf16.mxu0 0
    %411 = vmatpush2.bf16.msra.mxu0 0
    %412 = vmatprep.subr.bf16.mxu0 0
    %413 = vmatpush2.bf16.msra.mxu0 0
    %414 = vmatprep.subr.bf16.mxu0 0
    %415 = vmatpush2.bf16.msra.mxu0 0
    %416 = vmatprep.mubr.bf16.mxu0 0
    %417 = vmatmul.mubr.bf16.gmra.mxu0 %v223
    %v418 = vpop.f32.mrf.mxu0
    %v419 = vadd.f32 0.0, %v418
    %v420 = vpop.f32.mrf.mxu0
    %v421 = vadd.f32 0.0, %v420
    %v422 = vpop.f32.mrf.mxu0
    %v423 = vpop.f32.mrf.mxu0
    %424 = vdwg.mxu0
    %425 = vmatprep.subr.bf16.mxu0 %v351
    %426 = vmatpush1.bf16.msra.mxu0 %v350
    %427 = vmatprep.subr.bf16.mxu0 %v347
    %428 = vmatpush1.bf16.msra.mxu0 %v346
    %429 = vmatprep.subr.bf16.mxu0 %v343
    %430 = vmatpush1.bf16.msra.mxu0 %v342
    %431 = vmatprep.subr.bf16.mxu0 %v339
    %432 = vmatpush1.bf16.msra.mxu0 %v338
    %433 = vmatprep.subr.bf16.mxu0 %v335
    %434 = vmatpush1.bf16.msra.mxu0 %v334
    %435 = vmatprep.subr.bf16.mxu0 %v331
    %436 = vmatpush1.bf16.msra.mxu0 %v330
    %437 = vmatprep.subr.bf16.mxu0 %v327
    %438 = vmatpush1.bf16.msra.mxu0 %v326
    %439 = vmatprep.subr.bf16.mxu0 %v323
    %440 = vmatpush1.bf16.msra.mxu0 %v322
    %441 = vmatprep.subr.bf16.mxu0 0
    %442 = vmatpush2.bf16.msra.mxu0 0
    %443 = vmatprep.subr.bf16.mxu0 0
    %444 = vmatpush2.bf16.msra.mxu0 0
    %445 = vmatprep.subr.bf16.mxu0 0
    %446 = vmatpush2.bf16.msra.mxu0 0
    %447 = vmatprep.subr.bf16.mxu0 0
    %448 = vmatpush2.bf16.msra.mxu0 0
    %449 = vmatprep.subr.bf16.mxu0 0
    %450 = vmatpush2.bf16.msra.mxu0 0
    %451 = vmatprep.subr.bf16.mxu0 0
    %452 = vmatpush2.bf16.msra.mxu0 0
    %453 = vmatprep.subr.bf16.mxu0 0
    %454 = vmatpush2.bf16.msra.mxu0 0
    %455 = vmatprep.subr.bf16.mxu0 0
    %456 = vmatpush2.bf16.msra.mxu0 0
    %457 = vmatprep.mubr.bf16.mxu0 0
    %458 = vmatmul.mubr.bf16.gmra.mxu0 %v223
    %v459 = vpop.f32.mrf.mxu0
    %v460 = vadd.f32 0.0, %v459
    %v461 = vpop.f32.mrf.mxu0
    %v462 = vadd.f32 0.0, %v461
    %v463 = vpop.f32.mrf.mxu0
    %v464 = vpop.f32.mrf.mxu0
    %465 = vdwg.mxu0
    %vm466 = vcmask 1041408
    %v467 = vsel %vm466, %v419, 0.0
    %v468 = vrot.slane %v467, 4
    %v469 = vadd.f32 %v467, %v468
    %v470 = vrot.slane %v469, 2
    %v471 = vadd.f32 %v469, %v470
    %v472 = vrot.slane %v471, 1
    %v473 = vadd.f32 %v471, %v472
    %v474 = vsel %vm466, %v421, 0.0
    %v475 = vrot.slane %v474, 4
    %v476 = vadd.f32 %v474, %v475
    %v477 = vrot.slane %v476, 2
    %v478 = vadd.f32 %v476, %v477
    %v479 = vrot.slane %v478, 1
    %v480 = vadd.f32 %v478, %v479
    %v481 = vsel %vm466, %v460, 0.0
    %v482 = vrot.slane %v481, 4
    %v483 = vadd.f32 %v481, %v482
    %v484 = vrot.slane %v483, 2
    %v485 = vadd.f32 %v483, %v484
    %v486 = vrot.slane %v485, 1
    %v487 = vadd.f32 %v485, %v486
    %v488 = vsel %vm466, %v462, 0.0
    %v489 = vrot.slane %v488, 4
    %v490 = vadd.f32 %v488, %v489
    %v491 = vrot.slane %v490, 2
    %v492 = vadd.f32 %v490, %v491
    %v493 = vrot.slane %v492, 1
    %v494 = vadd.f32 %v492, %v493
    %v495 = vrcp.pop 2.0
    %v496 = vmul.f32 %v473, %v495
    %v497 = vmul.f32 %v480, %v495
    %v498 = vmul.f32 %v487, %v495
    %v499 = vmul.f32 %v494, %v495
    %v500 = vsub.f32 %v419, %v496
    %v501 = vsub.f32 %v421, %v497
    %v502 = vsub.f32 %v460, %v498
    %v503 = vsub.f32 %v462, %v499
    %v504 = vmul.f32 %v500, %v500
    %v505 = vmul.f32 %v501, %v501
    %v506 = vmul.f32 %v502, %v502
    %v507 = vmul.f32 %v503, %v503
    %v508 = vsel %vm466, %v504, 0.0
    %v509 = vrot.slane %v508, 4
    %v510 = vadd.f32 %v508, %v509
    %v511 = vrot.slane %v510, 2
    %v512 = vadd.f32 %v510, %v511
    %v513 = vrot.slane %v512, 1
    %v514 = vadd.f32 %v512, %v513
    %v515 = vsel %vm466, %v505, 0.0
    %v516 = vrot.slane %v515, 4
    %v517 = vadd.f32 %v515, %v516
    %v518 = vrot.slane %v517, 2
    %v519 = vadd.f32 %v517, %v518
    %v520 = vrot.slane %v519, 1
    %v521 = vadd.f32 %v519, %v520
    %v522 = vsel %vm466, %v506, 0.0
    %v523 = vrot.slane %v522, 4
    %v524 = vadd.f32 %v522, %v523
    %v525 = vrot.slane %v524, 2
    %v526 = vadd.f32 %v524, %v525
    %v527 = vrot.slane %v526, 1
    %v528 = vadd.f32 %v526, %v527
    %v529 = vsel %vm466, %v507, 0.0
    %v530 = vrot.slane %v529, 4
    %v531 = vadd.f32 %v529, %v530
    %v532 = vrot.slane %v531, 2
    %v533 = vadd.f32 %v531, %v532
    %v534 = vrot.slane %v533, 1
    %v535 = vadd.f32 %v533, %v534
    %v536 = vmul.f32 %v514, %v495
    %v537 = vmul.f32 %v521, %v495
    %v538 = vmul.f32 %v528, %v495
    %v539 = vmul.f32 %v535, %v495
    %v540 = vadd.f32 %v536, 1e-05
    %v541 = vadd.f32 %v537, 1e-05
    %v542 = vadd.f32 %v538, 1e-05
    %v543 = vadd.f32 %v539, 1e-05
    %v544 = vrsqrt.pop %v540
    %v545 = vrsqrt.pop %v541
    %v546 = vrsqrt.pop %v542
    %v547 = vrsqrt.pop %v543
    %v548 = vmul.f32 %v500, %v544
    %v549 = vmul.f32 %v501, %v545
    %v550 = vmul.f32 %v502, %v546
    %v551 = vmul.f32 %v503, %v547
    %v553 = vlaneseq
    %v554 = vshrl.u32 %v553, 7
    %v555 = vsub.s32 0, %v554
    %v556 = vrot.slane %v157, %v555
    %v557 = vlaneseq
    %v558 = vshrl.u32 %v557, 7
    %v559 = vsub.s32 1, %v558
    %v560 = vrot.slane %v157, %v559
    %v561 = vlaneseq
    %v562 = vshrl.u32 %v561, 7
    %v563 = vsub.s32 2, %v562
    %v564 = vrot.slane %v157, %v563
    %v565 = vlaneseq
    %v566 = vshrl.u32 %v565, 7
    %v567 = vsub.s32 3, %v566
    %v568 = vrot.slane %v157, %v567
    %v573 = vmul.f32 %v548, %v556
    %v574 = vmul.f32 %v549, %v560
    %v575 = vmul.f32 %v550, %v564
    %v576 = vmul.f32 %v551, %v568
    %v578 = vlaneseq
    %v579 = vshrl.u32 %v578, 7
    %v580 = vsub.s32 0, %v579
    %v581 = vrot.slane %v158, %v580
    %v582 = vlaneseq
    %v583 = vshrl.u32 %v582, 7
    %v584 = vsub.s32 1, %v583
    %v585 = vrot.slane %v158, %v584
    %v586 = vlaneseq
    %v587 = vshrl.u32 %v586, 7
    %v588 = vsub.s32 2, %v587
    %v589 = vrot.slane %v158, %v588
    %v590 = vlaneseq
    %v591 = vshrl.u32 %v590, 7
    %v592 = vsub.s32 3, %v591
    %v593 = vrot.slane %v158, %v592
    %v598 = vadd.f32 %v573, %v581
    %v599 = vadd.f32 %v574, %v585
    %v600 = vadd.f32 %v575, %v589
    %v601 = vadd.f32 %v576, %v593
    %v602 = vmax.f32 %v598, 0.0
    %v603 = vmax.f32 %v599, 0.0
    %v604 = vmax.f32 %v600, 0.0
    %v605 = vmax.f32 %v601, 0.0
    %v606 = vpack.c.bf16 %v602, %v602
    %v607 = vpack.c.bf16 %v603, %v603
    %v608 = vpack.c.bf16 %v604, %v604
    %v609 = vpack.c.bf16 %v605, %v605
    %v642 = vunpack.c.l.b16 %v159
    %v643 = vunpack.c.l.b16 %v160
    %v644 = vunpack.c.l.b16 %v161
    %v645 = vunpack.c.l.b16 %v162
    %v646 = vunpack.c.l.b16 %v163
    %v647 = vunpack.c.l.b16 %v164
    %v648 = vunpack.c.l.b16 %v165
    %v649 = vunpack.c.l.b16 %v166
    %v650 = vunpack.c.l.b16 %v167
    %v651 = vunpack.c.l.b16 %v168
    %v652 = vunpack.c.l.b16 %v169
    %v653 = vunpack.c.l.b16 %v170
    %v654 = vunpack.c.l.b16 %v171
    %v655 = vunpack.c.l.b16 %v172
    %v656 = vunpack.c.l.b16 %v173
    %v657 = vunpack.c.l.b16 %v174
    %v658 = vunpack.c.l.b16 %v175
    %v659 = vunpack.c.l.b16 %v176
    %v660 = vunpack.c.l.b16 %v177
    %v661 = vunpack.c.l.b16 %v178
    %v662 = vunpack.c.l.b16 %v179
    %v663 = vunpack.c.l.b16 %v180
    %v664 = vunpack.c.l.b16 %v181
    %v665 = vunpack.c.l.b16 %v182
    %v666 = vunpack.c.l.b16 %v183
    %v667 = vunpack.c.l.b16 %v184
    %v668 = vunpack.c.l.b16 %v185
    %v669 = vunpack.c.l.b16 %v186
    %v670 = vunpack.c.l.b16 %v187
    %v671 = vunpack.c.l.b16 %v188
    %v672 = vunpack.c.l.b16 %v189
    %v673 = vunpack.c.l.b16 %v190
    %v674 = vpack.c.b16 %v643, %v642
    %v675 = vpack.c.b16 %v645, %v644
    %v676 = vpack.c.b16 %v647, %v646
    %v677 = vpack.c.b16 %v649, %v648
    %v678 = vpack.c.b16 %v651, %v650
    %v679 = vpack.c.b16 %v653, %v652
    %v680 = vpack.c.b16 %v655, %v654
    %v681 = vpack.c.b16 %v657, %v656
    %v682 = vpack.c.b16 %v659, %v658
    %v683 = vpack.c.b16 %v661, %v660
    %v684 = vpack.c.b16 %v663, %v662
    %v685 = vpack.c.b16 %v665, %v664
    %v686 = vpack.c.b16 %v667, %v666
    %v687 = vpack.c.b16 %v669, %v668
    %v688 = vpack.c.b16 %v671, %v670
    %v689 = vpack.c.b16 %v673, %v672
    %706 = vmatprep.subr.bf16.mxu0 0
    %707 = vmatpush1.bf16.msra.mxu0 %v681
    %708 = vmatprep.subr.bf16.mxu0 0
    %709 = vmatpush1.bf16.msra.mxu0 %v680
    %710 = vmatprep.subr.bf16.mxu0 0
    %711 = vmatpush1.bf16.msra.mxu0 %v679
    %712 = vmatprep.subr.bf16.mxu0 0
    %713 = vmatpush1.bf16.msra.mxu0 %v678
    %714 = vmatprep.subr.bf16.mxu0 0
    %715 = vmatpush1.bf16.msra.mxu0 %v677
    %716 = vmatprep.subr.bf16.mxu0 0
    %717 = vmatpush1.bf16.msra.mxu0 %v676
    %718 = vmatprep.subr.bf16.mxu0 0
    %719 = vmatpush1.bf16.msra.mxu0 %v675
    %720 = vmatprep.subr.bf16.mxu0 0
    %721 = vmatpush1.bf16.msra.mxu0 %v674
    %722 = vmatprep.subr.bf16.mxu0 0
    %723 = vmatpush2.bf16.msra.mxu0 %v689
    %724 = vmatprep.subr.bf16.mxu0 0
    %725 = vmatpush2.bf16.msra.mxu0 %v688
    %726 = vmatprep.subr.bf16.mxu0 0
    %727 = vmatpush2.bf16.msra.mxu0 %v687
    %728 = vmatprep.subr.bf16.mxu0 0
    %729 = vmatpush2.bf16.msra.mxu0 %v686
    %730 = vmatprep.subr.bf16.mxu0 0
    %731 = vmatpush2.bf16.msra.mxu0 %v685
    %732 = vmatprep.subr.bf16.mxu0 0
    %733 = vmatpush2.bf16.msra.mxu0 %v684
    %734 = vmatprep.subr.bf16.mxu0 0
    %735 = vmatpush2.bf16.msra.mxu0 %v683
    %736 = vmatprep.subr.bf16.mxu0 0
    %737 = vmatpush2.bf16.msra.mxu0 %v682
    %738 = vmatprep.mubr.bf16.mxu0 %v607
    %739 = vmatmul.mubr.bf16.gmra.mxu0 %v606
    %v740 = vpop.f32.mrf.mxu0
    %v741 = vadd.f32 0.0, %v740
    %v742 = vpop.f32.mrf.mxu0
    %v743 = vpop.f32.mrf.mxu0
    %v744 = vpop.f32.mrf.mxu0
    %745 = vdwg.mxu0
    %v778 = vunpack.c.l.b16 %v191
    %v779 = vunpack.c.l.b16 %v192
    %v780 = vunpack.c.l.b16 %v193
    %v781 = vunpack.c.l.b16 %v194
    %v782 = vunpack.c.l.b16 %v195
    %v783 = vunpack.c.l.b16 %v196
    %v784 = vunpack.c.l.b16 %v197
    %v785 = vunpack.c.l.b16 %v198
    %v786 = vunpack.c.l.b16 %v199
    %v787 = vunpack.c.l.b16 %v200
    %v788 = vunpack.c.l.b16 %v201
    %v789 = vunpack.c.l.b16 %v202
    %v790 = vunpack.c.l.b16 %v203
    %v791 = vunpack.c.l.b16 %v204
    %v792 = vunpack.c.l.b16 %v205
    %v793 = vunpack.c.l.b16 %v206
    %v794 = vunpack.c.l.b16 %v207
    %v795 = vunpack.c.l.b16 %v208
    %v796 = vunpack.c.l.b16 %v209
    %v797 = vunpack.c.l.b16 %v210
    %v798 = vunpack.c.l.b16 %v211
    %v799 = vunpack.c.l.b16 %v212
    %v800 = vunpack.c.l.b16 %v213
    %v801 = vunpack.c.l.b16 %v214
    %v802 = vunpack.c.l.b16 %v215
    %v803 = vunpack.c.l.b16 %v216
    %v804 = vunpack.c.l.b16 %v217
    %v805 = vunpack.c.l.b16 %v218
    %v806 = vunpack.c.l.b16 %v219
    %v807 = vunpack.c.l.b16 %v220
    %v808 = vunpack.c.l.b16 %v221
    %v809 = vunpack.c.l.b16 %v222
    %v810 = vpack.c.b16 %v779, %v778
    %v811 = vpack.c.b16 %v781, %v780
    %v812 = vpack.c.b16 %v783, %v782
    %v813 = vpack.c.b16 %v785, %v784
    %v814 = vpack.c.b16 %v787, %v786
    %v815 = vpack.c.b16 %v789, %v788
    %v816 = vpack.c.b16 %v791, %v790
    %v817 = vpack.c.b16 %v793, %v792
    %v818 = vpack.c.b16 %v795, %v794
    %v819 = vpack.c.b16 %v797, %v796
    %v820 = vpack.c.b16 %v799, %v798
    %v821 = vpack.c.b16 %v801, %v800
    %v822 = vpack.c.b16 %v803, %v802
    %v823 = vpack.c.b16 %v805, %v804
    %v824 = vpack.c.b16 %v807, %v806
    %v825 = vpack.c.b16 %v809, %v808
    %842 = vmatprep.subr.bf16.mxu0 0
    %843 = vmatpush1.bf16.msra.mxu0 %v817
    %844 = vmatprep.subr.bf16.mxu0 0
    %845 = vmatpush1.bf16.msra.mxu0 %v816
    %846 = vmatprep.subr.bf16.mxu0 0
    %847 = vmatpush1.bf16.msra.mxu0 %v815
    %848 = vmatprep.subr.bf16.mxu0 0
    %849 = vmatpush1.bf16.msra.mxu0 %v814
    %850 = vmatprep.subr.bf16.mxu0 0
    %851 = vmatpush1.bf16.msra.mxu0 %v813
    %852 = vmatprep.subr.bf16.mxu0 0
    %853 = vmatpush1.bf16.msra.mxu0 %v812
    %854 = vmatprep.subr.bf16.mxu0 0
    %855 = vmatpush1.bf16.msra.mxu0 %v811
    %856 = vmatprep.subr.bf16.mxu0 0
    %857 = vmatpush1.bf16.msra.mxu0 %v810
    %858 = vmatprep.subr.bf16.mxu0 0
    %859 = vmatpush2.bf16.msra.mxu0 %v825
    %860 = vmatprep.subr.bf16.mxu0 0
    %861 = vmatpush2.bf16.msra.mxu0 %v824
    %862 = vmatprep.subr.bf16.mxu0 0
    %863 = vmatpush2.bf16.msra.mxu0 %v823
    %864 = vmatprep.subr.bf16.mxu0 0
    %865 = vmatpush2.bf16.msra.mxu0 %v822
    %866 = vmatprep.subr.bf16.mxu0 0
    %867 = vmatpush2.bf16.msra.mxu0 %v821
    %868 = vmatprep.subr.bf16.mxu0 0
    %869 = vmatpush2.bf16.msra.mxu0 %v820
    %870 = vmatprep.subr.bf16.mxu0 0
    %871 = vmatpush2.bf16.msra.mxu0 %v819
    %872 = vmatprep.subr.bf16.mxu0 0
    %873 = vmatpush2.bf16.msra.mxu0 %v818
    %874 = vmatprep.mubr.bf16.mxu0 %v609
    %875 = vmatmul.mubr.bf16.gmra.mxu0 %v608
    %v876 = vpop.f32.mrf.mxu0
    %v877 = vadd.f32 0.0, %v876
    %v878 = vpop.f32.mrf.mxu0
    %v879 = vpop.f32.mrf.mxu0
    %v880 = vpop.f32.mrf.mxu0
    %881 = vdwg.mxu0
    %v882 = vsel %vm466, %v741, 0.0
    %v883 = vrot.slane %v882, 4
    %v884 = vadd.f32 %v882, %v883
    %v885 = vrot.slane %v884, 2
    %v886 = vadd.f32 %v884, %v885
    %v887 = vrot.slane %v886, 1
    %v888 = vadd.f32 %v886, %v887
    %v889 = vmul.f32 %v888, %v495
    %v890 = vsub.f32 %v741, %v889
    %v891 = vmul.f32 %v890, %v890
    %v892 = vsel %vm466, %v891, 0.0
    %v893 = vrot.slane %v892, 4
    %v894 = vadd.f32 %v892, %v893
    %v895 = vrot.slane %v894, 2
    %v896 = vadd.f32 %v894, %v895
    %v897 = vrot.slane %v896, 1
    %v898 = vadd.f32 %v896, %v897
    %v899 = vmul.f32 %v898, %v495
    %v900 = vadd.f32 %v899, 1e-05
    %v901 = vrsqrt.pop %v900
    %v902 = vmul.f32 %v890, %v901
    %v903 = vsel %vm466, %v877, 0.0
    %v904 = vrot.slane %v903, 4
    %v905 = vadd.f32 %v903, %v904
    %v906 = vrot.slane %v905, 2
    %v907 = vadd.f32 %v905, %v906
    %v908 = vrot.slane %v907, 1
    %v909 = vadd.f32 %v907, %v908
    %v910 = vmul.f32 %v909, %v495
    %v911 = vsub.f32 %v877, %v910
    %v912 = vmul.f32 %v911, %v911
    %v913 = vsel %vm466, %v912, 0.0
    %v914 = vrot.slane %v913, 4
    %v915 = vadd.f32 %v913, %v914
    %v916 = vrot.slane %v915, 2
    %v917 = vadd.f32 %v915, %v916
    %v918 = vrot.slane %v917, 1
    %v919 = vadd.f32 %v917, %v918
    %v920 = vmul.f32 %v919, %v495
    %v921 = vadd.f32 %v920, 1e-05
    %v922 = vrsqrt.pop %v921
    %v923 = vmul.f32 %v911, %v922
    %v924 = vld [vmem:[%s3] sm:$0x3]
    %v925 = vld [vmem:[%s15] sm:$0xff]
    %v926 = vld [vmem:[%s15 + $0x8] sm:$0xff]
    %v927 = vld [vmem:[%s15 + $0x10] sm:$0xff]
    %v928 = vld [vmem:[%s15 + $0x18] sm:$0xff]
    %v929 = vld [vmem:[%s15 + $0x20] sm:$0xff]
    %v930 = vld [vmem:[%s15 + $0x28] sm:$0xff]
    %v931 = vld [vmem:[%s15 + $0x30] sm:$0xff]
    %v932 = vld [vmem:[%s15 + $0x38] sm:$0xff]
    %v933 = vld [vmem:[%s15 + $0x40] sm:$0xff]
    %v934 = vld [vmem:[%s15 + $0x48] sm:$0xff]
    %v935 = vld [vmem:[%s15 + $0x50] sm:$0xff]
    %v936 = vld [vmem:[%s15 + $0x58] sm:$0xff]
    %v937 = vld [vmem:[%s15 + $0x60] sm:$0xff]
    %v938 = vld [vmem:[%s15 + $0x68] sm:$0xff]
    %v939 = vld [vmem:[%s15 + $0x70] sm:$0xff]
    %v940 = vld [vmem:[%s15 + $0x78] sm:$0xff]
    %v941 = vld [vmem:[%s15 + $0x80] sm:$0xff]
    %v942 = vld [vmem:[%s15 + $0x88] sm:$0xff]
    %v943 = vld [vmem:[%s15 + $0x90] sm:$0xff]
    %v944 = vld [vmem:[%s15 + $0x98] sm:$0xff]
    %v945 = vld [vmem:[%s15 + $0xa0] sm:$0xff]
    %v946 = vld [vmem:[%s15 + $0xa8] sm:$0xff]
    %v947 = vld [vmem:[%s15 + $0xb0] sm:$0xff]
    %v948 = vld [vmem:[%s15 + $0xb8] sm:$0xff]
    %v949 = vld [vmem:[%s15 + $0xc0] sm:$0xff]
    %v950 = vld [vmem:[%s15 + $0xc8] sm:$0xff]
    %v951 = vld [vmem:[%s15 + $0xd0] sm:$0xff]
    %v952 = vld [vmem:[%s15 + $0xd8] sm:$0xff]
    %v953 = vld [vmem:[%s15 + $0xe0] sm:$0xff]
    %v954 = vld [vmem:[%s15 + $0xe8] sm:$0xff]
    %v955 = vld [vmem:[%s15 + $0xf0] sm:$0xff]
    %v956 = vld [vmem:[%s15 + $0xf8] sm:$0xff]
    %v957 = vld [vmem:[%s17] sm:$0xf]
    %v958 = vld [vmem:[%s19] sm:$0xf]
    %v959 = vld [vmem:[%s21] sm:$0xf]
    %v960 = vld [vmem:[%s21 + $0x4] sm:$0xf]
    %v961 = vld [vmem:[%s21 + $0x8] sm:$0xf]
    %v962 = vld [vmem:[%s21 + $0xc] sm:$0xf]
    %v963 = vld [vmem:[%s21 + $0x10] sm:$0xf]
    %v964 = vld [vmem:[%s21 + $0x14] sm:$0xf]
    %v965 = vld [vmem:[%s21 + $0x18] sm:$0xf]
    %v966 = vld [vmem:[%s21 + $0x1c] sm:$0xf]
    %v967 = vld [vmem:[%s21 + $0x20] sm:$0xf]
    %v968 = vld [vmem:[%s21 + $0x24] sm:$0xf]
    %v969 = vld [vmem:[%s21 + $0x28] sm:$0xf]
    %v970 = vld [vmem:[%s21 + $0x2c] sm:$0xf]
    %v971 = vld [vmem:[%s21 + $0x30] sm:$0xf]
    %v972 = vld [vmem:[%s21 + $0x34] sm:$0xf]
    %v973 = vld [vmem:[%s21 + $0x38] sm:$0xf]
    %v974 = vld [vmem:[%s21 + $0x3c] sm:$0xf]
    %v975 = vld [vmem:[%s21 + $0x40] sm:$0xf]
    %v976 = vld [vmem:[%s21 + $0x44] sm:$0xf]
    %v977 = vld [vmem:[%s21 + $0x48] sm:$0xf]
    %v978 = vld [vmem:[%s21 + $0x4c] sm:$0xf]
    %v979 = vld [vmem:[%s21 + $0x50] sm:$0xf]
    %v980 = vld [vmem:[%s21 + $0x54] sm:$0xf]
    %v981 = vld [vmem:[%s21 + $0x58] sm:$0xf]
    %v982 = vld [vmem:[%s21 + $0x5c] sm:$0xf]
    %v983 = vld [vmem:[%s21 + $0x60] sm:$0xf]
    %v984 = vld [vmem:[%s21 + $0x64] sm:$0xf]
    %v985 = vld [vmem:[%s21 + $0x68] sm:$0xf]
    %v986 = vld [vmem:[%s21 + $0x6c] sm:$0xf]
    %v987 = vld [vmem:[%s21 + $0x70] sm:$0xf]
    %v988 = vld [vmem:[%s21 + $0x74] sm:$0xf]
    %v989 = vld [vmem:[%s21 + $0x78] sm:$0xf]
    %v990 = vld [vmem:[%s21 + $0x7c] sm:$0xf]
    %v991 = vld [vmem:[%s23] sm:$0xf]
    %v992 = vld [vmem:[%s23 + $0x4] sm:$0xf]
    %v993 = vld [vmem:[%s23 + $0x8] sm:$0xf]
    %v994 = vld [vmem:[%s23 + $0xc] sm:$0xf]
    %v995 = vld [vmem:[%s23 + $0x10] sm:$0xf]
    %v996 = vld [vmem:[%s23 + $0x14] sm:$0xf]
    %v997 = vld [vmem:[%s23 + $0x18] sm:$0xf]
    %v998 = vld [vmem:[%s23 + $0x1c] sm:$0xf]
    %v999 = vld [vmem:[%s23 + $0x20] sm:$0xf]
    %v1000 = vld [vmem:[%s23 + $0x24] sm:$0xf]
    %v1001 = vld [vmem:[%s23 + $0x28] sm:$0xf]
    %v1002 = vld [vmem:[%s23 + $0x2c] sm:$0xf]
    %v1003 = vld [vmem:[%s23 + $0x30] sm:$0xf]
    %v1004 = vld [vmem:[%s23 + $0x34] sm:$0xf]
    %v1005 = vld [vmem:[%s23 + $0x38] sm:$0xf]
    %v1006 = vld [vmem:[%s23 + $0x3c] sm:$0xf]
    %v1007 = vld [vmem:[%s23 + $0x40] sm:$0xf]
    %v1008 = vld [vmem:[%s23 + $0x44] sm:$0xf]
    %v1009 = vld [vmem:[%s23 + $0x48] sm:$0xf]
    %v1010 = vld [vmem:[%s23 + $0x4c] sm:$0xf]
    %v1011 = vld [vmem:[%s23 + $0x50] sm:$0xf]
    %v1012 = vld [vmem:[%s23 + $0x54] sm:$0xf]
    %v1013 = vld [vmem:[%s23 + $0x58] sm:$0xf]
    %v1014 = vld [vmem:[%s23 + $0x5c] sm:$0xf]
    %v1015 = vld [vmem:[%s23 + $0x60] sm:$0xf]
    %v1016 = vld [vmem:[%s23 + $0x64] sm:$0xf]
    %v1017 = vld [vmem:[%s23 + $0x68] sm:$0xf]
    %v1018 = vld [vmem:[%s23 + $0x6c] sm:$0xf]
    %v1019 = vld [vmem:[%s23 + $0x70] sm:$0xf]
    %v1020 = vld [vmem:[%s23 + $0x74] sm:$0xf]
    %v1021 = vld [vmem:[%s23 + $0x78] sm:$0xf]
    %v1022 = vld [vmem:[%s23 + $0x7c] sm:$0xf]
    %v1023 = vpack.c.bf16 %v924, %v924
    %v1056 = vunpack.c.l.b16 %v925
    %v1057 = vunpack.c.h.b16 %v925
    %v1058 = vunpack.c.l.b16 %v926
    %v1059 = vunpack.c.h.b16 %v926
    %v1060 = vunpack.c.l.b16 %v927
    %v1061 = vunpack.c.h.b16 %v927
    %v1062 = vunpack.c.l.b16 %v928
    %v1063 = vunpack.c.h.b16 %v928
    %v1064 = vunpack.c.l.b16 %v929
    %v1065 = vunpack.c.h.b16 %v929
    %v1066 = vunpack.c.l.b16 %v930
    %v1067 = vunpack.c.h.b16 %v930
    %v1068 = vunpack.c.l.b16 %v931
    %v1069 = vunpack.c.h.b16 %v931
    %v1070 = vunpack.c.l.b16 %v932
    %v1071 = vunpack.c.h.b16 %v932
    %v1072 = vunpack.c.l.b16 %v933
    %v1073 = vunpack.c.h.b16 %v933
    %v1074 = vunpack.c.l.b16 %v934
    %v1075 = vunpack.c.h.b16 %v934
    %v1076 = vunpack.c.l.b16 %v935
    %v1077 = vunpack.c.h.b16 %v935
    %v1078 = vunpack.c.l.b16 %v936
    %v1079 = vunpack.c.h.b16 %v936
    %v1080 = vunpack.c.l.b16 %v937
    %v1081 = vunpack.c.h.b16 %v937
    %v1082 = vunpack.c.l.b16 %v938
    %v1083 = vunpack.c.h.b16 %v938
    %v1084 = vunpack.c.l.b16 %v939
    %v1085 = vunpack.c.h.b16 %v939
    %v1086 = vunpack.c.l.b16 %v940
    %v1087 = vunpack.c.h.b16 %v940
    %v1088 = vunpack.c.l.b16 %v941
    %v1089 = vunpack.c.h.b16 %v941
    %v1090 = vunpack.c.l.b16 %v942
    %v1091 = vunpack.c.h.b16 %v942
    %v1092 = vunpack.c.l.b16 %v943
    %v1093 = vunpack.c.h.b16 %v943
    %v1094 = vunpack.c.l.b16 %v944
    %v1095 = vunpack.c.h.b16 %v944
    %v1096 = vunpack.c.l.b16 %v945
    %v1097 = vunpack.c.h.b16 %v945
    %v1098 = vunpack.c.l.b16 %v946
    %v1099 = vunpack.c.h.b16 %v946
    %v1100 = vunpack.c.l.b16 %v947
    %v1101 = vunpack.c.h.b16 %v947
    %v1102 = vunpack.c.l.b16 %v948
    %v1103 = vunpack.c.h.b16 %v948
    %v1104 = vunpack.c.l.b16 %v949
    %v1105 = vunpack.c.h.b16 %v949
    %v1106 = vunpack.c.l.b16 %v950
    %v1107 = vunpack.c.h.b16 %v950
    %v1108 = vunpack.c.l.b16 %v951
    %v1109 = vunpack.c.h.b16 %v951
    %v1110 = vunpack.c.l.b16 %v952
    %v1111 = vunpack.c.h.b16 %v952
    %v1112 = vunpack.c.l.b16 %v953
    %v1113 = vunpack.c.h.b16 %v953
    %v1114 = vunpack.c.l.b16 %v954
    %v1115 = vunpack.c.h.b16 %v954
    %v1116 = vunpack.c.l.b16 %v955
    %v1117 = vunpack.c.h.b16 %v955
    %v1118 = vunpack.c.l.b16 %v956
    %v1119 = vunpack.c.h.b16 %v956
    %v1120 = vpack.c.b16 %v1060, %v1056
    %v1121 = vpack.c.b16 %v1061, %v1057
    %v1122 = vpack.c.b16 %v1062, %v1058
    %v1123 = vpack.c.b16 %v1063, %v1059
    %v1124 = vpack.c.b16 %v1068, %v1064
    %v1125 = vpack.c.b16 %v1069, %v1065
    %v1126 = vpack.c.b16 %v1070, %v1066
    %v1127 = vpack.c.b16 %v1071, %v1067
    %v1128 = vpack.c.b16 %v1076, %v1072
    %v1129 = vpack.c.b16 %v1077, %v1073
    %v1130 = vpack.c.b16 %v1078, %v1074
    %v1131 = vpack.c.b16 %v1079, %v1075
    %v1132 = vpack.c.b16 %v1084, %v1080
    %v1133 = vpack.c.b16 %v1085, %v1081
    %v1134 = vpack.c.b16 %v1086, %v1082
    %v1135 = vpack.c.b16 %v1087, %v1083
    %v1136 = vpack.c.b16 %v1092, %v1088
    %v1137 = vpack.c.b16 %v1093, %v1089
    %v1138 = vpack.c.b16 %v1094, %v1090
    %v1139 = vpack.c.b16 %v1095, %v1091
    %v1140 = vpack.c.b16 %v1100, %v1096
    %v1141 = vpack.c.b16 %v1101, %v1097
    %v1142 = vpack.c.b16 %v1102, %v1098
    %v1143 = vpack.c.b16 %v1103, %v1099
    %v1144 = vpack.c.b16 %v1108, %v1104
    %v1145 = vpack.c.b16 %v1109, %v1105
    %v1146 = vpack.c.b16 %v1110, %v1106
    %v1147 = vpack.c.b16 %v1111, %v1107
    %v1148 = vpack.c.b16 %v1116, %v1112
    %v1149 = vpack.c.b16 %v1117, %v1113
    %v1150 = vpack.c.b16 %v1118, %v1114
    %v1151 = vpack.c.b16 %v1119, %v1115
    %1184 = vmatprep.subr.bf16.mxu0 %v1149
    %1185 = vmatpush1.bf16.msra.mxu0 %v1148
    %1186 = vmatprep.subr.bf16.mxu0 %v1145
    %1187 = vmatpush1.bf16.msra.mxu0 %v1144
    %1188 = vmatprep.subr.bf16.mxu0 %v1141
    %1189 = vmatpush1.bf16.msra.mxu0 %v1140
    %1190 = vmatprep.subr.bf16.mxu0 %v1137
    %1191 = vmatpush1.bf16.msra.mxu0 %v1136
    %1192 = vmatprep.subr.bf16.mxu0 %v1133
    %1193 = vmatpush1.bf16.msra.mxu0 %v1132
    %1194 = vmatprep.subr.bf16.mxu0 %v1129
    %1195 = vmatpush1.bf16.msra.mxu0 %v1128
    %1196 = vmatprep.subr.bf16.mxu0 %v1125
    %1197 = vmatpush1.bf16.msra.mxu0 %v1124
    %1198 = vmatprep.subr.bf16.mxu0 %v1121
    %1199 = vmatpush1.bf16.msra.mxu0 %v1120
    %1200 = vmatprep.subr.bf16.mxu0 0
    %1201 = vmatpush2.bf16.msra.mxu0 0
    %1202 = vmatprep.subr.bf16.mxu0 0
    %1203 = vmatpush2.bf16.msra.mxu0 0
    %1204 = vmatprep.subr.bf16.mxu0 0
    %1205 = vmatpush2.bf16.msra.mxu0 0
    %1206 = vmatprep.subr.bf16.mxu0 0
    %1207 = vmatpush2.bf16.msra.mxu0 0
    %1208 = vmatprep.subr.bf16.mxu0 0
    %1209 = vmatpush2.bf16.msra.mxu0 0
    %1210 = vmatprep.subr.bf16.mxu0 0
    %1211 = vmatpush2.bf16.msra.mxu0 0
    %1212 = vmatprep.subr.bf16.mxu0 0
    %1213 = vmatpush2.bf16.msra.mxu0 0
    %1214 = vmatprep.subr.bf16.mxu0 0
    %1215 = vmatpush2.bf16.msra.mxu0 0
    %1216 = vmatprep.mubr.bf16.mxu0 0
    %1217 = vmatmul.mubr.bf16.gmra.mxu0 %v1023
    %v1218 = vpop.f32.mrf.mxu0
    %v1219 = vadd.f32 0.0, %v1218
    %v1220 = vpop.f32.mrf.mxu0
    %v1221 = vadd.f32 0.0, %v1220
    %v1222 = vpop.f32.mrf.mxu0
    %v1223 = vpop.f32.mrf.mxu0
    %1224 = vdwg.mxu0
    %1225 = vmatprep.subr.bf16.mxu0 %v1151
    %1226 = vmatpush1.bf16.msra.mxu0 %v1150
    %1227 = vmatprep.subr.bf16.mxu0 %v1147
    %1228 = vmatpush1.bf16.msra.mxu0 %v1146
    %1229 = vmatprep.subr.bf16.mxu0 %v1143
    %1230 = vmatpush1.bf16.msra.mxu0 %v1142
    %1231 = vmatprep.subr.bf16.mxu0 %v1139
    %1232 = vmatpush1.bf16.msra.mxu0 %v1138
    %1233 = vmatprep.subr.bf16.mxu0 %v1135
    %1234 = vmatpush1.bf16.msra.mxu0 %v1134
    %1235 = vmatprep.subr.bf16.mxu0 %v1131
    %1236 = vmatpush1.bf16.msra.mxu0 %v1130
    %1237 = vmatprep.subr.bf16.mxu0 %v1127
    %1238 = vmatpush1.bf16.msra.mxu0 %v1126
    %1239 = vmatprep.subr.bf16.mxu0 %v1123
    %1240 = vmatpush1.bf16.msra.mxu0 %v1122
    %1241 = vmatprep.subr.bf16.mxu0 0
    %1242 = vmatpush2.bf16.msra.mxu0 0
    %1243 = vmatprep.subr.bf16.mxu0 0
    %1244 = vmatpush2.bf16.msra.mxu0 0
    %1245 = vmatprep.subr.bf16.mxu0 0
    %1246 = vmatpush2.bf16.msra.mxu0 0
    %1247 = vmatprep.subr.bf16.mxu0 0
    %1248 = vmatpush2.bf16.msra.mxu0 0
    %1249 = vmatprep.subr.bf16.mxu0 0
    %1250 = vmatpush2.bf16.msra.mxu0 0
    %1251 = vmatprep.subr.bf16.mxu0 0
    %1252 = vmatpush2.bf16.msra.mxu0 0
    %1253 = vmatprep.subr.bf16.mxu0 0
    %1254 = vmatpush2.bf16.msra.mxu0 0
    %1255 = vmatprep.subr.bf16.mxu0 0
    %1256 = vmatpush2.bf16.msra.mxu0 0
    %1257 = vmatprep.mubr.bf16.mxu0 0
    %1258 = vmatmul.mubr.bf16.gmra.mxu0 %v1023
    %v1259 = vpop.f32.mrf.mxu0
    %v1260 = vadd.f32 0.0, %v1259
    %v1261 = vpop.f32.mrf.mxu0
    %v1262 = vadd.f32 0.0, %v1261
    %v1263 = vpop.f32.mrf.mxu0
    %v1264 = vpop.f32.mrf.mxu0
    %1265 = vdwg.mxu0
    %v1266 = vsel %vm466, %v1219, 0.0
    %v1267 = vrot.slane %v1266, 4
    %v1268 = vadd.f32 %v1266, %v1267
    %v1269 = vrot.slane %v1268, 2
    %v1270 = vadd.f32 %v1268, %v1269
    %v1271 = vrot.slane %v1270, 1
    %v1272 = vadd.f32 %v1270, %v1271
    %v1273 = vsel %vm466, %v1221, 0.0
    %v1274 = vrot.slane %v1273, 4
    %v1275 = vadd.f32 %v1273, %v1274
    %v1276 = vrot.slane %v1275, 2
    %v1277 = vadd.f32 %v1275, %v1276
    %v1278 = vrot.slane %v1277, 1
    %v1279 = vadd.f32 %v1277, %v1278
    %v1280 = vsel %vm466, %v1260, 0.0
    %v1281 = vrot.slane %v1280, 4
    %v1282 = vadd.f32 %v1280, %v1281
    %v1283 = vrot.slane %v1282, 2
    %v1284 = vadd.f32 %v1282, %v1283
    %v1285 = vrot.slane %v1284, 1
    %v1286 = vadd.f32 %v1284, %v1285
    %v1287 = vsel %vm466, %v1262, 0.0
    %v1288 = vrot.slane %v1287, 4
    %v1289 = vadd.f32 %v1287, %v1288
    %v1290 = vrot.slane %v1289, 2
    %v1291 = vadd.f32 %v1289, %v1290
    %v1292 = vrot.slane %v1291, 1
    %v1293 = vadd.f32 %v1291, %v1292
    %v1294 = vmul.f32 %v1272, %v495
    %v1295 = vmul.f32 %v1279, %v495
    %v1296 = vmul.f32 %v1286, %v495
    %v1297 = vmul.f32 %v1293, %v495
    %v1298 = vsub.f32 %v1219, %v1294
    %v1299 = vsub.f32 %v1221, %v1295
    %v1300 = vsub.f32 %v1260, %v1296
    %v1301 = vsub.f32 %v1262, %v1297
    %v1302 = vmul.f32 %v1298, %v1298
    %v1303 = vmul.f32 %v1299, %v1299
    %v1304 = vmul.f32 %v1300, %v1300
    %v1305 = vmul.f32 %v1301, %v1301
    %v1306 = vsel %vm466, %v1302, 0.0
    %v1307 = vrot.slane %v1306, 4
    %v1308 = vadd.f32 %v1306, %v1307
    %v1309 = vrot.slane %v1308, 2
    %v1310 = vadd.f32 %v1308, %v1309
    %v1311 = vrot.slane %v1310, 1
    %v1312 = vadd.f32 %v1310, %v1311
    %v1313 = vsel %vm466, %v1303, 0.0
    %v1314 = vrot.slane %v1313, 4
    %v1315 = vadd.f32 %v1313, %v1314
    %v1316 = vrot.slane %v1315, 2
    %v1317 = vadd.f32 %v1315, %v1316
    %v1318 = vrot.slane %v1317, 1
    %v1319 = vadd.f32 %v1317, %v1318
    %v1320 = vsel %vm466, %v1304, 0.0
    %v1321 = vrot.slane %v1320, 4
    %v1322 = vadd.f32 %v1320, %v1321
    %v1323 = vrot.slane %v1322, 2
    %v1324 = vadd.f32 %v1322, %v1323
    %v1325 = vrot.slane %v1324, 1
    %v1326 = vadd.f32 %v1324, %v1325
    %v1327 = vsel %vm466, %v1305, 0.0
    %v1328 = vrot.slane %v1327, 4
    %v1329 = vadd.f32 %v1327, %v1328
    %v1330 = vrot.slane %v1329, 2
    %v1331 = vadd.f32 %v1329, %v1330
    %v1332 = vrot.slane %v1331, 1
    %v1333 = vadd.f32 %v1331, %v1332
    %v1334 = vmul.f32 %v1312, %v495
    %v1335 = vmul.f32 %v1319, %v495
    %v1336 = vmul.f32 %v1326, %v495
    %v1337 = vmul.f32 %v1333, %v495
    %v1338 = vadd.f32 %v1334, 1e-05
    %v1339 = vadd.f32 %v1335, 1e-05
    %v1340 = vadd.f32 %v1336, 1e-05
    %v1341 = vadd.f32 %v1337, 1e-05
    %v1342 = vrsqrt.pop %v1338
    %v1343 = vrsqrt.pop %v1339
    %v1344 = vrsqrt.pop %v1340
    %v1345 = vrsqrt.pop %v1341
    %v1346 = vmul.f32 %v1298, %v1342
    %v1347 = vmul.f32 %v1299, %v1343
    %v1348 = vmul.f32 %v1300, %v1344
    %v1349 = vmul.f32 %v1301, %v1345
    %v1351 = vlaneseq
    %v1352 = vshrl.u32 %v1351, 7
    %v1353 = vsub.s32 0, %v1352
    %v1354 = vrot.slane %v957, %v1353
    %v1355 = vlaneseq
    %v1356 = vshrl.u32 %v1355, 7
    %v1357 = vsub.s32 1, %v1356
    %v1358 = vrot.slane %v957, %v1357
    %v1359 = vlaneseq
    %v1360 = vshrl.u32 %v1359, 7
    %v1361 = vsub.s32 2, %v1360
    %v1362 = vrot.slane %v957, %v1361
    %v1363 = vlaneseq
    %v1364 = vshrl.u32 %v1363, 7
    %v1365 = vsub.s32 3, %v1364
    %v1366 = vrot.slane %v957, %v1365
    %v1371 = vmul.f32 %v1346, %v1354
    %v1372 = vmul.f32 %v1347, %v1358
    %v1373 = vmul.f32 %v1348, %v1362
    %v1374 = vmul.f32 %v1349, %v1366
    %v1376 = vlaneseq
    %v1377 = vshrl.u32 %v1376, 7
    %v1378 = vsub.s32 0, %v1377
    %v1379 = vrot.slane %v958, %v1378
    %v1380 = vlaneseq
    %v1381 = vshrl.u32 %v1380, 7
    %v1382 = vsub.s32 1, %v1381
    %v1383 = vrot.slane %v958, %v1382
    %v1384 = vlaneseq
    %v1385 = vshrl.u32 %v1384, 7
    %v1386 = vsub.s32 2, %v1385
    %v1387 = vrot.slane %v958, %v1386
    %v1388 = vlaneseq
    %v1389 = vshrl.u32 %v1388, 7
    %v1390 = vsub.s32 3, %v1389
    %v1391 = vrot.slane %v958, %v1390
    %v1396 = vadd.f32 %v1371, %v1379
    %v1397 = vadd.f32 %v1372, %v1383
    %v1398 = vadd.f32 %v1373, %v1387
    %v1399 = vadd.f32 %v1374, %v1391
    %v1400 = vmax.f32 %v1396, 0.0
    %v1401 = vmax.f32 %v1397, 0.0
    %v1402 = vmax.f32 %v1398, 0.0
    %v1403 = vmax.f32 %v1399, 0.0
    %v1404 = vpack.c.bf16 %v1400, %v1400
    %v1405 = vpack.c.bf16 %v1401, %v1401
    %v1406 = vpack.c.bf16 %v1402, %v1402
    %v1407 = vpack.c.bf16 %v1403, %v1403
    %v1440 = vunpack.c.l.b16 %v959
    %v1441 = vunpack.c.l.b16 %v960
    %v1442 = vunpack.c.l.b16 %v961
    %v1443 = vunpack.c.l.b16 %v962
    %v1444 = vunpack.c.l.b16 %v963
    %v1445 = vunpack.c.l.b16 %v964
    %v1446 = vunpack.c.l.b16 %v965
    %v1447 = vunpack.c.l.b16 %v966
    %v1448 = vunpack.c.l.b16 %v967
    %v1449 = vunpack.c.l.b16 %v968
    %v1450 = vunpack.c.l.b16 %v969
    %v1451 = vunpack.c.l.b16 %v970
    %v1452 = vunpack.c.l.b16 %v971
    %v1453 = vunpack.c.l.b16 %v972
    %v1454 = vunpack.c.l.b16 %v973
    %v1455 = vunpack.c.l.b16 %v974
    %v1456 = vunpack.c.l.b16 %v975
    %v1457 = vunpack.c.l.b16 %v976
    %v1458 = vunpack.c.l.b16 %v977
    %v1459 = vunpack.c.l.b16 %v978
    %v1460 = vunpack.c.l.b16 %v979
    %v1461 = vunpack.c.l.b16 %v980
    %v1462 = vunpack.c.l.b16 %v981
    %v1463 = vunpack.c.l.b16 %v982
    %v1464 = vunpack.c.l.b16 %v983
    %v1465 = vunpack.c.l.b16 %v984
    %v1466 = vunpack.c.l.b16 %v985
    %v1467 = vunpack.c.l.b16 %v986
    %v1468 = vunpack.c.l.b16 %v987
    %v1469 = vunpack.c.l.b16 %v988
    %v1470 = vunpack.c.l.b16 %v989
    %v1471 = vunpack.c.l.b16 %v990
    %v1472 = vpack.c.b16 %v1441, %v1440
    %v1473 = vpack.c.b16 %v1443, %v1442
    %v1474 = vpack.c.b16 %v1445, %v1444
    %v1475 = vpack.c.b16 %v1447, %v1446
    %v1476 = vpack.c.b16 %v1449, %v1448
    %v1477 = vpack.c.b16 %v1451, %v1450
    %v1478 = vpack.c.b16 %v1453, %v1452
    %v1479 = vpack.c.b16 %v1455, %v1454
    %v1480 = vpack.c.b16 %v1457, %v1456
    %v1481 = vpack.c.b16 %v1459, %v1458
    %v1482 = vpack.c.b16 %v1461, %v1460
    %v1483 = vpack.c.b16 %v1463, %v1462
    %v1484 = vpack.c.b16 %v1465, %v1464
    %v1485 = vpack.c.b16 %v1467, %v1466
    %v1486 = vpack.c.b16 %v1469, %v1468
    %v1487 = vpack.c.b16 %v1471, %v1470
    %1504 = vmatprep.subr.bf16.mxu0 0
    %1505 = vmatpush1.bf16.msra.mxu0 %v1479
    %1506 = vmatprep.subr.bf16.mxu0 0
    %1507 = vmatpush1.bf16.msra.mxu0 %v1478
    %1508 = vmatprep.subr.bf16.mxu0 0
    %1509 = vmatpush1.bf16.msra.mxu0 %v1477
    %1510 = vmatprep.subr.bf16.mxu0 0
    %1511 = vmatpush1.bf16.msra.mxu0 %v1476
    %1512 = vmatprep.subr.bf16.mxu0 0
    %1513 = vmatpush1.bf16.msra.mxu0 %v1475
    %1514 = vmatprep.subr.bf16.mxu0 0
    %1515 = vmatpush1.bf16.msra.mxu0 %v1474
    %1516 = vmatprep.subr.bf16.mxu0 0
    %1517 = vmatpush1.bf16.msra.mxu0 %v1473
    %1518 = vmatprep.subr.bf16.mxu0 0
    %1519 = vmatpush1.bf16.msra.mxu0 %v1472
    %1520 = vmatprep.subr.bf16.mxu0 0
    %1521 = vmatpush2.bf16.msra.mxu0 %v1487
    %1522 = vmatprep.subr.bf16.mxu0 0
    %1523 = vmatpush2.bf16.msra.mxu0 %v1486
    %1524 = vmatprep.subr.bf16.mxu0 0
    %1525 = vmatpush2.bf16.msra.mxu0 %v1485
    %1526 = vmatprep.subr.bf16.mxu0 0
    %1527 = vmatpush2.bf16.msra.mxu0 %v1484
    %1528 = vmatprep.subr.bf16.mxu0 0
    %1529 = vmatpush2.bf16.msra.mxu0 %v1483
    %1530 = vmatprep.subr.bf16.mxu0 0
    %1531 = vmatpush2.bf16.msra.mxu0 %v1482
    %1532 = vmatprep.subr.bf16.mxu0 0
    %1533 = vmatpush2.bf16.msra.mxu0 %v1481
    %1534 = vmatprep.subr.bf16.mxu0 0
    %1535 = vmatpush2.bf16.msra.mxu0 %v1480
    %1536 = vmatprep.mubr.bf16.mxu0 %v1405
    %1537 = vmatmul.mubr.bf16.gmra.mxu0 %v1404
    %v1538 = vpop.f32.mrf.mxu0
    %v1539 = vadd.f32 0.0, %v1538
    %v1540 = vpop.f32.mrf.mxu0
    %v1541 = vpop.f32.mrf.mxu0
    %v1542 = vpop.f32.mrf.mxu0
    %1543 = vdwg.mxu0
    %v1576 = vunpack.c.l.b16 %v991
    %v1577 = vunpack.c.l.b16 %v992
    %v1578 = vunpack.c.l.b16 %v993
    %v1579 = vunpack.c.l.b16 %v994
    %v1580 = vunpack.c.l.b16 %v995
    %v1581 = vunpack.c.l.b16 %v996
    %v1582 = vunpack.c.l.b16 %v997
    %v1583 = vunpack.c.l.b16 %v998
    %v1584 = vunpack.c.l.b16 %v999
    %v1585 = vunpack.c.l.b16 %v1000
    %v1586 = vunpack.c.l.b16 %v1001
    %v1587 = vunpack.c.l.b16 %v1002
    %v1588 = vunpack.c.l.b16 %v1003
    %v1589 = vunpack.c.l.b16 %v1004
    %v1590 = vunpack.c.l.b16 %v1005
    %v1591 = vunpack.c.l.b16 %v1006
    %v1592 = vunpack.c.l.b16 %v1007
    %v1593 = vunpack.c.l.b16 %v1008
    %v1594 = vunpack.c.l.b16 %v1009
    %v1595 = vunpack.c.l.b16 %v1010
    %v1596 = vunpack.c.l.b16 %v1011
    %v1597 = vunpack.c.l.b16 %v1012
    %v1598 = vunpack.c.l.b16 %v1013
    %v1599 = vunpack.c.l.b16 %v1014
    %v1600 = vunpack.c.l.b16 %v1015
    %v1601 = vunpack.c.l.b16 %v1016
    %v1602 = vunpack.c.l.b16 %v1017
    %v1603 = vunpack.c.l.b16 %v1018
    %v1604 = vunpack.c.l.b16 %v1019
    %v1605 = vunpack.c.l.b16 %v1020
    %v1606 = vunpack.c.l.b16 %v1021
    %v1607 = vunpack.c.l.b16 %v1022
    %v1608 = vpack.c.b16 %v1577, %v1576
    %v1609 = vpack.c.b16 %v1579, %v1578
    %v1610 = vpack.c.b16 %v1581, %v1580
    %v1611 = vpack.c.b16 %v1583, %v1582
    %v1612 = vpack.c.b16 %v1585, %v1584
    %v1613 = vpack.c.b16 %v1587, %v1586
    %v1614 = vpack.c.b16 %v1589, %v1588
    %v1615 = vpack.c.b16 %v1591, %v1590
    %v1616 = vpack.c.b16 %v1593, %v1592
    %v1617 = vpack.c.b16 %v1595, %v1594
    %v1618 = vpack.c.b16 %v1597, %v1596
    %v1619 = vpack.c.b16 %v1599, %v1598
    %v1620 = vpack.c.b16 %v1601, %v1600
    %v1621 = vpack.c.b16 %v1603, %v1602
    %v1622 = vpack.c.b16 %v1605, %v1604
    %v1623 = vpack.c.b16 %v1607, %v1606
    %1640 = vmatprep.subr.bf16.mxu0 0
    %1641 = vmatpush1.bf16.msra.mxu0 %v1615
    %1642 = vmatprep.subr.bf16.mxu0 0
    %1643 = vmatpush1.bf16.msra.mxu0 %v1614
    %1644 = vmatprep.subr.bf16.mxu0 0
    %1645 = vmatpush1.bf16.msra.mxu0 %v1613
    %1646 = vmatprep.subr.bf16.mxu0 0
    %1647 = vmatpush1.bf16.msra.mxu0 %v1612
    %1648 = vmatprep.subr.bf16.mxu0 0
    %1649 = vmatpush1.bf16.msra.mxu0 %v1611
    %1650 = vmatprep.subr.bf16.mxu0 0
    %1651 = vmatpush1.bf16.msra.mxu0 %v1610
    %1652 = vmatprep.subr.bf16.mxu0 0
    %1653 = vmatpush1.bf16.msra.mxu0 %v1609
    %1654 = vmatprep.subr.bf16.mxu0 0
    %1655 = vmatpush1.bf16.msra.mxu0 %v1608
    %1656 = vmatprep.subr.bf16.mxu0 0
    %1657 = vmatpush2.bf16.msra.mxu0 %v1623
    %1658 = vmatprep.subr.bf16.mxu0 0
    %1659 = vmatpush2.bf16.msra.mxu0 %v1622
    %1660 = vmatprep.subr.bf16.mxu0 0
    %1661 = vmatpush2.bf16.msra.mxu0 %v1621
    %1662 = vmatprep.subr.bf16.mxu0 0
    %1663 = vmatpush2.bf16.msra.mxu0 %v1620
    %1664 = vmatprep.subr.bf16.mxu0 0
    %1665 = vmatpush2.bf16.msra.mxu0 %v1619
    %1666 = vmatprep.subr.bf16.mxu0 0
    %1667 = vmatpush2.bf16.msra.mxu0 %v1618
    %1668 = vmatprep.subr.bf16.mxu0 0
    %1669 = vmatpush2.bf16.msra.mxu0 %v1617
    %1670 = vmatprep.subr.bf16.mxu0 0
    %1671 = vmatpush2.bf16.msra.mxu0 %v1616
    %1672 = vmatprep.mubr.bf16.mxu0 %v1407
    %1673 = vmatmul.mubr.bf16.gmra.mxu0 %v1406
    %v1674 = vpop.f32.mrf.mxu0
    %v1675 = vadd.f32 0.0, %v1674
    %v1676 = vpop.f32.mrf.mxu0
    %v1677 = vpop.f32.mrf.mxu0
    %v1678 = vpop.f32.mrf.mxu0
    %1679 = vdwg.mxu0
    %v1680 = vsel %vm466, %v1539, 0.0
    %v1681 = vrot.slane %v1680, 4
    %v1682 = vadd.f32 %v1680, %v1681
    %v1683 = vrot.slane %v1682, 2
    %v1684 = vadd.f32 %v1682, %v1683
    %v1685 = vrot.slane %v1684, 1
    %v1686 = vadd.f32 %v1684, %v1685
    %v1687 = vmul.f32 %v1686, %v495
    %v1688 = vsub.f32 %v1539, %v1687
    %v1689 = vmul.f32 %v1688, %v1688
    %v1690 = vsel %vm466, %v1689, 0.0
    %v1691 = vrot.slane %v1690, 4
    %v1692 = vadd.f32 %v1690, %v1691
    %v1693 = vrot.slane %v1692, 2
    %v1694 = vadd.f32 %v1692, %v1693
    %v1695 = vrot.slane %v1694, 1
    %v1696 = vadd.f32 %v1694, %v1695
    %v1697 = vmul.f32 %v1696, %v495
    %v1698 = vadd.f32 %v1697, 1e-05
    %v1699 = vrsqrt.pop %v1698
    %v1700 = vmul.f32 %v1688, %v1699
    %v1701 = vsel %vm466, %v1675, 0.0
    %v1702 = vrot.slane %v1701, 4
    %v1703 = vadd.f32 %v1701, %v1702
    %v1704 = vrot.slane %v1703, 2
    %v1705 = vadd.f32 %v1703, %v1704
    %v1706 = vrot.slane %v1705, 1
    %v1707 = vadd.f32 %v1705, %v1706
    %v1708 = vmul.f32 %v1707, %v495
    %v1709 = vsub.f32 %v1675, %v1708
    %v1710 = vmul.f32 %v1709, %v1709
    %v1711 = vsel %vm466, %v1710, 0.0
    %v1712 = vrot.slane %v1711, 4
    %v1713 = vadd.f32 %v1711, %v1712
    %v1714 = vrot.slane %v1713, 2
    %v1715 = vadd.f32 %v1713, %v1714
    %v1716 = vrot.slane %v1715, 1
    %v1717 = vadd.f32 %v1715, %v1716
    %v1718 = vmul.f32 %v1717, %v495
    %v1719 = vadd.f32 %v1718, 1e-05
    %v1720 = vrsqrt.pop %v1719
    %v1721 = vmul.f32 %v1709, %v1720
    %v1722 = vpack.c.bf16 %v902, %v902
    %v1723 = vld [vmem:[%s25] sm:$0xff]
    %v1724 = vld [vmem:[%s25 + $0x8] sm:$0xff]
    %v1725 = vld [vmem:[%s25 + $0x10] sm:$0xff]
    %v1726 = vld [vmem:[%s25 + $0x18] sm:$0xff]
    %v1727 = vld [vmem:[%s25 + $0x20] sm:$0xff]
    %v1728 = vld [vmem:[%s25 + $0x28] sm:$0xff]
    %v1729 = vld [vmem:[%s25 + $0x30] sm:$0xff]
    %v1730 = vld [vmem:[%s25 + $0x38] sm:$0xff]
    %v1731 = vld [vmem:[%s25 + $0x40] sm:$0xff]
    %v1732 = vld [vmem:[%s25 + $0x48] sm:$0xff]
    %v1733 = vld [vmem:[%s25 + $0x50] sm:$0xff]
    %v1734 = vld [vmem:[%s25 + $0x58] sm:$0xff]
    %v1735 = vld [vmem:[%s25 + $0x60] sm:$0xff]
    %v1736 = vld [vmem:[%s25 + $0x68] sm:$0xff]
    %v1737 = vld [vmem:[%s25 + $0x70] sm:$0xff]
    %v1738 = vld [vmem:[%s25 + $0x78] sm:$0xff]
    %v1739 = vld [vmem:[%s27] sm:$0x3]
    %v1740 = vld [vmem:[%s29] sm:$0x3]
    %v1757 = vunpack.c.l.b16 %v1723
    %v1758 = vunpack.c.h.b16 %v1723
    %v1759 = vunpack.c.l.b16 %v1724
    %v1760 = vunpack.c.h.b16 %v1724
    %v1761 = vunpack.c.l.b16 %v1725
    %v1762 = vunpack.c.h.b16 %v1725
    %v1763 = vunpack.c.l.b16 %v1726
    %v1764 = vunpack.c.h.b16 %v1726
    %v1765 = vunpack.c.l.b16 %v1727
    %v1766 = vunpack.c.h.b16 %v1727
    %v1767 = vunpack.c.l.b16 %v1728
    %v1768 = vunpack.c.h.b16 %v1728
    %v1769 = vunpack.c.l.b16 %v1729
    %v1770 = vunpack.c.h.b16 %v1729
    %v1771 = vunpack.c.l.b16 %v1730
    %v1772 = vunpack.c.h.b16 %v1730
    %v1773 = vunpack.c.l.b16 %v1731
    %v1774 = vunpack.c.h.b16 %v1731
    %v1775 = vunpack.c.l.b16 %v1732
    %v1776 = vunpack.c.h.b16 %v1732
    %v1777 = vunpack.c.l.b16 %v1733
    %v1778 = vunpack.c.h.b16 %v1733
    %v1779 = vunpack.c.l.b16 %v1734
    %v1780 = vunpack.c.h.b16 %v1734
    %v1781 = vunpack.c.l.b16 %v1735
    %v1782 = vunpack.c.h.b16 %v1735
    %v1783 = vunpack.c.l.b16 %v1736
    %v1784 = vunpack.c.h.b16 %v1736
    %v1785 = vunpack.c.l.b16 %v1737
    %v1786 = vunpack.c.h.b16 %v1737
    %v1787 = vunpack.c.l.b16 %v1738
    %v1788 = vunpack.c.h.b16 %v1738
    %v1789 = vpack.c.b16 %v1759, %v1757
    %v1790 = vpack.c.b16 %v1760, %v1758
    %v1791 = vpack.c.b16 %v1763, %v1761
    %v1792 = vpack.c.b16 %v1764, %v1762
    %v1793 = vpack.c.b16 %v1767, %v1765
    %v1794 = vpack.c.b16 %v1768, %v1766
    %v1795 = vpack.c.b16 %v1771, %v1769
    %v1796 = vpack.c.b16 %v1772, %v1770
    %v1797 = vpack.c.b16 %v1775, %v1773
    %v1798 = vpack.c.b16 %v1776, %v1774
    %v1799 = vpack.c.b16 %v1779, %v1777
    %v1800 = vpack.c.b16 %v1780, %v1778
    %v1801 = vpack.c.b16 %v1783, %v1781
    %v1802 = vpack.c.b16 %v1784, %v1782
    %v1803 = vpack.c.b16 %v1787, %v1785
    %v1804 = vpack.c.b16 %v1788, %v1786
    %1821 = vmatprep.subr.bf16.mxu0 %v1804
    %1822 = vmatpush1.bf16.msra.mxu0 %v1803
    %1823 = vmatprep.subr.bf16.mxu0 %v1802
    %1824 = vmatpush1.bf16.msra.mxu0 %v1801
    %1825 = vmatprep.subr.bf16.mxu0 %v1800
    %1826 = vmatpush1.bf16.msra.mxu0 %v1799
    %1827 = vmatprep.subr.bf16.mxu0 %v1798
    %1828 = vmatpush1.bf16.msra.mxu0 %v1797
    %1829 = vmatprep.subr.bf16.mxu0 %v1796
    %1830 = vmatpush1.bf16.msra.mxu0 %v1795
    %1831 = vmatprep.subr.bf16.mxu0 %v1794
    %1832 = vmatpush1.bf16.msra.mxu0 %v1793
    %1833 = vmatprep.subr.bf16.mxu0 %v1792
    %1834 = vmatpush1.bf16.msra.mxu0 %v1791
    %1835 = vmatprep.subr.bf16.mxu0 %v1790
    %1836 = vmatpush1.bf16.msra.mxu0 %v1789
    %1837 = vmatprep.subr.bf16.mxu0 0
    %1838 = vmatpush2.bf16.msra.mxu0 0
    %1839 = vmatprep.subr.bf16.mxu0 0
    %1840 = vmatpush2.bf16.msra.mxu0 0
    %1841 = vmatprep.subr.bf16.mxu0 0
    %1842 = vmatpush2.bf16.msra.mxu0 0
    %1843 = vmatprep.subr.bf16.mxu0 0
    %1844 = vmatpush2.bf16.msra.mxu0 0
    %1845 = vmatprep.subr.bf16.mxu0 0
    %1846 = vmatpush2.bf16.msra.mxu0 0
    %1847 = vmatprep.subr.bf16.mxu0 0
    %1848 = vmatpush2.bf16.msra.mxu0 0
    %1849 = vmatprep.subr.bf16.mxu0 0
    %1850 = vmatpush2.bf16.msra.mxu0 0
    %1851 = vmatprep.subr.bf16.mxu0 0
    %1852 = vmatpush2.bf16.msra.mxu0 0
    %1853 = vmatprep.mubr.bf16.mxu0 0
    %1854 = vmatmul.mubr.bf16.gmra.mxu0 %v1722
    %v1855 = vpop.f32.mrf.mxu0
    %v1856 = vadd.f32 0.0, %v1855
    %v1857 = vpop.f32.mrf.mxu0
    %v1858 = vadd.f32 0.0, %v1857
    %v1859 = vpop.f32.mrf.mxu0
    %v1860 = vpop.f32.mrf.mxu0
    %1861 = vdwg.mxu0
    %v1862 = vsel %vm466, %v1856, 0.0
    %v1863 = vrot.slane %v1862, 4
    %v1864 = vadd.f32 %v1862, %v1863
    %v1865 = vrot.slane %v1864, 2
    %v1866 = vadd.f32 %v1864, %v1865
    %v1867 = vrot.slane %v1866, 1
    %v1868 = vadd.f32 %v1866, %v1867
    %v1869 = vsel %vm466, %v1858, 0.0
    %v1870 = vrot.slane %v1869, 4
    %v1871 = vadd.f32 %v1869, %v1870
    %v1872 = vrot.slane %v1871, 2
    %v1873 = vadd.f32 %v1871, %v1872
    %v1874 = vrot.slane %v1873, 1
    %v1875 = vadd.f32 %v1873, %v1874
    %v1876 = vmul.f32 %v1868, %v495
    %v1877 = vmul.f32 %v1875, %v495
    %v1878 = vsub.f32 %v1856, %v1876
    %v1879 = vsub.f32 %v1858, %v1877
    %v1880 = vmul.f32 %v1878, %v1878
    %v1881 = vmul.f32 %v1879, %v1879
    %v1882 = vsel %vm466, %v1880, 0.0
    %v1883 = vrot.slane %v1882, 4
    %v1884 = vadd.f32 %v1882, %v1883
    %v1885 = vrot.slane %v1884, 2
    %v1886 = vadd.f32 %v1884, %v1885
    %v1887 = vrot.slane %v1886, 1
    %v1888 = vadd.f32 %v1886, %v1887
    %v1889 = vsel %vm466, %v1881, 0.0
    %v1890 = vrot.slane %v1889, 4
    %v1891 = vadd.f32 %v1889, %v1890
    %v1892 = vrot.slane %v1891, 2
    %v1893 = vadd.f32 %v1891, %v1892
    %v1894 = vrot.slane %v1893, 1
    %v1895 = vadd.f32 %v1893, %v1894
    %v1896 = vmul.f32 %v1888, %v495
    %v1897 = vmul.f32 %v1895, %v495
    %v1898 = vadd.f32 %v1896, 1e-05
    %v1899 = vadd.f32 %v1897, 1e-05
    %v1900 = vrsqrt.pop %v1898
    %v1901 = vrsqrt.pop %v1899
    %v1902 = vmul.f32 %v1878, %v1900
    %v1903 = vmul.f32 %v1879, %v1901
    %v1905 = vlaneseq
    %v1906 = vshrl.u32 %v1905, 7
    %v1907 = vsub.s32 0, %v1906
    %v1908 = vrot.slane %v1739, %v1907
    %v1909 = vlaneseq
    %v1910 = vshrl.u32 %v1909, 7
    %v1911 = vsub.s32 1, %v1910
    %v1912 = vrot.slane %v1739, %v1911
    %v1915 = vmul.f32 %v1902, %v1908
    %v1916 = vmul.f32 %v1903, %v1912
    %v1918 = vlaneseq
    %v1919 = vshrl.u32 %v1918, 7
    %v1920 = vsub.s32 0, %v1919
    %v1921 = vrot.slane %v1740, %v1920
    %v1922 = vlaneseq
    %v1923 = vshrl.u32 %v1922, 7
    %v1924 = vsub.s32 1, %v1923
    %v1925 = vrot.slane %v1740, %v1924
    %v1928 = vadd.f32 %v1915, %v1921
    %v1929 = vadd.f32 %v1916, %v1925
    %v1930 = vmax.f32 %v1928, 0.0
    %v1931 = vmax.f32 %v1929, 0.0
    %v1932 = vpack.c.bf16 %v1930, %v1930
    %v1933 = vpack.c.bf16 %v1931, %v1931
    %v1934 = vld [vmem:[%s31] sm:$0xf]
    %v1935 = vld [vmem:[%s31 + $0x4] sm:$0xf]
    %v1936 = vld [vmem:[%s31 + $0x8] sm:$0xf]
    %v1937 = vld [vmem:[%s31 + $0xc] sm:$0xf]
    %v1938 = vld [vmem:[%s31 + $0x10] sm:$0xf]
    %v1939 = vld [vmem:[%s31 + $0x14] sm:$0xf]
    %v1940 = vld [vmem:[%s31 + $0x18] sm:$0xf]
    %v1941 = vld [vmem:[%s31 + $0x1c] sm:$0xf]
    %v1942 = vld [vmem:[%s31 + $0x20] sm:$0xf]
    %v1943 = vld [vmem:[%s31 + $0x24] sm:$0xf]
    %v1944 = vld [vmem:[%s31 + $0x28] sm:$0xf]
    %v1945 = vld [vmem:[%s31 + $0x2c] sm:$0xf]
    %v1946 = vld [vmem:[%s31 + $0x30] sm:$0xf]
    %v1947 = vld [vmem:[%s31 + $0x34] sm:$0xf]
    %v1948 = vld [vmem:[%s31 + $0x38] sm:$0xf]
    %v1949 = vld [vmem:[%s31 + $0x3c] sm:$0xf]
    %v1950 = vld [vmem:[%s31 + $0x40] sm:$0xf]
    %v1951 = vld [vmem:[%s31 + $0x44] sm:$0xf]
    %v1952 = vld [vmem:[%s31 + $0x48] sm:$0xf]
    %v1953 = vld [vmem:[%s31 + $0x4c] sm:$0xf]
    %v1954 = vld [vmem:[%s31 + $0x50] sm:$0xf]
    %v1955 = vld [vmem:[%s31 + $0x54] sm:$0xf]
    %v1956 = vld [vmem:[%s31 + $0x58] sm:$0xf]
    %v1957 = vld [vmem:[%s31 + $0x5c] sm:$0xf]
    %v1958 = vld [vmem:[%s31 + $0x60] sm:$0xf]
    %v1959 = vld [vmem:[%s31 + $0x64] sm:$0xf]
    %v1960 = vld [vmem:[%s31 + $0x68] sm:$0xf]
    %v1961 = vld [vmem:[%s31 + $0x6c] sm:$0xf]
    %v1962 = vld [vmem:[%s31 + $0x70] sm:$0xf]
    %v1963 = vld [vmem:[%s31 + $0x74] sm:$0xf]
    %v1964 = vld [vmem:[%s31 + $0x78] sm:$0xf]
    %v1965 = vld [vmem:[%s31 + $0x7c] sm:$0xf]
    %v1998 = vunpack.c.l.b16 %v1934
    %v1999 = vunpack.c.l.b16 %v1935
    %v2000 = vunpack.c.l.b16 %v1936
    %v2001 = vunpack.c.l.b16 %v1937
    %v2002 = vunpack.c.l.b16 %v1938
    %v2003 = vunpack.c.l.b16 %v1939
    %v2004 = vunpack.c.l.b16 %v1940
    %v2005 = vunpack.c.l.b16 %v1941
    %v2006 = vunpack.c.l.b16 %v1942
    %v2007 = vunpack.c.l.b16 %v1943
    %v2008 = vunpack.c.l.b16 %v1944
    %v2009 = vunpack.c.l.b16 %v1945
    %v2010 = vunpack.c.l.b16 %v1946
    %v2011 = vunpack.c.l.b16 %v1947
    %v2012 = vunpack.c.l.b16 %v1948
    %v2013 = vunpack.c.l.b16 %v1949
    %v2014 = vunpack.c.l.b16 %v1950
    %v2015 = vunpack.c.l.b16 %v1951
    %v2016 = vunpack.c.l.b16 %v1952
    %v2017 = vunpack.c.l.b16 %v1953
    %v2018 = vunpack.c.l.b16 %v1954
    %v2019 = vunpack.c.l.b16 %v1955
    %v2020 = vunpack.c.l.b16 %v1956
    %v2021 = vunpack.c.l.b16 %v1957
    %v2022 = vunpack.c.l.b16 %v1958
    %v2023 = vunpack.c.l.b16 %v1959
    %v2024 = vunpack.c.l.b16 %v1960
    %v2025 = vunpack.c.l.b16 %v1961
    %v2026 = vunpack.c.l.b16 %v1962
    %v2027 = vunpack.c.l.b16 %v1963
    %v2028 = vunpack.c.l.b16 %v1964
    %v2029 = vunpack.c.l.b16 %v1965
    %v2030 = vpack.c.b16 %v1999, %v1998
    %v2031 = vpack.c.b16 %v2001, %v2000
    %v2032 = vpack.c.b16 %v2003, %v2002
    %v2033 = vpack.c.b16 %v2005, %v2004
    %v2034 = vpack.c.b16 %v2007, %v2006
    %v2035 = vpack.c.b16 %v2009, %v2008
    %v2036 = vpack.c.b16 %v2011, %v2010
    %v2037 = vpack.c.b16 %v2013, %v2012
    %v2038 = vpack.c.b16 %v2015, %v2014
    %v2039 = vpack.c.b16 %v2017, %v2016
    %v2040 = vpack.c.b16 %v2019, %v2018
    %v2041 = vpack.c.b16 %v2021, %v2020
    %v2042 = vpack.c.b16 %v2023, %v2022
    %v2043 = vpack.c.b16 %v2025, %v2024
    %v2044 = vpack.c.b16 %v2027, %v2026
    %v2045 = vpack.c.b16 %v2029, %v2028
    %2062 = vmatprep.subr.bf16.mxu0 0
    %2063 = vmatpush1.bf16.msra.mxu0 %v2037
    %2064 = vmatprep.subr.bf16.mxu0 0
    %2065 = vmatpush1.bf16.msra.mxu0 %v2036
    %2066 = vmatprep.subr.bf16.mxu0 0
    %2067 = vmatpush1.bf16.msra.mxu0 %v2035
    %2068 = vmatprep.subr.bf16.mxu0 0
    %2069 = vmatpush1.bf16.msra.mxu0 %v2034
    %2070 = vmatprep.subr.bf16.mxu0 0
    %2071 = vmatpush1.bf16.msra.mxu0 %v2033
    %2072 = vmatprep.subr.bf16.mxu0 0
    %2073 = vmatpush1.bf16.msra.mxu0 %v2032
    %2074 = vmatprep.subr.bf16.mxu0 0
    %2075 = vmatpush1.bf16.msra.mxu0 %v2031
    %2076 = vmatprep.subr.bf16.mxu0 0
    %2077 = vmatpush1.bf16.msra.mxu0 %v2030
    %2078 = vmatprep.subr.bf16.mxu0 0
    %2079 = vmatpush2.bf16.msra.mxu0 %v2045
    %2080 = vmatprep.subr.bf16.mxu0 0
    %2081 = vmatpush2.bf16.msra.mxu0 %v2044
    %2082 = vmatprep.subr.bf16.mxu0 0
    %2083 = vmatpush2.bf16.msra.mxu0 %v2043
    %2084 = vmatprep.subr.bf16.mxu0 0
    %2085 = vmatpush2.bf16.msra.mxu0 %v2042
    %2086 = vmatprep.subr.bf16.mxu0 0
    %2087 = vmatpush2.bf16.msra.mxu0 %v2041
    %2088 = vmatprep.subr.bf16.mxu0 0
    %2089 = vmatpush2.bf16.msra.mxu0 %v2040
    %2090 = vmatprep.subr.bf16.mxu0 0
    %2091 = vmatpush2.bf16.msra.mxu0 %v2039
    %2092 = vmatprep.subr.bf16.mxu0 0
    %2093 = vmatpush2.bf16.msra.mxu0 %v2038
    %2094 = vmatprep.mubr.bf16.mxu0 %v1933
    %2095 = vmatmul.mubr.bf16.gmra.mxu0 %v1932
    %v2096 = vpop.f32.mrf.mxu0
    %v2097 = vadd.f32 0.0, %v2096
    %v2098 = vpop.f32.mrf.mxu0
    %v2099 = vpop.f32.mrf.mxu0
    %v2100 = vpop.f32.mrf.mxu0
    %2101 = vdwg.mxu0
    %v2102 = vmul.f32 %v2097, %v2097
    %v2103 = vsel %vm466, %v2102, 0.0
    %2104 = vadd.xlane.f32.xlu0 %v2103
    %v2105 = vpop.xlane.xlu0 %2104
    %v2106 = vmax.f32 %v2105, 1e-24
    %v2107 = vrsqrt.pop %v2106
    %v2108 = vmul.f32 %v2097, %v2107
    %v2109 = vmul.f32 %v1700, %v1700
    %v2110 = vsel %vm466, %v2109, 0.0
    %2111 = vadd.xlane.f32.xlu0 %v2110
    %v2112 = vpop.xlane.xlu0 %2111
    %v2113 = vmax.f32 %v2112, 1e-24
    %v2114 = vrsqrt.pop %v2113
    %v2115 = vmul.f32 %v1700, %v2114
    %v2116 = vmul.f32 %v2108, %v2115
    %v2117 = vsel %vm466, %v2116, 0.0
    %2118 = vadd.xlane.f32.xlu0 %v2117
    %v2119 = vpop.xlane.xlu0 %2118
    %v2120 = vmul.f32 %v2119, 2.0
    %v2121 = vsub.f32 2.0, %v2120
    %vm2122 = vcmask 1024
    %v2123 = vsel %vm2122, %v2121, 0.0
    %2124 = vadd.xlane.f32.xlu0 %v2123
    %v2125 = vpop.xlane.xlu0 %2124
    %v2126 = vrot.slane %v2125, 4
    %v2127 = vadd.f32 %v2125, %v2126
    %v2128 = vrot.slane %v2127, 2
    %v2129 = vadd.f32 %v2127, %v2128
    %v2130 = vrot.slane %v2129, 1
    %v2131 = vadd.f32 %v2129, %v2130
    %s2132 = vtos %v2131
    %v2133 = vrcp.pop 2.0
    %s2134 = vtos %v2133
    %s2135 = smul.f32 %s2132, %s2134
    %v2136 = vpack.c.bf16 %v923, %v923
    %v2137 = vld [vmem:[%s33] sm:$0xff]
    %v2138 = vld [vmem:[%s33 + $0x8] sm:$0xff]
    %v2139 = vld [vmem:[%s33 + $0x10] sm:$0xff]
    %v2140 = vld [vmem:[%s33 + $0x18] sm:$0xff]
    %v2141 = vld [vmem:[%s33 + $0x20] sm:$0xff]
    %v2142 = vld [vmem:[%s33 + $0x28] sm:$0xff]
    %v2143 = vld [vmem:[%s33 + $0x30] sm:$0xff]
    %v2144 = vld [vmem:[%s33 + $0x38] sm:$0xff]
    %v2145 = vld [vmem:[%s33 + $0x40] sm:$0xff]
    %v2146 = vld [vmem:[%s33 + $0x48] sm:$0xff]
    %v2147 = vld [vmem:[%s33 + $0x50] sm:$0xff]
    %v2148 = vld [vmem:[%s33 + $0x58] sm:$0xff]
    %v2149 = vld [vmem:[%s33 + $0x60] sm:$0xff]
    %v2150 = vld [vmem:[%s33 + $0x68] sm:$0xff]
    %v2151 = vld [vmem:[%s33 + $0x70] sm:$0xff]
    %v2152 = vld [vmem:[%s33 + $0x78] sm:$0xff]
    %v2153 = vld [vmem:[%s35] sm:$0x3]
    %v2154 = vld [vmem:[%s37] sm:$0x3]
    %v2171 = vunpack.c.l.b16 %v2137
    %v2172 = vunpack.c.h.b16 %v2137
    %v2173 = vunpack.c.l.b16 %v2138
    %v2174 = vunpack.c.h.b16 %v2138
    %v2175 = vunpack.c.l.b16 %v2139
    %v2176 = vunpack.c.h.b16 %v2139
    %v2177 = vunpack.c.l.b16 %v2140
    %v2178 = vunpack.c.h.b16 %v2140
    %v2179 = vunpack.c.l.b16 %v2141
    %v2180 = vunpack.c.h.b16 %v2141
    %v2181 = vunpack.c.l.b16 %v2142
    %v2182 = vunpack.c.h.b16 %v2142
    %v2183 = vunpack.c.l.b16 %v2143
    %v2184 = vunpack.c.h.b16 %v2143
    %v2185 = vunpack.c.l.b16 %v2144
    %v2186 = vunpack.c.h.b16 %v2144
    %v2187 = vunpack.c.l.b16 %v2145
    %v2188 = vunpack.c.h.b16 %v2145
    %v2189 = vunpack.c.l.b16 %v2146
    %v2190 = vunpack.c.h.b16 %v2146
    %v2191 = vunpack.c.l.b16 %v2147
    %v2192 = vunpack.c.h.b16 %v2147
    %v2193 = vunpack.c.l.b16 %v2148
    %v2194 = vunpack.c.h.b16 %v2148
    %v2195 = vunpack.c.l.b16 %v2149
    %v2196 = vunpack.c.h.b16 %v2149
    %v2197 = vunpack.c.l.b16 %v2150
    %v2198 = vunpack.c.h.b16 %v2150
    %v2199 = vunpack.c.l.b16 %v2151
    %v2200 = vunpack.c.h.b16 %v2151
    %v2201 = vunpack.c.l.b16 %v2152
    %v2202 = vunpack.c.h.b16 %v2152
    %v2203 = vpack.c.b16 %v2173, %v2171
    %v2204 = vpack.c.b16 %v2174, %v2172
    %v2205 = vpack.c.b16 %v2177, %v2175
    %v2206 = vpack.c.b16 %v2178, %v2176
    %v2207 = vpack.c.b16 %v2181, %v2179
    %v2208 = vpack.c.b16 %v2182, %v2180
    %v2209 = vpack.c.b16 %v2185, %v2183
    %v2210 = vpack.c.b16 %v2186, %v2184
    %v2211 = vpack.c.b16 %v2189, %v2187
    %v2212 = vpack.c.b16 %v2190, %v2188
    %v2213 = vpack.c.b16 %v2193, %v2191
    %v2214 = vpack.c.b16 %v2194, %v2192
    %v2215 = vpack.c.b16 %v2197, %v2195
    %v2216 = vpack.c.b16 %v2198, %v2196
    %v2217 = vpack.c.b16 %v2201, %v2199
    %v2218 = vpack.c.b16 %v2202, %v2200
    %2235 = vmatprep.subr.bf16.mxu0 %v2218
    %2236 = vmatpush1.bf16.msra.mxu0 %v2217
    %2237 = vmatprep.subr.bf16.mxu0 %v2216
    %2238 = vmatpush1.bf16.msra.mxu0 %v2215
    %2239 = vmatprep.subr.bf16.mxu0 %v2214
    %2240 = vmatpush1.bf16.msra.mxu0 %v2213
    %2241 = vmatprep.subr.bf16.mxu0 %v2212
    %2242 = vmatpush1.bf16.msra.mxu0 %v2211
    %2243 = vmatprep.subr.bf16.mxu0 %v2210
    %2244 = vmatpush1.bf16.msra.mxu0 %v2209
    %2245 = vmatprep.subr.bf16.mxu0 %v2208
    %2246 = vmatpush1.bf16.msra.mxu0 %v2207
    %2247 = vmatprep.subr.bf16.mxu0 %v2206
    %2248 = vmatpush1.bf16.msra.mxu0 %v2205
    %2249 = vmatprep.subr.bf16.mxu0 %v2204
    %2250 = vmatpush1.bf16.msra.mxu0 %v2203
    %2251 = vmatprep.subr.bf16.mxu0 0
    %2252 = vmatpush2.bf16.msra.mxu0 0
    %2253 = vmatprep.subr.bf16.mxu0 0
    %2254 = vmatpush2.bf16.msra.mxu0 0
    %2255 = vmatprep.subr.bf16.mxu0 0
    %2256 = vmatpush2.bf16.msra.mxu0 0
    %2257 = vmatprep.subr.bf16.mxu0 0
    %2258 = vmatpush2.bf16.msra.mxu0 0
    %2259 = vmatprep.subr.bf16.mxu0 0
    %2260 = vmatpush2.bf16.msra.mxu0 0
    %2261 = vmatprep.subr.bf16.mxu0 0
    %2262 = vmatpush2.bf16.msra.mxu0 0
    %2263 = vmatprep.subr.bf16.mxu0 0
    %2264 = vmatpush2.bf16.msra.mxu0 0
    %2265 = vmatprep.subr.bf16.mxu0 0
    %2266 = vmatpush2.bf16.msra.mxu0 0
    %2267 = vmatprep.mubr.bf16.mxu0 0
    %2268 = vmatmul.mubr.bf16.gmra.mxu0 %v2136
    %v2269 = vpop.f32.mrf.mxu0
    %v2270 = vadd.f32 0.0, %v2269
    %v2271 = vpop.f32.mrf.mxu0
    %v2272 = vadd.f32 0.0, %v2271
    %v2273 = vpop.f32.mrf.mxu0
    %v2274 = vpop.f32.mrf.mxu0
    %2275 = vdwg.mxu0
    %v2276 = vsel %vm466, %v2270, 0.0
    %v2277 = vrot.slane %v2276, 4
    %v2278 = vadd.f32 %v2276, %v2277
    %v2279 = vrot.slane %v2278, 2
    %v2280 = vadd.f32 %v2278, %v2279
    %v2281 = vrot.slane %v2280, 1
    %v2282 = vadd.f32 %v2280, %v2281
    %v2283 = vsel %vm466, %v2272, 0.0
    %v2284 = vrot.slane %v2283, 4
    %v2285 = vadd.f32 %v2283, %v2284
    %v2286 = vrot.slane %v2285, 2
    %v2287 = vadd.f32 %v2285, %v2286
    %v2288 = vrot.slane %v2287, 1
    %v2289 = vadd.f32 %v2287, %v2288
    %v2290 = vmul.f32 %v2282, %v495
    %v2291 = vmul.f32 %v2289, %v495
    %v2292 = vsub.f32 %v2270, %v2290
    %v2293 = vsub.f32 %v2272, %v2291
    %v2294 = vmul.f32 %v2292, %v2292
    %v2295 = vmul.f32 %v2293, %v2293
    %v2296 = vsel %vm466, %v2294, 0.0
    %v2297 = vrot.slane %v2296, 4
    %v2298 = vadd.f32 %v2296, %v2297
    %v2299 = vrot.slane %v2298, 2
    %v2300 = vadd.f32 %v2298, %v2299
    %v2301 = vrot.slane %v2300, 1
    %v2302 = vadd.f32 %v2300, %v2301
    %v2303 = vsel %vm466, %v2295, 0.0
    %v2304 = vrot.slane %v2303, 4
    %v2305 = vadd.f32 %v2303, %v2304
    %v2306 = vrot.slane %v2305, 2
    %v2307 = vadd.f32 %v2305, %v2306
    %v2308 = vrot.slane %v2307, 1
    %v2309 = vadd.f32 %v2307, %v2308
    %v2310 = vmul.f32 %v2302, %v495
    %v2311 = vmul.f32 %v2309, %v495
    %v2312 = vadd.f32 %v2310, 1e-05
    %v2313 = vadd.f32 %v2311, 1e-05
    %v2314 = vrsqrt.pop %v2312
    %v2315 = vrsqrt.pop %v2313
    %v2316 = vmul.f32 %v2292, %v2314
    %v2317 = vmul.f32 %v2293, %v2315
    %v2319 = vlaneseq
    %v2320 = vshrl.u32 %v2319, 7
    %v2321 = vsub.s32 0, %v2320
    %v2322 = vrot.slane %v2153, %v2321
    %v2323 = vlaneseq
    %v2324 = vshrl.u32 %v2323, 7
    %v2325 = vsub.s32 1, %v2324
    %v2326 = vrot.slane %v2153, %v2325
    %v2329 = vmul.f32 %v2316, %v2322
    %v2330 = vmul.f32 %v2317, %v2326
    %v2332 = vlaneseq
    %v2333 = vshrl.u32 %v2332, 7
    %v2334 = vsub.s32 0, %v2333
    %v2335 = vrot.slane %v2154, %v2334
    %v2336 = vlaneseq
    %v2337 = vshrl.u32 %v2336, 7
    %v2338 = vsub.s32 1, %v2337
    %v2339 = vrot.slane %v2154, %v2338
    %v2342 = vadd.f32 %v2329, %v2335
    %v2343 = vadd.f32 %v2330, %v2339
    %v2344 = vmax.f32 %v2342, 0.0
    %v2345 = vmax.f32 %v2343, 0.0
    %v2346 = vpack.c.bf16 %v2344, %v2344
    %v2347 = vpack.c.bf16 %v2345, %v2345
    %v2348 = vld [vmem:[%s39] sm:$0xf]
    %v2349 = vld [vmem:[%s39 + $0x4] sm:$0xf]
    %v2350 = vld [vmem:[%s39 + $0x8] sm:$0xf]
    %v2351 = vld [vmem:[%s39 + $0xc] sm:$0xf]
    %v2352 = vld [vmem:[%s39 + $0x10] sm:$0xf]
    %v2353 = vld [vmem:[%s39 + $0x14] sm:$0xf]
    %v2354 = vld [vmem:[%s39 + $0x18] sm:$0xf]
    %v2355 = vld [vmem:[%s39 + $0x1c] sm:$0xf]
    %v2356 = vld [vmem:[%s39 + $0x20] sm:$0xf]
    %v2357 = vld [vmem:[%s39 + $0x24] sm:$0xf]
    %v2358 = vld [vmem:[%s39 + $0x28] sm:$0xf]
    %v2359 = vld [vmem:[%s39 + $0x2c] sm:$0xf]
    %v2360 = vld [vmem:[%s39 + $0x30] sm:$0xf]
    %v2361 = vld [vmem:[%s39 + $0x34] sm:$0xf]
    %v2362 = vld [vmem:[%s39 + $0x38] sm:$0xf]
    %v2363 = vld [vmem:[%s39 + $0x3c] sm:$0xf]
    %v2364 = vld [vmem:[%s39 + $0x40] sm:$0xf]
    %v2365 = vld [vmem:[%s39 + $0x44] sm:$0xf]
    %v2366 = vld [vmem:[%s39 + $0x48] sm:$0xf]
    %v2367 = vld [vmem:[%s39 + $0x4c] sm:$0xf]
    %v2368 = vld [vmem:[%s39 + $0x50] sm:$0xf]
    %v2369 = vld [vmem:[%s39 + $0x54] sm:$0xf]
    %v2370 = vld [vmem:[%s39 + $0x58] sm:$0xf]
    %v2371 = vld [vmem:[%s39 + $0x5c] sm:$0xf]
    %v2372 = vld [vmem:[%s39 + $0x60] sm:$0xf]
    %v2373 = vld [vmem:[%s39 + $0x64] sm:$0xf]
    %v2374 = vld [vmem:[%s39 + $0x68] sm:$0xf]
    %v2375 = vld [vmem:[%s39 + $0x6c] sm:$0xf]
    %v2376 = vld [vmem:[%s39 + $0x70] sm:$0xf]
    %v2377 = vld [vmem:[%s39 + $0x74] sm:$0xf]
    %v2378 = vld [vmem:[%s39 + $0x78] sm:$0xf]
    %v2379 = vld [vmem:[%s39 + $0x7c] sm:$0xf]
    %v2412 = vunpack.c.l.b16 %v2348
    %v2413 = vunpack.c.l.b16 %v2349
    %v2414 = vunpack.c.l.b16 %v2350
    %v2415 = vunpack.c.l.b16 %v2351
    %v2416 = vunpack.c.l.b16 %v2352
    %v2417 = vunpack.c.l.b16 %v2353
    %v2418 = vunpack.c.l.b16 %v2354
    %v2419 = vunpack.c.l.b16 %v2355
    %v2420 = vunpack.c.l.b16 %v2356
    %v2421 = vunpack.c.l.b16 %v2357
    %v2422 = vunpack.c.l.b16 %v2358
    %v2423 = vunpack.c.l.b16 %v2359
    %v2424 = vunpack.c.l.b16 %v2360
    %v2425 = vunpack.c.l.b16 %v2361
    %v2426 = vunpack.c.l.b16 %v2362
    %v2427 = vunpack.c.l.b16 %v2363
    %v2428 = vunpack.c.l.b16 %v2364
    %v2429 = vunpack.c.l.b16 %v2365
    %v2430 = vunpack.c.l.b16 %v2366
    %v2431 = vunpack.c.l.b16 %v2367
    %v2432 = vunpack.c.l.b16 %v2368
    %v2433 = vunpack.c.l.b16 %v2369
    %v2434 = vunpack.c.l.b16 %v2370
    %v2435 = vunpack.c.l.b16 %v2371
    %v2436 = vunpack.c.l.b16 %v2372
    %v2437 = vunpack.c.l.b16 %v2373
    %v2438 = vunpack.c.l.b16 %v2374
    %v2439 = vunpack.c.l.b16 %v2375
    %v2440 = vunpack.c.l.b16 %v2376
    %v2441 = vunpack.c.l.b16 %v2377
    %v2442 = vunpack.c.l.b16 %v2378
    %v2443 = vunpack.c.l.b16 %v2379
    %v2444 = vpack.c.b16 %v2413, %v2412
    %v2445 = vpack.c.b16 %v2415, %v2414
    %v2446 = vpack.c.b16 %v2417, %v2416
    %v2447 = vpack.c.b16 %v2419, %v2418
    %v2448 = vpack.c.b16 %v2421, %v2420
    %v2449 = vpack.c.b16 %v2423, %v2422
    %v2450 = vpack.c.b16 %v2425, %v2424
    %v2451 = vpack.c.b16 %v2427, %v2426
    %v2452 = vpack.c.b16 %v2429, %v2428
    %v2453 = vpack.c.b16 %v2431, %v2430
    %v2454 = vpack.c.b16 %v2433, %v2432
    %v2455 = vpack.c.b16 %v2435, %v2434
    %v2456 = vpack.c.b16 %v2437, %v2436
    %v2457 = vpack.c.b16 %v2439, %v2438
    %v2458 = vpack.c.b16 %v2441, %v2440
    %v2459 = vpack.c.b16 %v2443, %v2442
    %2476 = vmatprep.subr.bf16.mxu0 0
    %2477 = vmatpush1.bf16.msra.mxu0 %v2451
    %2478 = vmatprep.subr.bf16.mxu0 0
    %2479 = vmatpush1.bf16.msra.mxu0 %v2450
    %2480 = vmatprep.subr.bf16.mxu0 0
    %2481 = vmatpush1.bf16.msra.mxu0 %v2449
    %2482 = vmatprep.subr.bf16.mxu0 0
    %2483 = vmatpush1.bf16.msra.mxu0 %v2448
    %2484 = vmatprep.subr.bf16.mxu0 0
    %2485 = vmatpush1.bf16.msra.mxu0 %v2447
    %2486 = vmatprep.subr.bf16.mxu0 0
    %2487 = vmatpush1.bf16.msra.mxu0 %v2446
    %2488 = vmatprep.subr.bf16.mxu0 0
    %2489 = vmatpush1.bf16.msra.mxu0 %v2445
    %2490 = vmatprep.subr.bf16.mxu0 0
    %2491 = vmatpush1.bf16.msra.mxu0 %v2444
    %2492 = vmatprep.subr.bf16.mxu0 0
    %2493 = vmatpush2.bf16.msra.mxu0 %v2459
    %2494 = vmatprep.subr.bf16.mxu0 0
    %2495 = vmatpush2.bf16.msra.mxu0 %v2458
    %2496 = vmatprep.subr.bf16.mxu0 0
    %2497 = vmatpush2.bf16.msra.mxu0 %v2457
    %2498 = vmatprep.subr.bf16.mxu0 0
    %2499 = vmatpush2.bf16.msra.mxu0 %v2456
    %2500 = vmatprep.subr.bf16.mxu0 0
    %2501 = vmatpush2.bf16.msra.mxu0 %v2455
    %2502 = vmatprep.subr.bf16.mxu0 0
    %2503 = vmatpush2.bf16.msra.mxu0 %v2454
    %2504 = vmatprep.subr.bf16.mxu0 0
    %2505 = vmatpush2.bf16.msra.mxu0 %v2453
    %2506 = vmatprep.subr.bf16.mxu0 0
    %2507 = vmatpush2.bf16.msra.mxu0 %v2452
    %2508 = vmatprep.mubr.bf16.mxu0 %v2347
    %2509 = vmatmul.mubr.bf16.gmra.mxu0 %v2346
    %v2510 = vpop.f32.mrf.mxu0
    %v2511 = vadd.f32 0.0, %v2510
    %v2512 = vpop.f32.mrf.mxu0
    %v2513 = vpop.f32.mrf.mxu0
    %v2514 = vpop.f32.mrf.mxu0
    %2515 = vdwg.mxu0
    %v2516 = vmul.f32 %v1721, %v1721
    %v2517 = vsel %vm466, %v2516, 0.0
    %2518 = vadd.xlane.f32.xlu0 %v2517
    %v2519 = vpop.xlane.xlu0 %2518
    %v2520 = vmax.f32 %v2519, 1e-24
    %v2521 = vrsqrt.pop %v2520
    %v2522 = vmul.f32 %v1721, %v2521
    %v2523 = vmul.f32 %v2511, %v2511
    %v2524 = vsel %vm466, %v2523, 0.0
    %2525 = vadd.xlane.f32.xlu0 %v2524
    %v2526 = vpop.xlane.xlu0 %2525
    %v2527 = vmax.f32 %v2526, 1e-24
    %v2528 = vrsqrt.pop %v2527
    %v2529 = vmul.f32 %v2511, %v2528
    %2530 = vmatprep.subr.mxu0 0.0
    %2531 = vmatpush1.xpose.msra.mxu0 0.0
    %2532 = vmatprep.subr.mxu0 0.0
    %2533 = vmatpush1.xpose.msra.mxu0 0.0
    %2534 = vmatprep.subr.mxu0 0.0
    %2535 = vmatpush1.xpose.msra.mxu0 0.0
    %2536 = vmatprep.subr.mxu0 0.0
    %2537 = vmatpush1.xpose.msra.mxu0 0.0
    %2538 = vmatprep.subr.mxu0 0.0
    %2539 = vmatpush1.xpose.msra.mxu0 0.0
    %2540 = vmatprep.subr.mxu0 0.0
    %2541 = vmatpush1.xpose.msra.mxu0 0.0
    %2542 = vmatprep.subr.mxu0 0.0
    %2543 = vmatpush1.xpose.msra.mxu0 0.0
    %2544 = vmatprep.subr.mxu0 0.0
    %2545 = vmatpush1.xpose.msra.mxu0 0.0
    %2546 = vmatprep.subr.mxu0 0.0
    %2547 = vmatpush1.xpose.msra.mxu0 0.0
    %2548 = vmatprep.subr.mxu0 0.0
    %2549 = vmatpush1.xpose.msra.mxu0 0.0
    %2550 = vmatprep.subr.mxu0 0.0
    %2551 = vmatpush1.xpose.msra.mxu0 0.0
    %2552 = vmatprep.subr.mxu0 0.0
    %2553 = vmatpush1.xpose.msra.mxu0 0.0
    %2554 = vmatprep.subr.mxu0 0.0
    %2555 = vmatpush1.xpose.msra.mxu0 0.0
    %2556 = vmatprep.subr.mxu0 0.0
    %2557 = vmatpush1.xpose.msra.mxu0 0.0
    %2558 = vmatprep.subr.mxu0 0.0
    %2559 = vmatpush1.xpose.msra.mxu0 0.0
    %2560 = vmatprep.subr.mxu0 0.0
    %2561 = vmatpush1.xpose.msra.mxu0 %v2522
    %2562 = vmatprep.subr.mxu0 0.0
    %2563 = vmatpush2.xpose.msra.mxu0 0.0
    %2564 = vmatprep.subr.mxu0 0.0
    %2565 = vmatpush2.xpose.msra.mxu0 0.0
    %2566 = vmatprep.subr.mxu0 0.0
    %2567 = vmatpush2.xpose.msra.mxu0 0.0
    %2568 = vmatprep.subr.mxu0 0.0
    %2569 = vmatpush2.xpose.msra.mxu0 0.0
    %2570 = vmatprep.subr.mxu0 0.0
    %2571 = vmatpush2.xpose.msra.mxu0 0.0
    %2572 = vmatprep.subr.mxu0 0.0
    %2573 = vmatpush2.xpose.msra.mxu0 0.0
    %2574 = vmatprep.subr.mxu0 0.0
    %2575 = vmatpush2.xpose.msra.mxu0 0.0
    %2576 = vmatprep.subr.mxu0 0.0
    %2577 = vmatpush2.xpose.msra.mxu0 0.0
    %2578 = vmatprep.subr.mxu0 0.0
    %2579 = vmatpush2.xpose.msra.mxu0 0.0
    %2580 = vmatprep.subr.mxu0 0.0
    %2581 = vmatpush2.xpose.msra.mxu0 0.0
    %2582 = vmatprep.subr.mxu0 0.0
    %2583 = vmatpush2.xpose.msra.mxu0 0.0
    %2584 = vmatprep.subr.mxu0 0.0
    %2585 = vmatpush2.xpose.msra.mxu0 0.0
    %2586 = vmatprep.subr.mxu0 0.0
    %2587 = vmatpush2.xpose.msra.mxu0 0.0
    %2588 = vmatprep.subr.mxu0 0.0
    %2589 = vmatpush2.xpose.msra.mxu0 0.0
    %2590 = vmatprep.subr.mxu0 0.0
    %2591 = vmatpush2.xpose.msra.mxu0 0.0
    %2592 = vmatprep.subr.mxu0 0.0
    %2593 = vmatpush2.xpose.msra.mxu0 0.0
    %2594 = vmatprep.mubr.f32.mxu0 0.0
    %2595 = vmatmul.mubr.f32.gmra.mxu0 %v2522
    %v2596 = vpop.f32.mrf.mxu0
    %v2597 = vadd.f32 0.0, %v2596
    %v2598 = vpop.f32.mrf.mxu0
    %2599 = vdwg.mxu0
    %2600 = vmatprep.subr.mxu0 0.0
    %2601 = vmatpush1.xpose.msra.mxu0 0.0
    %2602 = vmatprep.subr.mxu0 0.0
    %2603 = vmatpush1.xpose.msra.mxu0 0.0
    %2604 = vmatprep.subr.mxu0 0.0
    %2605 = vmatpush1.xpose.msra.mxu0 0.0
    %2606 = vmatprep.subr.mxu0 0.0
    %2607 = vmatpush1.xpose.msra.mxu0 0.0
    %2608 = vmatprep.subr.mxu0 0.0
    %2609 = vmatpush1.xpose.msra.mxu0 0.0
    %2610 = vmatprep.subr.mxu0 0.0
    %2611 = vmatpush1.xpose.msra.mxu0 0.0
    %2612 = vmatprep.subr.mxu0 0.0
    %2613 = vmatpush1.xpose.msra.mxu0 0.0
    %2614 = vmatprep.subr.mxu0 0.0
    %2615 = vmatpush1.xpose.msra.mxu0 0.0
    %2616 = vmatprep.subr.mxu0 0.0
    %2617 = vmatpush1.xpose.msra.mxu0 0.0
    %2618 = vmatprep.subr.mxu0 0.0
    %2619 = vmatpush1.xpose.msra.mxu0 0.0
    %2620 = vmatprep.subr.mxu0 0.0
    %2621 = vmatpush1.xpose.msra.mxu0 0.0
    %2622 = vmatprep.subr.mxu0 0.0
    %2623 = vmatpush1.xpose.msra.mxu0 0.0
    %2624 = vmatprep.subr.mxu0 0.0
    %2625 = vmatpush1.xpose.msra.mxu0 0.0
    %2626 = vmatprep.subr.mxu0 0.0
    %2627 = vmatpush1.xpose.msra.mxu0 0.0
    %2628 = vmatprep.subr.mxu0 0.0
    %2629 = vmatpush1.xpose.msra.mxu0 0.0
    %2630 = vmatprep.subr.mxu0 0.0
    %2631 = vmatpush1.xpose.msra.mxu0 %v2529
    %2632 = vmatprep.subr.mxu0 0.0
    %2633 = vmatpush2.xpose.msra.mxu0 0.0
    %2634 = vmatprep.subr.mxu0 0.0
    %2635 = vmatpush2.xpose.msra.mxu0 0.0
    %2636 = vmatprep.subr.mxu0 0.0
    %2637 = vmatpush2.xpose.msra.mxu0 0.0
    %2638 = vmatprep.subr.mxu0 0.0
    %2639 = vmatpush2.xpose.msra.mxu0 0.0
    %2640 = vmatprep.subr.mxu0 0.0
    %2641 = vmatpush2.xpose.msra.mxu0 0.0
    %2642 = vmatprep.subr.mxu0 0.0
    %2643 = vmatpush2.xpose.msra.mxu0 0.0
    %2644 = vmatprep.subr.mxu0 0.0
    %2645 = vmatpush2.xpose.msra.mxu0 0.0
    %2646 = vmatprep.subr.mxu0 0.0
    %2647 = vmatpush2.xpose.msra.mxu0 0.0
    %2648 = vmatprep.subr.mxu0 0.0
    %2649 = vmatpush2.xpose.msra.mxu0 0.0
    %2650 = vmatprep.subr.mxu0 0.0
    %2651 = vmatpush2.xpose.msra.mxu0 0.0
    %2652 = vmatprep.subr.mxu0 0.0
    %2653 = vmatpush2.xpose.msra.mxu0 0.0
    %2654 = vmatprep.subr.mxu0 0.0
    %2655 = vmatpush2.xpose.msra.mxu0 0.0
    %2656 = vmatprep.subr.mxu0 0.0
    %2657 = vmatpush2.xpose.msra.mxu0 0.0
    %2658 = vmatprep.subr.mxu0 0.0
    %2659 = vmatpush2.xpose.msra.mxu0 0.0
    %2660 = vmatprep.subr.mxu0 0.0
    %2661 = vmatpush2.xpose.msra.mxu0 0.0
    %2662 = vmatprep.subr.mxu0 0.0
    %2663 = vmatpush2.xpose.msra.mxu0 0.0
    %2664 = vmatprep.mubr.f32.mxu0 0.0
    %2665 = vmatmul.mubr.f32.gmra.mxu0 %v2529
    %v2666 = vpop.f32.mrf.mxu0
    %v2667 = vadd.f32 0.0, %v2666
    %v2668 = vpop.f32.mrf.mxu0
    %2669 = vdwg.mxu0
    %vm2670 = vcmask 9216
    %v2671 = vsel %vm2670, %v2597, -inf
    %2672 = vmax.xlane.f32.xlu0 %v2671
    %v2673 = vpop.xlane.xlu0 %2672
    %v2674 = vsub.f32 %v2597, %v2673
    %v2675 = vmul.f32 %v2674, 1.442695
    %v2676 = vpow.pop %v2675
    %v2677 = vsel %vm2670, %v2676, 0.0
    %2678 = vadd.xlane.f32.xlu0 %v2677
    %v2679 = vpop.xlane.xlu0 %2678
    %v2680 = vlog2.pop %v2679
    %v2681 = vmul.f32 %v2680, 0.6931472
    %v2682 = vadd.f32 %v2681, %v2673
    %v2683 = vsel %vm2670, %v2667, -inf
    %2684 = vmax.xlane.f32.xlu0 %v2683
    %v2685 = vpop.xlane.xlu0 %2684
    %v2686 = vsub.f32 %v2667, %v2685
    %v2687 = vmul.f32 %v2686, 1.442695
    %v2688 = vpow.pop %v2687
    %v2689 = vsel %vm2670, %v2688, 0.0
    %2690 = vadd.xlane.f32.xlu0 %v2689
    %v2691 = vpop.xlane.xlu0 %2690
    %v2692 = vlog2.pop %v2691
    %v2693 = vmul.f32 %v2692, 0.6931472
    %v2694 = vadd.f32 %v2693, %v2685
    %v2695 = vsub.f32 %v2597, %v2682
    %v2696 = vsub.f32 %v2667, %v2694
    %v2697 = vmul.f32 %v2695, 1.442695
    %v2698 = vpow.pop %v2697
    %v2699 = vsub.f32 %v2695, %v2696
    %v2700 = vmul.f32 %v2698, %v2699
    %v2701 = vsel %vm2670, %v2700, 0.0
    %2702 = vadd.xlane.f32.xlu0 %v2701
    %v2703 = vpop.xlane.xlu0 %2702
    %v2704 = vrot.slane %v2703, 4
    %v2705 = vadd.f32 %v2703, %v2704
    %v2706 = vrot.slane %v2705, 2
    %v2707 = vadd.f32 %v2705, %v2706
    %v2708 = vrot.slane %v2707, 1
    %v2709 = vadd.f32 %v2707, %v2708
    %s2710 = vtos %v2709
    %s2711 = smul.f32 %s2710, 0.5
    %v2712 = vld [vmem:[%s43] sm:$0xff]
    %v2713 = vld [vmem:[%s43 + $0x8] sm:$0xff]
    %v2714 = vpack.c.bf16 %v2713, %v2712
    %v2715 = vld [vmem:[%s41] sm:$0xff]
    %v2716 = vld [vmem:[%s41 + $0x8] sm:$0xf]
    %v2717 = vld [vmem:[%s41 + $0xc] sm:$0xff]
    %v2718 = vld [vmem:[%s41 + $0x14] sm:$0xf]
    %v2719 = vld [vmem:[%s41 + $0x18] sm:$0xff]
    %v2720 = vld [vmem:[%s41 + $0x20] sm:$0xf]
    %v2721 = vld [vmem:[%s41 + $0x24] sm:$0xff]
    %v2722 = vld [vmem:[%s41 + $0x2c] sm:$0xf]
    %v2723 = vld [vmem:[%s41 + $0x30] sm:$0xff]
    %v2724 = vld [vmem:[%s41 + $0x38] sm:$0xf]
    %v2725 = vld [vmem:[%s41 + $0x3c] sm:$0xff]
    %v2726 = vld [vmem:[%s41 + $0x44] sm:$0xf]
    %v2727 = vld [vmem:[%s41 + $0x48] sm:$0xff]
    %v2728 = vld [vmem:[%s41 + $0x50] sm:$0xf]
    %v2729 = vld [vmem:[%s41 + $0x54] sm:$0xff]
    %v2730 = vld [vmem:[%s41 + $0x5c] sm:$0xf]
    %v2731 = vld [vmem:[%s41 + $0x60] sm:$0xff]
    %v2732 = vld [vmem:[%s41 + $0x68] sm:$0xf]
    %v2733 = vld [vmem:[%s41 + $0x6c] sm:$0xff]
    %v2734 = vld [vmem:[%s41 + $0x74] sm:$0xf]
    %v2735 = vld [vmem:[%s41 + $0x78] sm:$0xff]
    %v2736 = vld [vmem:[%s41 + $0x80] sm:$0xf]
    %v2737 = vld [vmem:[%s41 + $0x84] sm:$0xff]
    %v2738 = vld [vmem:[%s41 + $0x8c] sm:$0xf]
    %v2739 = vld [vmem:[%s41 + $0x90] sm:$0xff]
    %v2740 = vld [vmem:[%s41 + $0x98] sm:$0xf]
    %v2741 = vld [vmem:[%s41 + $0x9c] sm:$0xff]
    %v2742 = vld [vmem:[%s41 + $0xa4] sm:$0xf]
    %v2743 = vld [vmem:[%s41 + $0xa8] sm:$0xff]
    %v2744 = vld [vmem:[%s41 + $0xb0] sm:$0xf]
    %v2745 = vld [vmem:[%s41 + $0xb4] sm:$0xff]
    %v2746 = vld [vmem:[%s41 + $0xbc] sm:$0xf]
    %v2779 = vunpack.c.l.b16 %v2715
    %v2780 = vunpack.c.h.b16 %v2715
    %v2781 = vunpack.c.l.b16 %v2716
    %v2782 = vunpack.c.l.b16 %v2717
    %v2783 = vunpack.c.h.b16 %v2717
    %v2784 = vunpack.c.l.b16 %v2718
    %v2785 = vunpack.c.l.b16 %v2719
    %v2786 = vunpack.c.h.b16 %v2719
    %v2787 = vunpack.c.l.b16 %v2720
    %v2788 = vunpack.c.l.b16 %v2721
    %v2789 = vunpack.c.h.b16 %v2721
    %v2790 = vunpack.c.l.b16 %v2722
    %v2791 = vunpack.c.l.b16 %v2723
    %v2792 = vunpack.c.h.b16 %v2723
    %v2793 = vunpack.c.l.b16 %v2724
    %v2794 = vunpack.c.l.b16 %v2725
    %v2795 = vunpack.c.h.b16 %v2725
    %v2796 = vunpack.c.l.b16 %v2726
    %v2797 = vunpack.c.l.b16 %v2727
    %v2798 = vunpack.c.h.b16 %v2727
    %v2799 = vunpack.c.l.b16 %v2728
    %v2800 = vunpack.c.l.b16 %v2729
    %v2801 = vunpack.c.h.b16 %v2729
    %v2802 = vunpack.c.l.b16 %v2730
    %v2803 = vunpack.c.l.b16 %v2731
    %v2804 = vunpack.c.h.b16 %v2731
    %v2805 = vunpack.c.l.b16 %v2732
    %v2806 = vunpack.c.l.b16 %v2733
    %v2807 = vunpack.c.h.b16 %v2733
    %v2808 = vunpack.c.l.b16 %v2734
    %v2809 = vunpack.c.l.b16 %v2735
    %v2810 = vunpack.c.h.b16 %v2735
    %v2811 = vunpack.c.l.b16 %v2736
    %v2812 = vunpack.c.l.b16 %v2737
    %v2813 = vunpack.c.h.b16 %v2737
    %v2814 = vunpack.c.l.b16 %v2738
    %v2815 = vunpack.c.l.b16 %v2739
    %v2816 = vunpack.c.h.b16 %v2739
    %v2817 = vunpack.c.l.b16 %v2740
    %v2818 = vunpack.c.l.b16 %v2741
    %v2819 = vunpack.c.h.b16 %v2741
    %v2820 = vunpack.c.l.b16 %v2742
    %v2821 = vunpack.c.l.b16 %v2743
    %v2822 = vunpack.c.h.b16 %v2743
    %v2823 = vunpack.c.l.b16 %v2744
    %v2824 = vunpack.c.l.b16 %v2745
    %v2825 = vunpack.c.h.b16 %v2745
    %v2826 = vunpack.c.l.b16 %v2746
    %v2827 = vpack.c.b16 %v2782, %v2779
    %v2828 = vpack.c.b16 %v2783, %v2780
    %v2829 = vpack.c.b16 %v2784, %v2781
    %v2830 = vpack.c.b16 %v2788, %v2785
    %v2831 = vpack.c.b16 %v2789, %v2786
    %v2832 = vpack.c.b16 %v2790, %v2787
    %v2833 = vpack.c.b16 %v2794, %v2791
    %v2834 = vpack.c.b16 %v2795, %v2792
    %v2835 = vpack.c.b16 %v2796, %v2793
    %v2836 = vpack.c.b16 %v2800, %v2797
    %v2837 = vpack.c.b16 %v2801, %v2798
    %v2838 = vpack.c.b16 %v2802, %v2799
    %v2839 = vpack.c.b16 %v2806, %v2803
    %v2840 = vpack.c.b16 %v2807, %v2804
    %v2841 = vpack.c.b16 %v2808, %v2805
    %v2842 = vpack.c.b16 %v2812, %v2809
    %v2843 = vpack.c.b16 %v2813, %v2810
    %v2844 = vpack.c.b16 %v2814, %v2811
    %v2845 = vpack.c.b16 %v2818, %v2815
    %v2846 = vpack.c.b16 %v2819, %v2816
    %v2847 = vpack.c.b16 %v2820, %v2817
    %v2848 = vpack.c.b16 %v2824, %v2821
    %v2849 = vpack.c.b16 %v2825, %v2822
    %v2850 = vpack.c.b16 %v2826, %v2823
    %2875 = vmatprep.subr.bf16.mxu0 %v2849
    %2876 = vmatpush1.bf16.msra.mxu0 %v2848
    %2877 = vmatprep.subr.bf16.mxu0 %v2846
    %2878 = vmatpush1.bf16.msra.mxu0 %v2845
    %2879 = vmatprep.subr.bf16.mxu0 %v2843
    %2880 = vmatpush1.bf16.msra.mxu0 %v2842
    %2881 = vmatprep.subr.bf16.mxu0 %v2840
    %2882 = vmatpush1.bf16.msra.mxu0 %v2839
    %2883 = vmatprep.subr.bf16.mxu0 %v2837
    %2884 = vmatpush1.bf16.msra.mxu0 %v2836
    %2885 = vmatprep.subr.bf16.mxu0 %v2834
    %2886 = vmatpush1.bf16.msra.mxu0 %v2833
    %2887 = vmatprep.subr.bf16.mxu0 %v2831
    %2888 = vmatpush1.bf16.msra.mxu0 %v2830
    %2889 = vmatprep.subr.bf16.mxu0 %v2828
    %2890 = vmatpush1.bf16.msra.mxu0 %v2827
    %2891 = vmatprep.subr.bf16.mxu0 0
    %2892 = vmatpush2.bf16.msra.mxu0 0
    %2893 = vmatprep.subr.bf16.mxu0 0
    %2894 = vmatpush2.bf16.msra.mxu0 0
    %2895 = vmatprep.subr.bf16.mxu0 0
    %2896 = vmatpush2.bf16.msra.mxu0 0
    %2897 = vmatprep.subr.bf16.mxu0 0
    %2898 = vmatpush2.bf16.msra.mxu0 0
    %2899 = vmatprep.subr.bf16.mxu0 0
    %2900 = vmatpush2.bf16.msra.mxu0 0
    %2901 = vmatprep.subr.bf16.mxu0 0
    %2902 = vmatpush2.bf16.msra.mxu0 0
    %2903 = vmatprep.subr.bf16.mxu0 0
    %2904 = vmatpush2.bf16.msra.mxu0 0
    %2905 = vmatprep.subr.bf16.mxu0 0
    %2906 = vmatpush2.bf16.msra.mxu0 0
    %2907 = vmatprep.mubr.bf16.mxu0 0
    %2908 = vmatmul.mubr.bf16.gmra.mxu0 %v2714
    %v2909 = vpop.f32.mrf.mxu0
    %v2910 = vadd.f32 0.0, %v2909
    %v2911 = vpop.f32.mrf.mxu0
    %v2912 = vadd.f32 0.0, %v2911
    %v2913 = vpop.f32.mrf.mxu0
    %v2914 = vadd.f32 0.0, %v2913
    %v2915 = vpop.f32.mrf.mxu0
    %v2916 = vadd.f32 0.0, %v2915
    %2917 = vdwg.mxu0
    %2918 = vmatprep.subr.bf16.mxu0 0
    %2919 = vmatpush1.bf16.msra.mxu0 %v2850
    %2920 = vmatprep.subr.bf16.mxu0 0
    %2921 = vmatpush1.bf16.msra.mxu0 %v2847
    %2922 = vmatprep.subr.bf16.mxu0 0
    %2923 = vmatpush1.bf16.msra.mxu0 %v2844
    %2924 = vmatprep.subr.bf16.mxu0 0
    %2925 = vmatpush1.bf16.msra.mxu0 %v2841
    %2926 = vmatprep.subr.bf16.mxu0 0
    %2927 = vmatpush1.bf16.msra.mxu0 %v2838
    %2928 = vmatprep.subr.bf16.mxu0 0
    %2929 = vmatpush1.bf16.msra.mxu0 %v2835
    %2930 = vmatprep.subr.bf16.mxu0 0
    %2931 = vmatpush1.bf16.msra.mxu0 %v2832
    %2932 = vmatprep.subr.bf16.mxu0 0
    %2933 = vmatpush1.bf16.msra.mxu0 %v2829
    %2934 = vmatprep.subr.bf16.mxu0 0
    %2935 = vmatpush2.bf16.msra.mxu0 0
    %2936 = vmatprep.subr.bf16.mxu0 0
    %2937 = vmatpush2.bf16.msra.mxu0 0
    %2938 = vmatprep.subr.bf16.mxu0 0
    %2939 = vmatpush2.bf16.msra.mxu0 0
    %2940 = vmatprep.subr.bf16.mxu0 0
    %2941 = vmatpush2.bf16.msra.mxu0 0
    %2942 = vmatprep.subr.bf16.mxu0 0
    %2943 = vmatpush2.bf16.msra.mxu0 0
    %2944 = vmatprep.subr.bf16.mxu0 0
    %2945 = vmatpush2.bf16.msra.mxu0 0
    %2946 = vmatprep.subr.bf16.mxu0 0
    %2947 = vmatpush2.bf16.msra.mxu0 0
    %2948 = vmatprep.subr.bf16.mxu0 0
    %2949 = vmatpush2.bf16.msra.mxu0 0
    %2950 = vmatprep.mubr.bf16.mxu0 0
    %2951 = vmatmul.mubr.bf16.gmra.mxu0 %v2714
    %v2952 = vpop.f32.mrf.mxu0
    %v2953 = vadd.f32 0.0, %v2952
    %v2954 = vpop.f32.mrf.mxu0
    %v2955 = vpop.f32.mrf.mxu0
    %v2956 = vadd.f32 0.0, %v2955
    %v2957 = vpop.f32.mrf.mxu0
    %2958 = vdwg.mxu0
    %v2959 = vld [vmem:[%s45] sm:$0x1]
    %v2960 = vcvt.s32.f32 %v2959
    %v2961 = vlaneseq
    %v2962 = vshrl.u32 %v2961, 7
    %v2963 = vadd.s32 %v2962, 8
    %v2964 = vlaneseq
    %v2965 = vand.u32 %v2964, 127
    %vm2966 = vcmp.eq.s32.totalorder %v2962, %v2965
    %vm2967 = vcmp.eq.s32.totalorder %v2963, %v2965
    %v2969 = vlaneseq
    %v2970 = vshrl.u32 %v2969, 7
    %v2971 = vsub.s32 0, %v2970
    %v2972 = vrot.slane %v2960, %v2971
    %v2974 = vsel %vm2966, %v2972, 0.0
    %v2975 = vsel %vm2967, %v2972, 0.0
    %vm2976 = vcmask 130048
    %v2977 = vsel %vm2976, %v2974, 0.0
    %2978 = vadd.xlane.f32.xlu0 %v2977
    %v2979 = vpop.xlane.xlu0 %2978
    %v2980 = vsel %vm2976, %v2975, 0.0
    %2981 = vadd.xlane.f32.xlu0 %v2980
    %v2982 = vpop.xlane.xlu0 %2981
    %vm2983 = vcmp.ge.f32.partialorder %v2979, 0.0
    %vm2984 = vcmp.ge.f32.partialorder %v2982, 0.0
    %v2985 = vsel %vm2983, 1, 0
    %v2986 = vsel %vm2984, 1, 0
    %v2987 = vcvt.s32.f32 %v2985
    %v2988 = vcvt.s32.f32 %v2986
    %v2989 = vmax.f32 %v2910, %v2953
    %v2990 = vmax.f32 %v2989, %v2912
    %2991 = vmax.xlane.f32.xlu0 %v2990
    %v2992 = vpop.xlane.xlu0 %2991
    %v2993 = vmax.f32 %v2914, %v2956
    %v2994 = vmax.f32 %v2993, %v2916
    %2995 = vmax.xlane.f32.xlu0 %v2994
    %v2996 = vpop.xlane.xlu0 %2995
    %v2997 = vsub.f32 %v2910, %v2992
    %v2998 = vsub.f32 %v2912, %v2992
    %v2999 = vsub.f32 %v2953, %v2992
    %v3000 = vsub.f32 %v2914, %v2996
    %v3001 = vsub.f32 %v2916, %v2996
    %v3002 = vsub.f32 %v2956, %v2996
    %v3003 = vmul.f32 %v2997, 1.442695
    %v3004 = vpow.pop %v3003
    %v3005 = vmul.f32 %v2998, 1.442695
    %v3006 = vpow.pop %v3005
    %v3007 = vmul.f32 %v2999, 1.442695
    %v3008 = vpow.pop %v3007
    %v3009 = vmul.f32 %v3000, 1.442695
    %v3010 = vpow.pop %v3009
    %v3011 = vmul.f32 %v3001, 1.442695
    %v3012 = vpow.pop %v3011
    %v3013 = vmul.f32 %v3002, 1.442695
    %v3014 = vpow.pop %v3013
    %v3015 = vadd.f32 %v3004, %v3006
    %v3016 = vadd.f32 %v3015, %v3008
    %3017 = vadd.xlane.f32.xlu0 %v3016
    %v3018 = vpop.xlane.xlu0 %3017
    %v3019 = vadd.f32 %v3010, %v3012
    %v3020 = vadd.f32 %v3019, %v3014
    %3021 = vadd.xlane.f32.xlu0 %v3020
    %v3022 = vpop.xlane.xlu0 %3021
    %v3023 = vlog2.pop %v3018
    %v3024 = vmul.f32 %v3023, 0.6931472
    %v3025 = vlog2.pop %v3022
    %v3026 = vmul.f32 %v3025, 0.6931472
    %v3027 = vadd.f32 %v3024, %v2992
    %v3028 = vadd.f32 %v3026, %v2996
    %v3029 = vadd.s32 %v2965, 128
    %v3030 = vadd.s32 %v2965, 256
    %v3031 = vsel %vm2983, %v2979, 0.0
    %v3032 = vsel %vm2984, %v2982, 0.0
    %v3033 = vcvt.f32.s32.to.zero.pseudo %v3031
    %v3034 = vcvt.f32.s32.to.zero.pseudo %v3032
    %vm3035 = vcmp.eq.s32.totalorder %v2965, %v3033
    %vm3036 = vcmp.eq.s32.totalorder %v3029, %v3033
    %vm3037 = vcmp.eq.s32.totalorder %v3030, %v3033
    %vm3038 = vcmp.eq.s32.totalorder %v2965, %v3034
    %vm3039 = vcmp.eq.s32.totalorder %v3029, %v3034
    %vm3040 = vcmp.eq.s32.totalorder %v3030, %v3034
    %v3041 = vsel %vm3035, %v2910, 0.0
    %v3042 = vsel %vm3036, %v2912, 0.0
    %v3043 = vsel %vm3037, %v2953, 0.0
    %v3044 = vsel %vm3038, %v2914, 0.0
    %v3045 = vsel %vm3039, %v2916, 0.0
    %v3046 = vsel %vm3040, %v2956, 0.0
    %v3047 = vadd.f32 %v3041, %v3042
    %v3048 = vadd.f32 %v3047, %v3043
    %3049 = vadd.xlane.f32.xlu0 %v3048
    %v3050 = vpop.xlane.xlu0 %3049
    %v3051 = vadd.f32 %v3044, %v3045
    %v3052 = vadd.f32 %v3051, %v3046
    %3053 = vadd.xlane.f32.xlu0 %v3052
    %v3054 = vpop.xlane.xlu0 %3053
    %v3055 = vsub.f32 %v3027, %v3050
    %v3056 = vsub.f32 %v3028, %v3054
    %v3057 = vmul.f32 %v3055, %v2987
    %v3058 = vmul.f32 %v3056, %v2988
    %vm3059 = vcmask 7168
    %v3060 = vsel %vm3059, %v3057, 0.0
    %v3061 = vsel %vm3059, %v3058, 0.0
    %v3062 = vadd.f32 %v3060, %v3061
    %3063 = vadd.xlane.f32.xlu0 %v3062
    %v3064 = vpop.xlane.xlu0 %3063
    %v3065 = vrot.slane %v3064, 4
    %v3066 = vadd.f32 %v3064, %v3065
    %v3067 = vrot.slane %v3066, 2
    %v3068 = vadd.f32 %v3066, %v3067
    %v3069 = vrot.slane %v3068, 1
    %v3070 = vadd.f32 %v3068, %v3069
    %s3071 = vtos %v3070
    %v3072 = vsel %vm3059, %v2987, 0.0
    %v3073 = vsel %vm3059, %v2988, 0.0
    %v3074 = vadd.f32 %v3072, %v3073
    %3075 = vadd.xlane.f32.xlu0 %v3074
    %v3076 = vpop.xlane.xlu0 %3075
    %v3077 = vrot.slane %v3076, 4
    %v3078 = vadd.f32 %v3076, %v3077
    %v3079 = vrot.slane %v3078, 2
    %v3080 = vadd.f32 %v3078, %v3079
    %v3081 = vrot.slane %v3080, 1
    %v3082 = vadd.f32 %v3080, %v3081
    %s3083 = vtos %v3082
    %s3084 = smax.f32 %s3083, 1.0
    %v3085 = vstv %s3084
    %v3086 = vrcp.pop %v3085
    %s3087 = vtos %v3086
    %s3088 = smul.f32 %s3071, %s3087
    %v3089 = vld [vmem:[%s47] sm:$0xff]
    %v3090 = vld [vmem:[%s47 + $0x8] sm:$0x3]
    %v3091 = vld [vmem:[%s49] sm:$0xff]
    %v3092 = vld [vmem:[%s49 + $0x8] sm:$0x3]
    %3093 = vmatprep.subr.mxu0 0.0
    %3094 = vmatpush1.xpose.msra.mxu0 0.0
    %3095 = vmatprep.subr.mxu0 0.0
    %3096 = vmatpush1.xpose.msra.mxu0 0.0
    %3097 = vmatprep.subr.mxu0 0.0
    %3098 = vmatpush1.xpose.msra.mxu0 0.0
    %3099 = vmatprep.subr.mxu0 0.0
    %3100 = vmatpush1.xpose.msra.mxu0 0.0
    %3101 = vmatprep.subr.mxu0 0.0
    %3102 = vmatpush1.xpose.msra.mxu0 0.0
    %3103 = vmatprep.subr.mxu0 0.0
    %3104 = vmatpush1.xpose.msra.mxu0 0.0
    %3105 = vmatprep.subr.mxu0 0.0
    %3106 = vmatpush1.xpose.msra.mxu0 0.0
    %3107 = vmatprep.subr.mxu0 0.0
    %3108 = vmatpush1.xpose.msra.mxu0 0.0
    %3109 = vmatprep.subr.mxu0 0.0
    %3110 = vmatpush1.xpose.msra.mxu0 0.0
    %3111 = vmatprep.subr.mxu0 0.0
    %3112 = vmatpush1.xpose.msra.mxu0 0.0
    %3113 = vmatprep.subr.mxu0 0.0
    %3114 = vmatpush1.xpose.msra.mxu0 0.0
    %3115 = vmatprep.subr.mxu0 0.0
    %3116 = vmatpush1.xpose.msra.mxu0 0.0
    %3117 = vmatprep.subr.mxu0 0.0
    %3118 = vmatpush1.xpose.msra.mxu0 0.0
    %3119 = vmatprep.subr.mxu0 0.0
    %3120 = vmatpush1.xpose.msra.mxu0 0.0
    %3121 = vmatprep.subr.mxu0 0.0
    %3122 = vmatpush1.xpose.msra.mxu0 %v3092
    %3123 = vmatprep.subr.mxu0 0.0
    %3124 = vmatpush1.xpose.msra.mxu0 %v3091
    %3125 = vmatprep.subr.mxu0 0.0
    %3126 = vmatpush2.xpose.msra.mxu0 0.0
    %3127 = vmatprep.subr.mxu0 0.0
    %3128 = vmatpush2.xpose.msra.mxu0 0.0
    %3129 = vmatprep.subr.mxu0 0.0
    %3130 = vmatpush2.xpose.msra.mxu0 0.0
    %3131 = vmatprep.subr.mxu0 0.0
    %3132 = vmatpush2.xpose.msra.mxu0 0.0
    %3133 = vmatprep.subr.mxu0 0.0
    %3134 = vmatpush2.xpose.msra.mxu0 0.0
    %3135 = vmatprep.subr.mxu0 0.0
    %3136 = vmatpush2.xpose.msra.mxu0 0.0
    %3137 = vmatprep.subr.mxu0 0.0
    %3138 = vmatpush2.xpose.msra.mxu0 0.0
    %3139 = vmatprep.subr.mxu0 0.0
    %3140 = vmatpush2.xpose.msra.mxu0 0.0
    %3141 = vmatprep.subr.mxu0 0.0
    %3142 = vmatpush2.xpose.msra.mxu0 0.0
    %3143 = vmatprep.subr.mxu0 0.0
    %3144 = vmatpush2.xpose.msra.mxu0 0.0
    %3145 = vmatprep.subr.mxu0 0.0
    %3146 = vmatpush2.xpose.msra.mxu0 0.0
    %3147 = vmatprep.subr.mxu0 0.0
    %3148 = vmatpush2.xpose.msra.mxu0 0.0
    %3149 = vmatprep.subr.mxu0 0.0
    %3150 = vmatpush2.xpose.msra.mxu0 0.0
    %3151 = vmatprep.subr.mxu0 0.0
    %3152 = vmatpush2.xpose.msra.mxu0 0.0
    %3153 = vmatprep.subr.mxu0 0.0
    %3154 = vmatpush2.xpose.msra.mxu0 0.0
    %3155 = vmatprep.subr.mxu0 0.0
    %3156 = vmatpush2.xpose.msra.mxu0 0.0
    %3157 = vmatprep.mubr.f32.mxu0 0.0
    %3158 = vmatmul.mubr.f32.gmra.mxu0 %v3089
    %v3159 = vpop.f32.mrf.mxu0
    %v3160 = vadd.f32 0.0, %v3159
    %v3161 = vpop.f32.mrf.mxu0
    %3162 = vmatprep.mubr.f32.mxu0 0.0
    %3163 = vmatmul.mubr.f32.gmra.mxu0 %v3090
    %v3164 = vpop.f32.mrf.mxu0
    %v3165 = vadd.f32 0.0, %v3164
    %v3166 = vpop.f32.mrf.mxu0
    %3167 = vdwg.mxu0
    %v3168 = vld [vmem:[%s55] sm:$0xff]
    %v3169 = vld [vmem:[%s55 + $0x8] sm:$0x3]
    %v3170 = vld [vmem:[%s57] sm:$0x1]
    %3172 = vset.pattern.permute.xlu0 0
    %3173 = vperm.xlu0 %3172, %v3168
    %v3174 = vpop.permute.xlu0 %3173
    %3177 = vset.pattern.permute.xlu0 0
    %3178 = vperm.xlu0 %3177, %v3169
    %v3179 = vpop.permute.xlu0 %3178
    %v3182 = vlaneseq
    %v3183 = vshrl.u32 %v3182, 7
    %v3184 = vsub.s32 0, %v3183
    %v3185 = vrot.slane %v3170, %v3184
    %vm3187 = vcmp.eq.f32.partialorder %v3174, %v3185
    %vm3188 = vcmp.eq.f32.partialorder %v3179, %v3185
    %v3189 = vld [vmem:[%s53] sm:$0x1]
    %vm3190 = vcmp.gt.f32.partialorder %v3189, 0.0
    %v3191 = vsel %vm3190, 1, 0
    %v3192 = vlaneseq
    %v3193 = vshrl.u32 %v3192, 7
    %v3194 = vsub.s32 0, %v3193
    %v3195 = vrot.slane %v3191, %v3194
    %vm3196 = vcmp.eq.s32.totalorder %v3195, 1
    %vm3197 = vmand %vm3187, %vm3196
    %vm3198 = vmand %vm3188, %vm3196
    %v3199 = vsel %vm3197, %v3160, -1e+30
    %v3200 = vsel %vm3198, %v3165, -1e+30
    %vm3201 = vcmask 80896
    %v3202 = vsel %vm3201, %v3199, -inf
    %3203 = vmax.xlane.f32.xlu0 %v3202
    %v3204 = vpop.xlane.xlu0 %3203
    %vm3205 = vcmask 74752
    %v3206 = vsel %vm3205, %v3200, -inf
    %3207 = vmax.xlane.f32.xlu0 %v3206
    %v3208 = vpop.xlane.xlu0 %3207
    %v3209 = vsub.f32 %v3199, %v3204
    %v3210 = vsub.f32 %v3200, %v3208
    %v3211 = vmul.f32 %v3209, 1.442695
    %v3212 = vpow.pop %v3211
    %v3213 = vmul.f32 %v3210, 1.442695
    %v3214 = vpow.pop %v3213
    %v3215 = vsel %vm3201, %v3212, 0.0
    %3216 = vadd.xlane.f32.xlu0 %v3215
    %v3217 = vpop.xlane.xlu0 %3216
    %v3218 = vsel %vm3205, %v3214, 0.0
    %3219 = vadd.xlane.f32.xlu0 %v3218
    %v3220 = vpop.xlane.xlu0 %3219
    %v3221 = vlog2.pop %v3217
    %v3222 = vmul.f32 %v3221, 0.6931472
    %v3223 = vlog2.pop %v3220
    %v3224 = vmul.f32 %v3223, 0.6931472
    %v3225 = vadd.f32 %v3222, %v3204
    %v3226 = vadd.f32 %v3224, %v3208
    %v3227 = vsel %vm2966, %v3160, 0.0
    %v3228 = vsel %vm2967, %v3165, 0.0
    %v3229 = vsel %vm3201, %v3227, 0.0
    %3230 = vadd.xlane.f32.xlu0 %v3229
    %v3231 = vpop.xlane.xlu0 %3230
    %v3232 = vsel %vm3205, %v3228, 0.0
    %3233 = vadd.xlane.f32.xlu0 %v3232
    %v3234 = vpop.xlane.xlu0 %3233
    %v3235 = vsub.f32 %v3231, %v3225
    %v3236 = vsub.f32 %v3234, %v3226
    %v3237 = vld [vmem:[%s51] sm:$0xff]
    %v3238 = vld [vmem:[%s51 + $0x8] sm:$0x3]
    %vm3239 = vcmp.eq.f32.partialorder %v3168, 0.0
    %vm3240 = vcmp.eq.f32.partialorder %v3169, 0.0
    %v3241 = vsel %vm3239, 1, 0
    %v3242 = vsel %vm3240, 1, 0
    %v3243 = vcvt.s32.f32 %v3241
    %v3244 = vcvt.s32.f32 %v3242
    %v3245 = vsub.f32 0.0, %v3235
    %v3246 = vsub.f32 0.0, %v3236
    %v3247 = vmul.f32 %v3245, %v3237
    %v3248 = vmul.f32 %v3246, %v3238
    %v3249 = vmul.f32 %v3247, %v3243
    %v3250 = vmul.f32 %v3248, %v3244
    %v3251 = vsel %vm3059, %v3249, 0.0
    %v3252 = vsel %vm2122, %v3250, 0.0
    %v3253 = vadd.f32 %v3251, %v3252
    %3254 = vadd.xlane.f32.xlu0 %v3253
    %v3255 = vpop.xlane.xlu0 %3254
    %v3256 = vrot.slane %v3255, 4
    %v3257 = vadd.f32 %v3255, %v3256
    %v3258 = vrot.slane %v3257, 2
    %v3259 = vadd.f32 %v3257, %v3258
    %v3260 = vrot.slane %v3259, 1
    %v3261 = vadd.f32 %v3259, %v3260
    %s3262 = vtos %v3261
    %v3263 = vmul.f32 %v3237, %v3243
    %v3264 = vmul.f32 %v3238, %v3244
    %v3265 = vsel %vm3059, %v3263, 0.0
    %v3266 = vsel %vm2122, %v3264, 0.0
    %v3267 = vadd.f32 %v3265, %v3266
    %3268 = vadd.xlane.f32.xlu0 %v3267
    %v3269 = vpop.xlane.xlu0 %3268
    %v3270 = vrot.slane %v3269, 4
    %v3271 = vadd.f32 %v3269, %v3270
    %v3272 = vrot.slane %v3271, 2
    %v3273 = vadd.f32 %v3271, %v3272
    %v3274 = vrot.slane %v3273, 1
    %v3275 = vadd.f32 %v3273, %v3274
    %s3276 = vtos %v3275
    %p3277 = scmp.gt.f32.partialorder %s3276, 0.0
    %s3278 = scalar_select %p3277, 1, 0
    %s3279 = scvt.s32.f32 %s3278
    %s3280 = smul.f32 %s3279, %s3262
    %s3281 = smax.f32 %s3276, 1e-12
    %v3282 = vstv %s3281
    %v3283 = vrcp.pop %v3282
    %s3284 = vtos %v3283
    %s3285 = smul.f32 %s3280, %s3284
    %s3286 = sadd.f32 %s3285, 0.0
    %s3287 = sadd.f32 %s3279, 0.0
    %vm3288 = vcmp.eq.f32.partialorder %v3168, 1.0
    %vm3289 = vcmp.eq.f32.partialorder %v3169, 1.0
    %v3290 = vsel %vm3288, 1, 0
    %v3291 = vsel %vm3289, 1, 0
    %v3292 = vcvt.s32.f32 %v3290
    %v3293 = vcvt.s32.f32 %v3291
    %v3294 = vmul.f32 %v3247, %v3292
    %v3295 = vmul.f32 %v3248, %v3293
    %v3296 = vsel %vm3059, %v3294, 0.0
    %v3297 = vsel %vm2122, %v3295, 0.0
    %v3298 = vadd.f32 %v3296, %v3297
    %3299 = vadd.xlane.f32.xlu0 %v3298
    %v3300 = vpop.xlane.xlu0 %3299
    %v3301 = vrot.slane %v3300, 4
    %v3302 = vadd.f32 %v3300, %v3301
    %v3303 = vrot.slane %v3302, 2
    %v3304 = vadd.f32 %v3302, %v3303
    %v3305 = vrot.slane %v3304, 1
    %v3306 = vadd.f32 %v3304, %v3305
    %s3307 = vtos %v3306
    %v3308 = vmul.f32 %v3237, %v3292
    %v3309 = vmul.f32 %v3238, %v3293
    %v3310 = vsel %vm3059, %v3308, 0.0
    %v3311 = vsel %vm2122, %v3309, 0.0
    %v3312 = vadd.f32 %v3310, %v3311
    %3313 = vadd.xlane.f32.xlu0 %v3312
    %v3314 = vpop.xlane.xlu0 %3313
    %v3315 = vrot.slane %v3314, 4
    %v3316 = vadd.f32 %v3314, %v3315
    %v3317 = vrot.slane %v3316, 2
    %v3318 = vadd.f32 %v3316, %v3317
    %v3319 = vrot.slane %v3318, 1
    %v3320 = vadd.f32 %v3318, %v3319
    %s3321 = vtos %v3320
    %p3322 = scmp.gt.f32.partialorder %s3321, 0.0
    %s3323 = scalar_select %p3322, 1, 0
    %s3324 = scvt.s32.f32 %s3323
    %s3325 = smul.f32 %s3324, %s3307
    %s3326 = smax.f32 %s3321, 1e-12
    %v3327 = vstv %s3326
    %v3328 = vrcp.pop %v3327
    %s3329 = vtos %v3328
    %s3330 = smul.f32 %s3325, %s3329
    %s3331 = sadd.f32 %s3286, %s3330
    %s3332 = sadd.f32 %s3287, %s3324
    %s3333 = smax.f32 %s3332, 1.0
    %v3334 = vstv %s3333
    %v3335 = vrcp.pop %v3334
    %s3336 = vtos %v3335
    %s3337 = smul.f32 %s3331, %s3336
    %s3338 = sadd.f32 %s2135, %s3088
    %s3339 = sadd.f32 %s3338, %s3337
    %s3340 = smul.f32 %s2711, 10.0
    %s3341 = sadd.f32 %s3339, %s3340
    %v3342 = vstv %s3341
    %vm3343 = vcmask 0
    %3344 = vst.msk [vmem:[#allocation2] sm:$0x1] %vm3343, %v3342
    // Predicated region
    $region118: #{_mmkd_forward.5} parent=1 // pred_check
      _
    $region119: #{_mmkd_forward.5} parent=1 // pred_check_branch
      %3346 = sbr.rel (0) target = $region121
    $region120: #{_mmkd_forward.5} parent=1 // pred_region
      %s3348 = ssub.s32 16, 16
      %3349 = vsyncadd [#allocation3], %s3348
      %s3351 = sshll.u32 [#allocation2], 4
      %s3352 = int_to_ptr.vmem [resolvable:$true] %s3351
      %3354 = dma.vmem_to_hbm [thread:$0]  %s3352, 16, %s59, [#allocation3]
    $region121: #{_mmkd_forward.5} parent=1 // pred_fallthru
      _
    // Predicated region
    $region122: #{_mmkd_forward.5} parent=1 // pred_check
      _
    $region123: #{_mmkd_forward.5} parent=1 // pred_check_branch
      %3356 = sbr.rel (0) target = $region125
    $region124: #{_mmkd_forward.5} parent=1 // pred_region
      %3357 = dma.done [#allocation3], 16
    $region125: #{_mmkd_forward.5} parent=1 // pred_fallthru
      _
    %3358 = vsyncpa [#allocation3], 1

</llo_original>
